<compile_context>
chip_gen: v7x
topology: tpu7x:2x2x1
jax: 0.10.0
libtpu: 0.0.40
codegen_flags: <defaults>
</compile_context>

<pallas_src>
import functools

import jax
import jax.numpy as jnp
from jax.experimental import pallas as pl
from jax.experimental.pallas import tpu as pltpu

INPUT_SIZE = 28    # I
HIDDEN = 64        # H
NUM_CLASSES = 10   # C
C_PAD = 128        # lane-padded head width
BATCH_TILE = 256   # max batch rows per grid step (keeps per-tile VMEM small)


def _sigmoid(x):
    # logistic(x) == 0.5 * (1 + tanh(x/2)): one EUP push instead of exp+recip.
    return 0.5 * jnp.tanh(0.5 * x) + 0.5


def lstm_head_kernel(x_ref, wih_ref, whh_ref, b_ref, wout_ref, bout_ref,
                     o_ref, gx_sc):
    """LSTM recurrence + Linear head for one batch tile.

    x_ref    : (T*BB, I)   time-major within the tile, row t*BB + b (mxu dtype)
    wih_ref  : (I, 4H)     gate columns in PyTorch order [i | f | g | o]
    whh_ref  : (H, 4H)     same column order
    b_ref    : (1, 4H)     f32, b_ih + b_hh, same column order
    wout_ref : (H, C_PAD)
    bout_ref : (1, C_PAD)  f32
    o_ref    : (BB, C_PAD) f32
    gx_sc    : (T*BB, 4H)  f32 scratch for the hoisted input projection
    """
    BB = o_ref.shape[0]
    H = HIDDEN
    T = x_ref.shape[0] // BB

    # Phase 1: hoisted input projection for ALL time steps -- one MXU matmul
    # with M = T*BB rows instead of T skinny M=BB matmuls.
    gx_sc[...] = (
        jnp.dot(x_ref[...], wih_ref[...], preferred_element_type=jnp.float32)
        + b_ref[...])

    whh = whh_ref[...]  # kept resident in VMEM; reused every step

    # Phase 2: sequential recurrence. h/c are loop-carried values (vregs) --
    # no VMEM load/store round-trip on the critical path.
    def step(t, carry):
        h, c = carry
        row = pl.multiple_of(t * BB, BB)   # exact: rows are laid out t*BB + b
        gates = gx_sc[pl.ds(row, BB), :] + jnp.dot(
            h.astype(whh.dtype), whh, preferred_element_type=jnp.float32)
        # PyTorch gate order [i | f | g | o]; EUP work issued in dependence
        # order so c_new does not wait behind the o-gate sigmoid.
        if_g = _sigmoid(gates[:, :2 * H])          # i, f (one pass over 2H)
        g_g = jnp.tanh(gates[:, 2 * H:3 * H])      # g
        c_new = if_g[:, H:2 * H] * c + if_g[:, :H] * g_g
        o_g = _sigmoid(gates[:, 3 * H:])           # o (only needed after c_new)
        h_new = o_g * jnp.tanh(c_new)
        return h_new, c_new

    h0 = jnp.zeros((BB, H), jnp.float32)
    c0 = jnp.zeros((BB, H), jnp.float32)
    h_T, _ = jax.lax.fori_loop(0, T, step, (h0, c0), unroll=True)

    # Phase 3: Linear(H -> NUM_CLASSES) head on h_T; lanes padded to 128 so
    # the store is a full (unmasked) vst.
    o_ref[...] = (
        jnp.dot(h_T.astype(wout_ref.dtype), wout_ref[...],
                preferred_element_type=jnp.float32)
        + bout_ref[...])


@functools.partial(jax.jit, static_argnames=("mxu_dtype",))
def rnn_forward(x, w_ih, w_hh, b_ih, b_hh, w_out, b_out, *,
                mxu_dtype=jnp.bfloat16):
    """x: (B, T, INPUT_SIZE) float32. Returns (B, NUM_CLASSES) float32."""
    B, T, I = x.shape
    assert I == INPUT_SIZE
    H, C = HIDDEN, NUM_CLASSES

    # Batch padding / tiling: pad to a sublane multiple; if larger than one
    # tile, pad to a multiple of BATCH_TILE and run a batch-parallel grid.
    Bp = ((B + 7) // 8) * 8
    if Bp > BATCH_TILE:
        BB = BATCH_TILE
        Bp = ((Bp + BB - 1) // BB) * BB
    else:
        BB = Bp
    n_tiles = Bp // BB

    xp = x
    if Bp != B:
        xp = jnp.pad(x, ((0, Bp - B), (0, 0), (0, 0)))
    # (Bp, T, I) -> (n_tiles, T*BB, I) with row t*BB + b inside each tile.
    x_tiles = (xp.reshape(n_tiles, BB, T, I)
                 .transpose(0, 2, 1, 3)
                 .reshape(n_tiles, T * BB, I)
                 .astype(mxu_dtype))

    # Weights pre-transposed (PyTorch gate order kept); bias fused and f32.
    wih_t = w_ih.T.astype(mxu_dtype)                       # (I, 4H)
    whh_t = w_hh.T.astype(mxu_dtype)                       # (H, 4H)
    bias = (b_ih + b_hh).reshape(1, 4 * H).astype(jnp.float32)

    wout_p = jnp.zeros((H, C_PAD), mxu_dtype).at[:, :C].set(
        w_out.T.astype(mxu_dtype))
    bout_p = jnp.zeros((1, C_PAD), jnp.float32).at[:, :C].set(
        b_out.astype(jnp.float32))

    out = pl.pallas_call(
        lstm_head_kernel,
        out_shape=jax.ShapeDtypeStruct((Bp, C_PAD), jnp.float32),
        grid=(n_tiles,),
        in_specs=[
            pl.BlockSpec((None, T * BB, I), lambda j: (j, 0, 0)),   # x tile
            pl.BlockSpec((I, 4 * H), lambda j: (0, 0)),             # W_ih^T
            pl.BlockSpec((H, 4 * H), lambda j: (0, 0)),             # W_hh^T
            pl.BlockSpec((1, 4 * H), lambda j: (0, 0)),             # bias
            pl.BlockSpec((H, C_PAD), lambda j: (0, 0)),             # W_out^T
            pl.BlockSpec((1, C_PAD), lambda j: (0, 0)),             # b_out
        ],
        out_specs=pl.BlockSpec((BB, C_PAD), lambda j: (j, 0)),
        scratch_shapes=[pltpu.VMEM((T * BB, 4 * H), jnp.float32)],
        compiler_params=pltpu.CompilerParams(
            dimension_semantics=("parallel",)),
    )(x_tiles, wih_t, whh_t, bias, wout_p, bout_p)
    return out[:B, :C]


def rnn_forward_ref(x, w_ih, w_hh, b_ih, b_hh, w_out, b_out):
    """Pure-JAX reference matching PyTorch nn.LSTM semantics (gate order i,f,g,o)."""
    B, T, _ = x.shape
    h = jnp.zeros((B, HIDDEN), jnp.float32)
    c = jnp.zeros((B, HIDDEN), jnp.float32)
    for t in range(T):
        gates = x[:, t, :] @ w_ih.T + b_ih + h @ w_hh.T + b_hh
        i_g = jax.nn.sigmoid(gates[:, 0 * HIDDEN:1 * HIDDEN])
        f_g = jax.nn.sigmoid(gates[:, 1 * HIDDEN:2 * HIDDEN])
        g_g = jnp.tanh(gates[:, 2 * HIDDEN:3 * HIDDEN])
        o_g = jax.nn.sigmoid(gates[:, 3 * HIDDEN:4 * HIDDEN])
        c = f_g * c + i_g * g_g
        h = o_g * jnp.tanh(c)
    return h @ w_out.T + b_out


def init_params(key):
    """Deterministic init matching PyTorch shapes (uniform +-1/sqrt(H), like nn.LSTM)."""
    ks = jax.random.split(key, 6)
    bound = 1.0 / jnp.sqrt(jnp.float32(HIDDEN))
    w_ih = jax.random.uniform(ks[0], (4 * HIDDEN, INPUT_SIZE), jnp.float32, -bound, bound)
    w_hh = jax.random.uniform(ks[1], (4 * HIDDEN, HIDDEN), jnp.float32, -bound, bound)
    b_ih = jax.random.uniform(ks[2], (4 * HIDDEN,), jnp.float32, -bound, bound)
    b_hh = jax.random.uniform(ks[3], (4 * HIDDEN,), jnp.float32, -bound, bound)
    w_out = jax.random.uniform(ks[4], (NUM_CLASSES, HIDDEN), jnp.float32, -bound, bound)
    b_out = jax.random.uniform(ks[5], (NUM_CLASSES,), jnp.float32, -bound, bound)
    return w_ih, w_hh, b_ih, b_hh, w_out, b_out


if __name__ == "__main__":
    key = jax.random.PRNGKey(0)
    k_x, k_p = jax.random.split(key)

    B, T = 8, 28  # e.g. MNIST rows as a 28-step sequence of 28-dim vectors
    x = jax.random.normal(k_x, (B, T, INPUT_SIZE), jnp.float32)
    params = init_params(k_p)

    ref = rnn_forward_ref(x, *params)

    # Strict correctness check: f32 MXU operands.
    out_f32 = jax.block_until_ready(rnn_forward(x, *params, mxu_dtype=jnp.float32))
    assert out_f32.shape == (B, NUM_CLASSES)
    assert jnp.allclose(out_f32, ref, atol=2e-4, rtol=2e-4), (
        f"f32 max abs err = {jnp.max(jnp.abs(out_f32 - ref))}")

    # Fast path: bf16 MXU operands, f32 accumulation (looser tolerance is
    # expected from bf16 operand rounding over 28 recurrent steps).
    out_bf16 = jax.block_until_ready(rnn_forward(x, *params, mxu_dtype=jnp.bfloat16))
    assert out_bf16.shape == (B, NUM_CLASSES)
    assert jnp.allclose(out_bf16, ref, atol=1e-1, rtol=1e-1), (
        f"bf16 max abs err = {jnp.max(jnp.abs(out_bf16 - ref))}")

    print("KERNEL_OK")
</pallas_src>

<mosaic_0001>
module attributes {stable_mosaic.version = 11 : i64} {
  func.func @lstm_head_kernel(%arg0: i32, %arg1: memref<1x224x28xf32, #tpu.memory_space<vmem>>, %arg2: memref<28x256xf32, #tpu.memory_space<vmem>>, %arg3: memref<64x256xf32, #tpu.memory_space<vmem>>, %arg4: memref<1x256xf32, #tpu.memory_space<vmem>>, %arg5: memref<64x128xf32, #tpu.memory_space<vmem>>, %arg6: memref<1x128xf32, #tpu.memory_space<vmem>>, %arg7: memref<8x128xf32, #tpu.memory_space<vmem>>, %arg8: memref<224x256xf32, #tpu.memory_space<vmem>>) attributes {dimension_semantics = [#tpu.dimension_semantics<parallel>], iteration_bounds = array<i64: 1>, scalar_prefetch = 0 : i64, scratch_operands = 1 : i64, tpu.core_type = #tpu.core_type<tc>, window_params = [{transform_indices = @transform_0, window_bounds = array<i64: 1, 224, 28>}, {pipeline_mode = #tpu.pipeline_mode<synchronous>, transform_indices = @transform_1, window_bounds = array<i64: 28, 256>}, {pipeline_mode = #tpu.pipeline_mode<synchronous>, transform_indices = @transform_2, window_bounds = array<i64: 64, 256>}, {pipeline_mode = #tpu.pipeline_mode<synchronous>, transform_indices = @transform_3, window_bounds = array<i64: 1, 256>}, {pipeline_mode = #tpu.pipeline_mode<synchronous>, transform_indices = @transform_4, window_bounds = array<i64: 64, 128>}, {pipeline_mode = #tpu.pipeline_mode<synchronous>, transform_indices = @transform_5, window_bounds = array<i64: 1, 128>}, {transform_indices = @transform_6, window_bounds = array<i64: 8, 128>}]} {
    %c0 = arith.constant 0 : index
    %c0_0 = arith.constant 0 : index
    %c0_1 = arith.constant 0 : index
    %0 = vector.load %arg1[%c0, %c0_0, %c0_1] : memref<1x224x28xf32, #tpu.memory_space<vmem>>, vector<1x224x28xf32>
    %1 = vector.shape_cast %0 : vector<1x224x28xf32> to vector<224x28xf32>
    %c0_2 = arith.constant 0 : index
    %c0_3 = arith.constant 0 : index
    %2 = vector.load %arg2[%c0_2, %c0_3] : memref<28x256xf32, #tpu.memory_space<vmem>>, vector<28x256xf32>
    %cst = arith.constant dense<0.000000e+00> : vector<224x256xf32>
    %3 = tpu.matmul %1, %2, %cst {dimension_numbers = #tpu.dot_dimension_numbers<[1], [0], [0], [1], [0, 0, 1, 1], [], []>} : vector<224x28xf32>, vector<28x256xf32>, vector<224x256xf32> -> vector<224x256xf32>
    %c0_4 = arith.constant 0 : index
    %c0_5 = arith.constant 0 : index
    %4 = vector.load %arg4[%c0_4, %c0_5] : memref<1x256xf32, #tpu.memory_space<vmem>>, vector<1x256xf32>
    %5 = vector.broadcast %4 : vector<1x256xf32> to vector<224x256xf32>
    %6 = arith.addf %3, %5 : vector<224x256xf32>
    %c0_6 = arith.constant 0 : index
    %c0_7 = arith.constant 0 : index
    %7 = vector.load %arg8[%c0_6, %c0_7] : memref<224x256xf32, #tpu.memory_space<vmem>>, vector<224x256xf32>
    tpu.vector_store %arg8[%c0_6, %c0_7], %6 {strides = array<i32>} : memref<224x256xf32, #tpu.memory_space<vmem>>, vector<224x256xf32>,
    %c0_8 = arith.constant 0 : index
    %c0_9 = arith.constant 0 : index
    %8 = vector.load %arg3[%c0_8, %c0_9] : memref<64x256xf32, #tpu.memory_space<vmem>>, vector<64x256xf32>
    %cst_10 = arith.constant 0.000000e+00 : f32
    %9 = vector.broadcast %cst_10 : f32 to vector<8x64xf32>
    %cst_11 = arith.constant 0.000000e+00 : f32
    %10 = vector.broadcast %cst_11 : f32 to vector<8x64xf32>
    %c0_i32 = arith.constant 0 : i32
    %c8_i32 = arith.constant 8 : i32
    %11 = arith.muli %c0_i32, %c8_i32 : i32
    %12 = tpu.assume_multiple %11, 8 : i32
    %13 = arith.index_cast %12 : i32 to index
    %c0_12 = arith.constant 0 : index
    %14 = vector.load %arg8[%13, %c0_12] : memref<224x256xf32, #tpu.memory_space<vmem>>, vector<8x256xf32>
    %cst_13 = arith.constant dense<0.000000e+00> : vector<8x256xf32>
    %15 = tpu.matmul %9, %8, %cst_13 {dimension_numbers = #tpu.dot_dimension_numbers<[1], [0], [0], [1], [0, 0, 1, 1], [], []>} : vector<8x64xf32>, vector<64x256xf32>, vector<8x256xf32> -> vector<8x256xf32>
    %16 = arith.addf %14, %15 : vector<8x256xf32>
    %17 = vector.extract_strided_slice %16 {offsets = [0, 0], sizes = [8, 128], strides = [1, 1]} : vector<8x256xf32> to vector<8x128xf32>
    %cst_14 = arith.constant 5.000000e-01 : f32
    %18 = vector.broadcast %cst_14 : f32 to vector<8x128xf32>
    %19 = arith.mulf %18, %17 : vector<8x128xf32>
    %20 = math.tanh %19 : vector<8x128xf32>
    %cst_15 = arith.constant 5.000000e-01 : f32
    %21 = vector.broadcast %cst_15 : f32 to vector<8x128xf32>
    %22 = arith.mulf %21, %20 : vector<8x128xf32>
    %cst_16 = arith.constant 5.000000e-01 : f32
    %23 = vector.broadcast %cst_16 : f32 to vector<8x128xf32>
    %24 = arith.addf %22, %23 : vector<8x128xf32>
    %25 = vector.extract_strided_slice %16 {offsets = [0, 128], sizes = [8, 64], strides = [1, 1]} : vector<8x256xf32> to vector<8x64xf32>
    %26 = math.tanh %25 : vector<8x64xf32>
    %27 = vector.extract_strided_slice %24 {offsets = [0, 64], sizes = [8, 64], strides = [1, 1]} : vector<8x128xf32> to vector<8x64xf32>
    %28 = arith.mulf %27, %10 : vector<8x64xf32>
    %29 = vector.extract_strided_slice %24 {offsets = [0, 0], sizes = [8, 64], strides = [1, 1]} : vector<8x128xf32> to vector<8x64xf32>
    %30 = arith.mulf %29, %26 : vector<8x64xf32>
    %31 = arith.addf %28, %30 : vector<8x64xf32>
    %32 = vector.extract_strided_slice %16 {offsets = [0, 192], sizes = [8, 64], strides = [1, 1]} : vector<8x256xf32> to vector<8x64xf32>
    %cst_17 = arith.constant 5.000000e-01 : f32
    %33 = vector.broadcast %cst_17 : f32 to vector<8x64xf32>
    %34 = arith.mulf %33, %32 : vector<8x64xf32>
    %35 = math.tanh %34 : vector<8x64xf32>
    %cst_18 = arith.constant 5.000000e-01 : f32
    %36 = vector.broadcast %cst_18 : f32 to vector<8x64xf32>
    %37 = arith.mulf %36, %35 : vector<8x64xf32>
    %cst_19 = arith.constant 5.000000e-01 : f32
    %38 = vector.broadcast %cst_19 : f32 to vector<8x64xf32>
    %39 = arith.addf %37, %38 : vector<8x64xf32>
    %40 = math.tanh %31 : vector<8x64xf32>
    %41 = arith.mulf %39, %40 : vector<8x64xf32>
    %c1_i32 = arith.constant 1 : i32
    %c8_i32_20 = arith.constant 8 : i32
    %42 = arith.muli %c1_i32, %c8_i32_20 : i32
    %43 = tpu.assume_multiple %42, 8 : i32
    %44 = arith.index_cast %43 : i32 to index
    %c0_21 = arith.constant 0 : index
    %45 = vector.load %arg8[%44, %c0_21] : memref<224x256xf32, #tpu.memory_space<vmem>>, vector<8x256xf32>
    %cst_22 = arith.constant dense<0.000000e+00> : vector<8x256xf32>
    %46 = tpu.matmul %41, %8, %cst_22 {dimension_numbers = #tpu.dot_dimension_numbers<[1], [0], [0], [1], [0, 0, 1, 1], [], []>} : vector<8x64xf32>, vector<64x256xf32>, vector<8x256xf32> -> vector<8x256xf32>
    %47 = arith.addf %45, %46 : vector<8x256xf32>
    %48 = vector.extract_strided_slice %47 {offsets = [0, 0], sizes = [8, 128], strides = [1, 1]} : vector<8x256xf32> to vector<8x128xf32>
    %cst_23 = arith.constant 5.000000e-01 : f32
    %49 = vector.broadcast %cst_23 : f32 to vector<8x128xf32>
    %50 = arith.mulf %49, %48 : vector<8x128xf32>
    %51 = math.tanh %50 : vector<8x128xf32>
    %cst_24 = arith.constant 5.000000e-01 : f32
    %52 = vector.broadcast %cst_24 : f32 to vector<8x128xf32>
    %53 = arith.mulf %52, %51 : vector<8x128xf32>
    %cst_25 = arith.constant 5.000000e-01 : f32
    %54 = vector.broadcast %cst_25 : f32 to vector<8x128xf32>
    %55 = arith.addf %53, %54 : vector<8x128xf32>
    %56 = vector.extract_strided_slice %47 {offsets = [0, 128], sizes = [8, 64], strides = [1, 1]} : vector<8x256xf32> to vector<8x64xf32>
    %57 = math.tanh %56 : vector<8x64xf32>
    %58 = vector.extract_strided_slice %55 {offsets = [0, 64], sizes = [8, 64], strides = [1, 1]} : vector<8x128xf32> to vector<8x64xf32>
    %59 = arith.mulf %58, %31 : vector<8x64xf32>
    %60 = vector.extract_strided_slice %55 {offsets = [0, 0], sizes = [8, 64], strides = [1, 1]} : vector<8x128xf32> to vector<8x64xf32>
    %61 = arith.mulf %60, %57 : vector<8x64xf32>
    %62 = arith.addf %59, %61 : vector<8x64xf32>
    %63 = vector.extract_strided_slice %47 {offsets = [0, 192], sizes = [8, 64], strides = [1, 1]} : vector<8x256xf32> to vector<8x64xf32>
    %cst_26 = arith.constant 5.000000e-01 : f32
    %64 = vector.broadcast %cst_26 : f32 to vector<8x64xf32>
    %65 = arith.mulf %64, %63 : vector<8x64xf32>
    %66 = math.tanh %65 : vector<8x64xf32>
    %cst_27 = arith.constant 5.000000e-01 : f32
    %67 = vector.broadcast %cst_27 : f32 to vector<8x64xf32>
    %68 = arith.mulf %67, %66 : vector<8x64xf32>
    %cst_28 = arith.constant 5.000000e-01 : f32
    %69 = vector.broadcast %cst_28 : f32 to vector<8x64xf32>
    %70 = arith.addf %68, %69 : vector<8x64xf32>
    %71 = math.tanh %62 : vector<8x64xf32>
    %72 = arith.mulf %70, %71 : vector<8x64xf32>
    %c2_i32 = arith.constant 2 : i32
    %c8_i32_29 = arith.constant 8 : i32
    %73 = arith.muli %c2_i32, %c8_i32_29 : i32
    %74 = tpu.assume_multiple %73, 8 : i32
    %75 = arith.index_cast %74 : i32 to index
    %c0_30 = arith.constant 0 : index
    %76 = vector.load %arg8[%75, %c0_30] : memref<224x256xf32, #tpu.memory_space<vmem>>, vector<8x256xf32>
    %cst_31 = arith.constant dense<0.000000e+00> : vector<8x256xf32>
    %77 = tpu.matmul %72, %8, %cst_31 {dimension_numbers = #tpu.dot_dimension_numbers<[1], [0], [0], [1], [0, 0, 1, 1], [], []>} : vector<8x64xf32>, vector<64x256xf32>, vector<8x256xf32> -> vector<8x256xf32>
    %78 = arith.addf %76, %77 : vector<8x256xf32>
    %79 = vector.extract_strided_slice %78 {offsets = [0, 0], sizes = [8, 128], strides = [1, 1]} : vector<8x256xf32> to vector<8x128xf32>
    %cst_32 = arith.constant 5.000000e-01 : f32
    %80 = vector.broadcast %cst_32 : f32 to vector<8x128xf32>
    %81 = arith.mulf %80, %79 : vector<8x128xf32>
    %82 = math.tanh %81 : vector<8x128xf32>
    %cst_33 = arith.constant 5.000000e-01 : f32
    %83 = vector.broadcast %cst_33 : f32 to vector<8x128xf32>
    %84 = arith.mulf %83, %82 : vector<8x128xf32>
    %cst_34 = arith.constant 5.000000e-01 : f32
    %85 = vector.broadcast %cst_34 : f32 to vector<8x128xf32>
    %86 = arith.addf %84, %85 : vector<8x128xf32>
    %87 = vector.extract_strided_slice %78 {offsets = [0, 128], sizes = [8, 64], strides = [1, 1]} : vector<8x256xf32> to vector<8x64xf32>
    %88 = math.tanh %87 : vector<8x64xf32>
    %89 = vector.extract_strided_slice %86 {offsets = [0, 64], sizes = [8, 64], strides = [1, 1]} : vector<8x128xf32> to vector<8x64xf32>
    %90 = arith.mulf %89, %62 : vector<8x64xf32>
    %91 = vector.extract_strided_slice %86 {offsets = [0, 0], sizes = [8, 64], strides = [1, 1]} : vector<8x128xf32> to vector<8x64xf32>
    %92 = arith.mulf %91, %88 : vector<8x64xf32>
    %93 = arith.addf %90, %92 : vector<8x64xf32>
    %94 = vector.extract_strided_slice %78 {offsets = [0, 192], sizes = [8, 64], strides = [1, 1]} : vector<8x256xf32> to vector<8x64xf32>
    %cst_35 = arith.constant 5.000000e-01 : f32
    %95 = vector.broadcast %cst_35 : f32 to vector<8x64xf32>
    %96 = arith.mulf %95, %94 : vector<8x64xf32>
    %97 = math.tanh %96 : vector<8x64xf32>
    %cst_36 = arith.constant 5.000000e-01 : f32
    %98 = vector.broadcast %cst_36 : f32 to vector<8x64xf32>
    %99 = arith.mulf %98, %97 : vector<8x64xf32>
    %cst_37 = arith.constant 5.000000e-01 : f32
    %100 = vector.broadcast %cst_37 : f32 to vector<8x64xf32>
    %101 = arith.addf %99, %100 : vector<8x64xf32>
    %102 = math.tanh %93 : vector<8x64xf32>
    %103 = arith.mulf %101, %102 : vector<8x64xf32>
    %c3_i32 = arith.constant 3 : i32
    %c8_i32_38 = arith.constant 8 : i32
    %104 = arith.muli %c3_i32, %c8_i32_38 : i32
    %105 = tpu.assume_multiple %104, 8 : i32
    %106 = arith.index_cast %105 : i32 to index
    %c0_39 = arith.constant 0 : index
    %107 = vector.load %arg8[%106, %c0_39] : memref<224x256xf32, #tpu.memory_space<vmem>>, vector<8x256xf32>
    %cst_40 = arith.constant dense<0.000000e+00> : vector<8x256xf32>
    %108 = tpu.matmul %103, %8, %cst_40 {dimension_numbers = #tpu.dot_dimension_numbers<[1], [0], [0], [1], [0, 0, 1, 1], [], []>} : vector<8x64xf32>, vector<64x256xf32>, vector<8x256xf32> -> vector<8x256xf32>
    %109 = arith.addf %107, %108 : vector<8x256xf32>
    %110 = vector.extract_strided_slice %109 {offsets = [0, 0], sizes = [8, 128], strides = [1, 1]} : vector<8x256xf32> to vector<8x128xf32>
    %cst_41 = arith.constant 5.000000e-01 : f32
    %111 = vector.broadcast %cst_41 : f32 to vector<8x128xf32>
    %112 = arith.mulf %111, %110 : vector<8x128xf32>
    %113 = math.tanh %112 : vector<8x128xf32>
    %cst_42 = arith.constant 5.000000e-01 : f32
    %114 = vector.broadcast %cst_42 : f32 to vector<8x128xf32>
    %115 = arith.mulf %114, %113 : vector<8x128xf32>
    %cst_43 = arith.constant 5.000000e-01 : f32
    %116 = vector.broadcast %cst_43 : f32 to vector<8x128xf32>
    %117 = arith.addf %115, %116 : vector<8x128xf32>
    %118 = vector.extract_strided_slice %109 {offsets = [0, 128], sizes = [8, 64], strides = [1, 1]} : vector<8x256xf32> to vector<8x64xf32>
    %119 = math.tanh %118 : vector<8x64xf32>
    %120 = vector.extract_strided_slice %117 {offsets = [0, 64], sizes = [8, 64], strides = [1, 1]} : vector<8x128xf32> to vector<8x64xf32>
    %121 = arith.mulf %120, %93 : vector<8x64xf32>
    %122 = vector.extract_strided_slice %117 {offsets = [0, 0], sizes = [8, 64], strides = [1, 1]} : vector<8x128xf32> to vector<8x64xf32>
    %123 = arith.mulf %122, %119 : vector<8x64xf32>
    %124 = arith.addf %121, %123 : vector<8x64xf32>
    %125 = vector.extract_strided_slice %109 {offsets = [0, 192], sizes = [8, 64], strides = [1, 1]} : vector<8x256xf32> to vector<8x64xf32>
    %cst_44 = arith.constant 5.000000e-01 : f32
    %126 = vector.broadcast %cst_44 : f32 to vector<8x64xf32>
    %127 = arith.mulf %126, %125 : vector<8x64xf32>
    %128 = math.tanh %127 : vector<8x64xf32>
    %cst_45 = arith.constant 5.000000e-01 : f32
    %129 = vector.broadcast %cst_45 : f32 to vector<8x64xf32>
    %130 = arith.mulf %129, %128 : vector<8x64xf32>
    %cst_46 = arith.constant 5.000000e-01 : f32
    %131 = vector.broadcast %cst_46 : f32 to vector<8x64xf32>
    %132 = arith.addf %130, %131 : vector<8x64xf32>
    %133 = math.tanh %124 : vector<8x64xf32>
    %134 = arith.mulf %132, %133 : vector<8x64xf32>
    %c4_i32 = arith.constant 4 : i32
    %c8_i32_47 = arith.constant 8 : i32
    %135 = arith.muli %c4_i32, %c8_i32_47 : i32
    %136 = tpu.assume_multiple %135, 8 : i32
    %137 = arith.index_cast %136 : i32 to index
    %c0_48 = arith.constant 0 : index
    %138 = vector.load %arg8[%137, %c0_48] : memref<224x256xf32, #tpu.memory_space<vmem>>, vector<8x256xf32>
    %cst_49 = arith.constant dense<0.000000e+00> : vector<8x256xf32>
    %139 = tpu.matmul %134, %8, %cst_49 {dimension_numbers = #tpu.dot_dimension_numbers<[1], [0], [0], [1], [0, 0, 1, 1], [], []>} : vector<8x64xf32>, vector<64x256xf32>, vector<8x256xf32> -> vector<8x256xf32>
    %140 = arith.addf %138, %139 : vector<8x256xf32>
    %141 = vector.extract_strided_slice %140 {offsets = [0, 0], sizes = [8, 128], strides = [1, 1]} : vector<8x256xf32> to vector<8x128xf32>
    %cst_50 = arith.constant 5.000000e-01 : f32
    %142 = vector.broadcast %cst_50 : f32 to vector<8x128xf32>
    %143 = arith.mulf %142, %141 : vector<8x128xf32>
    %144 = math.tanh %143 : vector<8x128xf32>
    %cst_51 = arith.constant 5.000000e-01 : f32
    %145 = vector.broadcast %cst_51 : f32 to vector<8x128xf32>
    %146 = arith.mulf %145, %144 : vector<8x128xf32>
    %cst_52 = arith.constant 5.000000e-01 : f32
    %147 = vector.broadcast %cst_52 : f32 to vector<8x128xf32>
    %148 = arith.addf %146, %147 : vector<8x128xf32>
    %149 = vector.extract_strided_slice %140 {offsets = [0, 128], sizes = [8, 64], strides = [1, 1]} : vector<8x256xf32> to vector<8x64xf32>
    %150 = math.tanh %149 : vector<8x64xf32>
    %151 = vector.extract_strided_slice %148 {offsets = [0, 64], sizes = [8, 64], strides = [1, 1]} : vector<8x128xf32> to vector<8x64xf32>
    %152 = arith.mulf %151, %124 : vector<8x64xf32>
    %153 = vector.extract_strided_slice %148 {offsets = [0, 0], sizes = [8, 64], strides = [1, 1]} : vector<8x128xf32> to vector<8x64xf32>
    %154 = arith.mulf %153, %150 : vector<8x64xf32>
    %155 = arith.addf %152, %154 : vector<8x64xf32>
    %156 = vector.extract_strided_slice %140 {offsets = [0, 192], sizes = [8, 64], strides = [1, 1]} : vector<8x256xf32> to vector<8x64xf32>
    %cst_53 = arith.constant 5.000000e-01 : f32
    %157 = vector.broadcast %cst_53 : f32 to vector<8x64xf32>
    %158 = arith.mulf %157, %156 : vector<8x64xf32>
    %159 = math.tanh %158 : vector<8x64xf32>
    %cst_54 = arith.constant 5.000000e-01 : f32
    %160 = vector.broadcast %cst_54 : f32 to vector<8x64xf32>
    %161 = arith.mulf %160, %159 : vector<8x64xf32>
    %cst_55 = arith.constant 5.000000e-01 : f32
    %162 = vector.broadcast %cst_55 : f32 to vector<8x64xf32>
    %163 = arith.addf %161, %162 : vector<8x64xf32>
    %164 = math.tanh %155 : vector<8x64xf32>
    %165 = arith.mulf %163, %164 : vector<8x64xf32>
    %c5_i32 = arith.constant 5 : i32
    %c8_i32_56 = arith.constant 8 : i32
    %166 = arith.muli %c5_i32, %c8_i32_56 : i32
    %167 = tpu.assume_multiple %166, 8 : i32
    %168 = arith.index_cast %167 : i32 to index
    %c0_57 = arith.constant 0 : index
    %169 = vector.load %arg8[%168, %c0_57] : memref<224x256xf32, #tpu.memory_space<vmem>>, vector<8x256xf32>
    %cst_58 = arith.constant dense<0.000000e+00> : vector<8x256xf32>
    %170 = tpu.matmul %165, %8, %cst_58 {dimension_numbers = #tpu.dot_dimension_numbers<[1], [0], [0], [1], [0, 0, 1, 1], [], []>} : vector<8x64xf32>, vector<64x256xf32>, vector<8x256xf32> -> vector<8x256xf32>
    %171 = arith.addf %169, %170 : vector<8x256xf32>
    %172 = vector.extract_strided_slice %171 {offsets = [0, 0], sizes = [8, 128], strides = [1, 1]} : vector<8x256xf32> to vector<8x128xf32>
    %cst_59 = arith.constant 5.000000e-01 : f32
    %173 = vector.broadcast %cst_59 : f32 to vector<8x128xf32>
    %174 = arith.mulf %173, %172 : vector<8x128xf32>
    %175 = math.tanh %174 : vector<8x128xf32>
    %cst_60 = arith.constant 5.000000e-01 : f32
    %176 = vector.broadcast %cst_60 : f32 to vector<8x128xf32>
    %177 = arith.mulf %176, %175 : vector<8x128xf32>
    %cst_61 = arith.constant 5.000000e-01 : f32
    %178 = vector.broadcast %cst_61 : f32 to vector<8x128xf32>
    %179 = arith.addf %177, %178 : vector<8x128xf32>
    %180 = vector.extract_strided_slice %171 {offsets = [0, 128], sizes = [8, 64], strides = [1, 1]} : vector<8x256xf32> to vector<8x64xf32>
    %181 = math.tanh %180 : vector<8x64xf32>
    %182 = vector.extract_strided_slice %179 {offsets = [0, 64], sizes = [8, 64], strides = [1, 1]} : vector<8x128xf32> to vector<8x64xf32>
    %183 = arith.mulf %182, %155 : vector<8x64xf32>
    %184 = vector.extract_strided_slice %179 {offsets = [0, 0], sizes = [8, 64], strides = [1, 1]} : vector<8x128xf32> to vector<8x64xf32>
    %185 = arith.mulf %184, %181 : vector<8x64xf32>
    %186 = arith.addf %183, %185 : vector<8x64xf32>
    %187 = vector.extract_strided_slice %171 {offsets = [0, 192], sizes = [8, 64], strides = [1, 1]} : vector<8x256xf32> to vector<8x64xf32>
    %cst_62 = arith.constant 5.000000e-01 : f32
    %188 = vector.broadcast %cst_62 : f32 to vector<8x64xf32>
    %189 = arith.mulf %188, %187 : vector<8x64xf32>
    %190 = math.tanh %189 : vector<8x64xf32>
    %cst_63 = arith.constant 5.000000e-01 : f32
    %191 = vector.broadcast %cst_63 : f32 to vector<8x64xf32>
    %192 = arith.mulf %191, %190 : vector<8x64xf32>
    %cst_64 = arith.constant 5.000000e-01 : f32
    %193 = vector.broadcast %cst_64 : f32 to vector<8x64xf32>
    %194 = arith.addf %192, %193 : vector<8x64xf32>
    %195 = math.tanh %186 : vector<8x64xf32>
    %196 = arith.mulf %194, %195 : vector<8x64xf32>
    %c6_i32 = arith.constant 6 : i32
    %c8_i32_65 = arith.constant 8 : i32
    %197 = arith.muli %c6_i32, %c8_i32_65 : i32
    %198 = tpu.assume_multiple %197, 8 : i32
    %199 = arith.index_cast %198 : i32 to index
    %c0_66 = arith.constant 0 : index
    %200 = vector.load %arg8[%199, %c0_66] : memref<224x256xf32, #tpu.memory_space<vmem>>, vector<8x256xf32>
    %cst_67 = arith.constant dense<0.000000e+00> : vector<8x256xf32>
    %201 = tpu.matmul %196, %8, %cst_67 {dimension_numbers = #tpu.dot_dimension_numbers<[1], [0], [0], [1], [0, 0, 1, 1], [], []>} : vector<8x64xf32>, vector<64x256xf32>, vector<8x256xf32> -> vector<8x256xf32>
    %202 = arith.addf %200, %201 : vector<8x256xf32>
    %203 = vector.extract_strided_slice %202 {offsets = [0, 0], sizes = [8, 128], strides = [1, 1]} : vector<8x256xf32> to vector<8x128xf32>
    %cst_68 = arith.constant 5.000000e-01 : f32
    %204 = vector.broadcast %cst_68 : f32 to vector<8x128xf32>
    %205 = arith.mulf %204, %203 : vector<8x128xf32>
    %206 = math.tanh %205 : vector<8x128xf32>
    %cst_69 = arith.constant 5.000000e-01 : f32
    %207 = vector.broadcast %cst_69 : f32 to vector<8x128xf32>
    %208 = arith.mulf %207, %206 : vector<8x128xf32>
    %cst_70 = arith.constant 5.000000e-01 : f32
    %209 = vector.broadcast %cst_70 : f32 to vector<8x128xf32>
    %210 = arith.addf %208, %209 : vector<8x128xf32>
    %211 = vector.extract_strided_slice %202 {offsets = [0, 128], sizes = [8, 64], strides = [1, 1]} : vector<8x256xf32> to vector<8x64xf32>
    %212 = math.tanh %211 : vector<8x64xf32>
    %213 = vector.extract_strided_slice %210 {offsets = [0, 64], sizes = [8, 64], strides = [1, 1]} : vector<8x128xf32> to vector<8x64xf32>
    %214 = arith.mulf %213, %186 : vector<8x64xf32>
    %215 = vector.extract_strided_slice %210 {offsets = [0, 0], sizes = [8, 64], strides = [1, 1]} : vector<8x128xf32> to vector<8x64xf32>
    %216 = arith.mulf %215, %212 : vector<8x64xf32>
    %217 = arith.addf %214, %216 : vector<8x64xf32>
    %218 = vector.extract_strided_slice %202 {offsets = [0, 192], sizes = [8, 64], strides = [1, 1]} : vector<8x256xf32> to vector<8x64xf32>
    %cst_71 = arith.constant 5.000000e-01 : f32
    %219 = vector.broadcast %cst_71 : f32 to vector<8x64xf32>
    %220 = arith.mulf %219, %218 : vector<8x64xf32>
    %221 = math.tanh %220 : vector<8x64xf32>
    %cst_72 = arith.constant 5.000000e-01 : f32
    %222 = vector.broadcast %cst_72 : f32 to vector<8x64xf32>
    %223 = arith.mulf %222, %221 : vector<8x64xf32>
    %cst_73 = arith.constant 5.000000e-01 : f32
    %224 = vector.broadcast %cst_73 : f32 to vector<8x64xf32>
    %225 = arith.addf %223, %224 : vector<8x64xf32>
    %226 = math.tanh %217 : vector<8x64xf32>
    %227 = arith.mulf %225, %226 : vector<8x64xf32>
    %c7_i32 = arith.constant 7 : i32
    %c8_i32_74 = arith.constant 8 : i32
    %228 = arith.muli %c7_i32, %c8_i32_74 : i32
    %229 = tpu.assume_multiple %228, 8 : i32
    %230 = arith.index_cast %229 : i32 to index
    %c0_75 = arith.constant 0 : index
    %231 = vector.load %arg8[%230, %c0_75] : memref<224x256xf32, #tpu.memory_space<vmem>>, vector<8x256xf32>
    %cst_76 = arith.constant dense<0.000000e+00> : vector<8x256xf32>
    %232 = tpu.matmul %227, %8, %cst_76 {dimension_numbers = #tpu.dot_dimension_numbers<[1], [0], [0], [1], [0, 0, 1, 1], [], []>} : vector<8x64xf32>, vector<64x256xf32>, vector<8x256xf32> -> vector<8x256xf32>
    %233 = arith.addf %231, %232 : vector<8x256xf32>
    %234 = vector.extract_strided_slice %233 {offsets = [0, 0], sizes = [8, 128], strides = [1, 1]} : vector<8x256xf32> to vector<8x128xf32>
    %cst_77 = arith.constant 5.000000e-01 : f32
    %235 = vector.broadcast %cst_77 : f32 to vector<8x128xf32>
    %236 = arith.mulf %235, %234 : vector<8x128xf32>
    %237 = math.tanh %236 : vector<8x128xf32>
    %cst_78 = arith.constant 5.000000e-01 : f32
    %238 = vector.broadcast %cst_78 : f32 to vector<8x128xf32>
    %239 = arith.mulf %238, %237 : vector<8x128xf32>
    %cst_79 = arith.constant 5.000000e-01 : f32
    %240 = vector.broadcast %cst_79 : f32 to vector<8x128xf32>
    %241 = arith.addf %239, %240 : vector<8x128xf32>
    %242 = vector.extract_strided_slice %233 {offsets = [0, 128], sizes = [8, 64], strides = [1, 1]} : vector<8x256xf32> to vector<8x64xf32>
    %243 = math.tanh %242 : vector<8x64xf32>
    %244 = vector.extract_strided_slice %241 {offsets = [0, 64], sizes = [8, 64], strides = [1, 1]} : vector<8x128xf32> to vector<8x64xf32>
    %245 = arith.mulf %244, %217 : vector<8x64xf32>
    %246 = vector.extract_strided_slice %241 {offsets = [0, 0], sizes = [8, 64], strides = [1, 1]} : vector<8x128xf32> to vector<8x64xf32>
    %247 = arith.mulf %246, %243 : vector<8x64xf32>
    %248 = arith.addf %245, %247 : vector<8x64xf32>
    %249 = vector.extract_strided_slice %233 {offsets = [0, 192], sizes = [8, 64], strides = [1, 1]} : vector<8x256xf32> to vector<8x64xf32>
    %cst_80 = arith.constant 5.000000e-01 : f32
    %250 = vector.broadcast %cst_80 : f32 to vector<8x64xf32>
    %251 = arith.mulf %250, %249 : vector<8x64xf32>
    %252 = math.tanh %251 : vector<8x64xf32>
    %cst_81 = arith.constant 5.000000e-01 : f32
    %253 = vector.broadcast %cst_81 : f32 to vector<8x64xf32>
    %254 = arith.mulf %253, %252 : vector<8x64xf32>
    %cst_82 = arith.constant 5.000000e-01 : f32
    %255 = vector.broadcast %cst_82 : f32 to vector<8x64xf32>
    %256 = arith.addf %254, %255 : vector<8x64xf32>
    %257 = math.tanh %248 : vector<8x64xf32>
    %258 = arith.mulf %256, %257 : vector<8x64xf32>
    %c8_i32_83 = arith.constant 8 : i32
    %c8_i32_84 = arith.constant 8 : i32
    %259 = arith.muli %c8_i32_83, %c8_i32_84 : i32
    %260 = tpu.assume_multiple %259, 8 : i32
    %261 = arith.index_cast %260 : i32 to index
    %c0_85 = arith.constant 0 : index
    %262 = vector.load %arg8[%261, %c0_85] : memref<224x256xf32, #tpu.memory_space<vmem>>, vector<8x256xf32>
    %cst_86 = arith.constant dense<0.000000e+00> : vector<8x256xf32>
    %263 = tpu.matmul %258, %8, %cst_86 {dimension_numbers = #tpu.dot_dimension_numbers<[1], [0], [0], [1], [0, 0, 1, 1], [], []>} : vector<8x64xf32>, vector<64x256xf32>, vector<8x256xf32> -> vector<8x256xf32>
    %264 = arith.addf %262, %263 : vector<8x256xf32>
    %265 = vector.extract_strided_slice %264 {offsets = [0, 0], sizes = [8, 128], strides = [1, 1]} : vector<8x256xf32> to vector<8x128xf32>
    %cst_87 = arith.constant 5.000000e-01 : f32
    %266 = vector.broadcast %cst_87 : f32 to vector<8x128xf32>
    %267 = arith.mulf %266, %265 : vector<8x128xf32>
    %268 = math.tanh %267 : vector<8x128xf32>
    %cst_88 = arith.constant 5.000000e-01 : f32
    %269 = vector.broadcast %cst_88 : f32 to vector<8x128xf32>
    %270 = arith.mulf %269, %268 : vector<8x128xf32>
    %cst_89 = arith.constant 5.000000e-01 : f32
    %271 = vector.broadcast %cst_89 : f32 to vector<8x128xf32>
    %272 = arith.addf %270, %271 : vector<8x128xf32>
    %273 = vector.extract_strided_slice %264 {offsets = [0, 128], sizes = [8, 64], strides = [1, 1]} : vector<8x256xf32> to vector<8x64xf32>
    %274 = math.tanh %273 : vector<8x64xf32>
    %275 = vector.extract_strided_slice %272 {offsets = [0, 64], sizes = [8, 64], strides = [1, 1]} : vector<8x128xf32> to vector<8x64xf32>
    %276 = arith.mulf %275, %248 : vector<8x64xf32>
    %277 = vector.extract_strided_slice %272 {offsets = [0, 0], sizes = [8, 64], strides = [1, 1]} : vector<8x128xf32> to vector<8x64xf32>
    %278 = arith.mulf %277, %274 : vector<8x64xf32>
    %279 = arith.addf %276, %278 : vector<8x64xf32>
    %280 = vector.extract_strided_slice %264 {offsets = [0, 192], sizes = [8, 64], strides = [1, 1]} : vector<8x256xf32> to vector<8x64xf32>
    %cst_90 = arith.constant 5.000000e-01 : f32
    %281 = vector.broadcast %cst_90 : f32 to vector<8x64xf32>
    %282 = arith.mulf %281, %280 : vector<8x64xf32>
    %283 = math.tanh %282 : vector<8x64xf32>
    %cst_91 = arith.constant 5.000000e-01 : f32
    %284 = vector.broadcast %cst_91 : f32 to vector<8x64xf32>
    %285 = arith.mulf %284, %283 : vector<8x64xf32>
    %cst_92 = arith.constant 5.000000e-01 : f32
    %286 = vector.broadcast %cst_92 : f32 to vector<8x64xf32>
    %287 = arith.addf %285, %286 : vector<8x64xf32>
    %288 = math.tanh %279 : vector<8x64xf32>
    %289 = arith.mulf %287, %288 : vector<8x64xf32>
    %c9_i32 = arith.constant 9 : i32
    %c8_i32_93 = arith.constant 8 : i32
    %290 = arith.muli %c9_i32, %c8_i32_93 : i32
    %291 = tpu.assume_multiple %290, 8 : i32
    %292 = arith.index_cast %291 : i32 to index
    %c0_94 = arith.constant 0 : index
    %293 = vector.load %arg8[%292, %c0_94] : memref<224x256xf32, #tpu.memory_space<vmem>>, vector<8x256xf32>
    %cst_95 = arith.constant dense<0.000000e+00> : vector<8x256xf32>
    %294 = tpu.matmul %289, %8, %cst_95 {dimension_numbers = #tpu.dot_dimension_numbers<[1], [0], [0], [1], [0, 0, 1, 1], [], []>} : vector<8x64xf32>, vector<64x256xf32>, vector<8x256xf32> -> vector<8x256xf32>
    %295 = arith.addf %293, %294 : vector<8x256xf32>
    %296 = vector.extract_strided_slice %295 {offsets = [0, 0], sizes = [8, 128], strides = [1, 1]} : vector<8x256xf32> to vector<8x128xf32>
    %cst_96 = arith.constant 5.000000e-01 : f32
    %297 = vector.broadcast %cst_96 : f32 to vector<8x128xf32>
    %298 = arith.mulf %297, %296 : vector<8x128xf32>
    %299 = math.tanh %298 : vector<8x128xf32>
    %cst_97 = arith.constant 5.000000e-01 : f32
    %300 = vector.broadcast %cst_97 : f32 to vector<8x128xf32>
    %301 = arith.mulf %300, %299 : vector<8x128xf32>
    %cst_98 = arith.constant 5.000000e-01 : f32
    %302 = vector.broadcast %cst_98 : f32 to vector<8x128xf32>
    %303 = arith.addf %301, %302 : vector<8x128xf32>
    %304 = vector.extract_strided_slice %295 {offsets = [0, 128], sizes = [8, 64], strides = [1, 1]} : vector<8x256xf32> to vector<8x64xf32>
    %305 = math.tanh %304 : vector<8x64xf32>
    %306 = vector.extract_strided_slice %303 {offsets = [0, 64], sizes = [8, 64], strides = [1, 1]} : vector<8x128xf32> to vector<8x64xf32>
    %307 = arith.mulf %306, %279 : vector<8x64xf32>
    %308 = vector.extract_strided_slice %303 {offsets = [0, 0], sizes = [8, 64], strides = [1, 1]} : vector<8x128xf32> to vector<8x64xf32>
    %309 = arith.mulf %308, %305 : vector<8x64xf32>
    %310 = arith.addf %307, %309 : vector<8x64xf32>
    %311 = vector.extract_strided_slice %295 {offsets = [0, 192], sizes = [8, 64], strides = [1, 1]} : vector<8x256xf32> to vector<8x64xf32>
    %cst_99 = arith.constant 5.000000e-01 : f32
    %312 = vector.broadcast %cst_99 : f32 to vector<8x64xf32>
    %313 = arith.mulf %312, %311 : vector<8x64xf32>
    %314 = math.tanh %313 : vector<8x64xf32>
    %cst_100 = arith.constant 5.000000e-01 : f32
    %315 = vector.broadcast %cst_100 : f32 to vector<8x64xf32>
    %316 = arith.mulf %315, %314 : vector<8x64xf32>
    %cst_101 = arith.constant 5.000000e-01 : f32
    %317 = vector.broadcast %cst_101 : f32 to vector<8x64xf32>
    %318 = arith.addf %316, %317 : vector<8x64xf32>
    %319 = math.tanh %310 : vector<8x64xf32>
    %320 = arith.mulf %318, %319 : vector<8x64xf32>
    %c10_i32 = arith.constant 10 : i32
    %c8_i32_102 = arith.constant 8 : i32
    %321 = arith.muli %c10_i32, %c8_i32_102 : i32
    %322 = tpu.assume_multiple %321, 8 : i32
    %323 = arith.index_cast %322 : i32 to index
    %c0_103 = arith.constant 0 : index
    %324 = vector.load %arg8[%323, %c0_103] : memref<224x256xf32, #tpu.memory_space<vmem>>, vector<8x256xf32>
    %cst_104 = arith.constant dense<0.000000e+00> : vector<8x256xf32>
    %325 = tpu.matmul %320, %8, %cst_104 {dimension_numbers = #tpu.dot_dimension_numbers<[1], [0], [0], [1], [0, 0, 1, 1], [], []>} : vector<8x64xf32>, vector<64x256xf32>, vector<8x256xf32> -> vector<8x256xf32>
    %326 = arith.addf %324, %325 : vector<8x256xf32>
    %327 = vector.extract_strided_slice %326 {offsets = [0, 0], sizes = [8, 128], strides = [1, 1]} : vector<8x256xf32> to vector<8x128xf32>
    %cst_105 = arith.constant 5.000000e-01 : f32
    %328 = vector.broadcast %cst_105 : f32 to vector<8x128xf32>
    %329 = arith.mulf %328, %327 : vector<8x128xf32>
    %330 = math.tanh %329 : vector<8x128xf32>
    %cst_106 = arith.constant 5.000000e-01 : f32
    %331 = vector.broadcast %cst_106 : f32 to vector<8x128xf32>
    %332 = arith.mulf %331, %330 : vector<8x128xf32>
    %cst_107 = arith.constant 5.000000e-01 : f32
    %333 = vector.broadcast %cst_107 : f32 to vector<8x128xf32>
    %334 = arith.addf %332, %333 : vector<8x128xf32>
    %335 = vector.extract_strided_slice %326 {offsets = [0, 128], sizes = [8, 64], strides = [1, 1]} : vector<8x256xf32> to vector<8x64xf32>
    %336 = math.tanh %335 : vector<8x64xf32>
    %337 = vector.extract_strided_slice %334 {offsets = [0, 64], sizes = [8, 64], strides = [1, 1]} : vector<8x128xf32> to vector<8x64xf32>
    %338 = arith.mulf %337, %310 : vector<8x64xf32>
    %339 = vector.extract_strided_slice %334 {offsets = [0, 0], sizes = [8, 64], strides = [1, 1]} : vector<8x128xf32> to vector<8x64xf32>
    %340 = arith.mulf %339, %336 : vector<8x64xf32>
    %341 = arith.addf %338, %340 : vector<8x64xf32>
    %342 = vector.extract_strided_slice %326 {offsets = [0, 192], sizes = [8, 64], strides = [1, 1]} : vector<8x256xf32> to vector<8x64xf32>
    %cst_108 = arith.constant 5.000000e-01 : f32
    %343 = vector.broadcast %cst_108 : f32 to vector<8x64xf32>
    %344 = arith.mulf %343, %342 : vector<8x64xf32>
    %345 = math.tanh %344 : vector<8x64xf32>
    %cst_109 = arith.constant 5.000000e-01 : f32
    %346 = vector.broadcast %cst_109 : f32 to vector<8x64xf32>
    %347 = arith.mulf %346, %345 : vector<8x64xf32>
    %cst_110 = arith.constant 5.000000e-01 : f32
    %348 = vector.broadcast %cst_110 : f32 to vector<8x64xf32>
    %349 = arith.addf %347, %348 : vector<8x64xf32>
    %350 = math.tanh %341 : vector<8x64xf32>
    %351 = arith.mulf %349, %350 : vector<8x64xf32>
    %c11_i32 = arith.constant 11 : i32
    %c8_i32_111 = arith.constant 8 : i32
    %352 = arith.muli %c11_i32, %c8_i32_111 : i32
    %353 = tpu.assume_multiple %352, 8 : i32
    %354 = arith.index_cast %353 : i32 to index
    %c0_112 = arith.constant 0 : index
    %355 = vector.load %arg8[%354, %c0_112] : memref<224x256xf32, #tpu.memory_space<vmem>>, vector<8x256xf32>
    %cst_113 = arith.constant dense<0.000000e+00> : vector<8x256xf32>
    %356 = tpu.matmul %351, %8, %cst_113 {dimension_numbers = #tpu.dot_dimension_numbers<[1], [0], [0], [1], [0, 0, 1, 1], [], []>} : vector<8x64xf32>, vector<64x256xf32>, vector<8x256xf32> -> vector<8x256xf32>
    %357 = arith.addf %355, %356 : vector<8x256xf32>
    %358 = vector.extract_strided_slice %357 {offsets = [0, 0], sizes = [8, 128], strides = [1, 1]} : vector<8x256xf32> to vector<8x128xf32>
    %cst_114 = arith.constant 5.000000e-01 : f32
    %359 = vector.broadcast %cst_114 : f32 to vector<8x128xf32>
    %360 = arith.mulf %359, %358 : vector<8x128xf32>
    %361 = math.tanh %360 : vector<8x128xf32>
    %cst_115 = arith.constant 5.000000e-01 : f32
    %362 = vector.broadcast %cst_115 : f32 to vector<8x128xf32>
    %363 = arith.mulf %362, %361 : vector<8x128xf32>
    %cst_116 = arith.constant 5.000000e-01 : f32
    %364 = vector.broadcast %cst_116 : f32 to vector<8x128xf32>
    %365 = arith.addf %363, %364 : vector<8x128xf32>
    %366 = vector.extract_strided_slice %357 {offsets = [0, 128], sizes = [8, 64], strides = [1, 1]} : vector<8x256xf32> to vector<8x64xf32>
    %367 = math.tanh %366 : vector<8x64xf32>
    %368 = vector.extract_strided_slice %365 {offsets = [0, 64], sizes = [8, 64], strides = [1, 1]} : vector<8x128xf32> to vector<8x64xf32>
    %369 = arith.mulf %368, %341 : vector<8x64xf32>
    %370 = vector.extract_strided_slice %365 {offsets = [0, 0], sizes = [8, 64], strides = [1, 1]} : vector<8x128xf32> to vector<8x64xf32>
    %371 = arith.mulf %370, %367 : vector<8x64xf32>
    %372 = arith.addf %369, %371 : vector<8x64xf32>
    %373 = vector.extract_strided_slice %357 {offsets = [0, 192], sizes = [8, 64], strides = [1, 1]} : vector<8x256xf32> to vector<8x64xf32>
    %cst_117 = arith.constant 5.000000e-01 : f32
    %374 = vector.broadcast %cst_117 : f32 to vector<8x64xf32>
    %375 = arith.mulf %374, %373 : vector<8x64xf32>
    %376 = math.tanh %375 : vector<8x64xf32>
    %cst_118 = arith.constant 5.000000e-01 : f32
    %377 = vector.broadcast %cst_118 : f32 to vector<8x64xf32>
    %378 = arith.mulf %377, %376 : vector<8x64xf32>
    %cst_119 = arith.constant 5.000000e-01 : f32
    %379 = vector.broadcast %cst_119 : f32 to vector<8x64xf32>
    %380 = arith.addf %378, %379 : vector<8x64xf32>
    %381 = math.tanh %372 : vector<8x64xf32>
    %382 = arith.mulf %380, %381 : vector<8x64xf32>
    %c12_i32 = arith.constant 12 : i32
    %c8_i32_120 = arith.constant 8 : i32
    %383 = arith.muli %c12_i32, %c8_i32_120 : i32
    %384 = tpu.assume_multiple %383, 8 : i32
    %385 = arith.index_cast %384 : i32 to index
    %c0_121 = arith.constant 0 : index
    %386 = vector.load %arg8[%385, %c0_121] : memref<224x256xf32, #tpu.memory_space<vmem>>, vector<8x256xf32>
    %cst_122 = arith.constant dense<0.000000e+00> : vector<8x256xf32>
    %387 = tpu.matmul %382, %8, %cst_122 {dimension_numbers = #tpu.dot_dimension_numbers<[1], [0], [0], [1], [0, 0, 1, 1], [], []>} : vector<8x64xf32>, vector<64x256xf32>, vector<8x256xf32> -> vector<8x256xf32>
    %388 = arith.addf %386, %387 : vector<8x256xf32>
    %389 = vector.extract_strided_slice %388 {offsets = [0, 0], sizes = [8, 128], strides = [1, 1]} : vector<8x256xf32> to vector<8x128xf32>
    %cst_123 = arith.constant 5.000000e-01 : f32
    %390 = vector.broadcast %cst_123 : f32 to vector<8x128xf32>
    %391 = arith.mulf %390, %389 : vector<8x128xf32>
    %392 = math.tanh %391 : vector<8x128xf32>
    %cst_124 = arith.constant 5.000000e-01 : f32
    %393 = vector.broadcast %cst_124 : f32 to vector<8x128xf32>
    %394 = arith.mulf %393, %392 : vector<8x128xf32>
    %cst_125 = arith.constant 5.000000e-01 : f32
    %395 = vector.broadcast %cst_125 : f32 to vector<8x128xf32>
    %396 = arith.addf %394, %395 : vector<8x128xf32>
    %397 = vector.extract_strided_slice %388 {offsets = [0, 128], sizes = [8, 64], strides = [1, 1]} : vector<8x256xf32> to vector<8x64xf32>
    %398 = math.tanh %397 : vector<8x64xf32>
    %399 = vector.extract_strided_slice %396 {offsets = [0, 64], sizes = [8, 64], strides = [1, 1]} : vector<8x128xf32> to vector<8x64xf32>
    %400 = arith.mulf %399, %372 : vector<8x64xf32>
    %401 = vector.extract_strided_slice %396 {offsets = [0, 0], sizes = [8, 64], strides = [1, 1]} : vector<8x128xf32> to vector<8x64xf32>
    %402 = arith.mulf %401, %398 : vector<8x64xf32>
    %403 = arith.addf %400, %402 : vector<8x64xf32>
    %404 = vector.extract_strided_slice %388 {offsets = [0, 192], sizes = [8, 64], strides = [1, 1]} : vector<8x256xf32> to vector<8x64xf32>
    %cst_126 = arith.constant 5.000000e-01 : f32
    %405 = vector.broadcast %cst_126 : f32 to vector<8x64xf32>
    %406 = arith.mulf %405, %404 : vector<8x64xf32>
    %407 = math.tanh %406 : vector<8x64xf32>
    %cst_127 = arith.constant 5.000000e-01 : f32
    %408 = vector.broadcast %cst_127 : f32 to vector<8x64xf32>
    %409 = arith.mulf %408, %407 : vector<8x64xf32>
    %cst_128 = arith.constant 5.000000e-01 : f32
    %410 = vector.broadcast %cst_128 : f32 to vector<8x64xf32>
    %411 = arith.addf %409, %410 : vector<8x64xf32>
    %412 = math.tanh %403 : vector<8x64xf32>
    %413 = arith.mulf %411, %412 : vector<8x64xf32>
    %c13_i32 = arith.constant 13 : i32
    %c8_i32_129 = arith.constant 8 : i32
    %414 = arith.muli %c13_i32, %c8_i32_129 : i32
    %415 = tpu.assume_multiple %414, 8 : i32
    %416 = arith.index_cast %415 : i32 to index
    %c0_130 = arith.constant 0 : index
    %417 = vector.load %arg8[%416, %c0_130] : memref<224x256xf32, #tpu.memory_space<vmem>>, vector<8x256xf32>
    %cst_131 = arith.constant dense<0.000000e+00> : vector<8x256xf32>
    %418 = tpu.matmul %413, %8, %cst_131 {dimension_numbers = #tpu.dot_dimension_numbers<[1], [0], [0], [1], [0, 0, 1, 1], [], []>} : vector<8x64xf32>, vector<64x256xf32>, vector<8x256xf32> -> vector<8x256xf32>
    %419 = arith.addf %417, %418 : vector<8x256xf32>
    %420 = vector.extract_strided_slice %419 {offsets = [0, 0], sizes = [8, 128], strides = [1, 1]} : vector<8x256xf32> to vector<8x128xf32>
    %cst_132 = arith.constant 5.000000e-01 : f32
    %421 = vector.broadcast %cst_132 : f32 to vector<8x128xf32>
    %422 = arith.mulf %421, %420 : vector<8x128xf32>
    %423 = math.tanh %422 : vector<8x128xf32>
    %cst_133 = arith.constant 5.000000e-01 : f32
    %424 = vector.broadcast %cst_133 : f32 to vector<8x128xf32>
    %425 = arith.mulf %424, %423 : vector<8x128xf32>
    %cst_134 = arith.constant 5.000000e-01 : f32
    %426 = vector.broadcast %cst_134 : f32 to vector<8x128xf32>
    %427 = arith.addf %425, %426 : vector<8x128xf32>
    %428 = vector.extract_strided_slice %419 {offsets = [0, 128], sizes = [8, 64], strides = [1, 1]} : vector<8x256xf32> to vector<8x64xf32>
    %429 = math.tanh %428 : vector<8x64xf32>
    %430 = vector.extract_strided_slice %427 {offsets = [0, 64], sizes = [8, 64], strides = [1, 1]} : vector<8x128xf32> to vector<8x64xf32>
    %431 = arith.mulf %430, %403 : vector<8x64xf32>
    %432 = vector.extract_strided_slice %427 {offsets = [0, 0], sizes = [8, 64], strides = [1, 1]} : vector<8x128xf32> to vector<8x64xf32>
    %433 = arith.mulf %432, %429 : vector<8x64xf32>
    %434 = arith.addf %431, %433 : vector<8x64xf32>
    %435 = vector.extract_strided_slice %419 {offsets = [0, 192], sizes = [8, 64], strides = [1, 1]} : vector<8x256xf32> to vector<8x64xf32>
    %cst_135 = arith.constant 5.000000e-01 : f32
    %436 = vector.broadcast %cst_135 : f32 to vector<8x64xf32>
    %437 = arith.mulf %436, %435 : vector<8x64xf32>
    %438 = math.tanh %437 : vector<8x64xf32>
    %cst_136 = arith.constant 5.000000e-01 : f32
    %439 = vector.broadcast %cst_136 : f32 to vector<8x64xf32>
    %440 = arith.mulf %439, %438 : vector<8x64xf32>
    %cst_137 = arith.constant 5.000000e-01 : f32
    %441 = vector.broadcast %cst_137 : f32 to vector<8x64xf32>
    %442 = arith.addf %440, %441 : vector<8x64xf32>
    %443 = math.tanh %434 : vector<8x64xf32>
    %444 = arith.mulf %442, %443 : vector<8x64xf32>
    %c14_i32 = arith.constant 14 : i32
    %c8_i32_138 = arith.constant 8 : i32
    %445 = arith.muli %c14_i32, %c8_i32_138 : i32
    %446 = tpu.assume_multiple %445, 8 : i32
    %447 = arith.index_cast %446 : i32 to index
    %c0_139 = arith.constant 0 : index
    %448 = vector.load %arg8[%447, %c0_139] : memref<224x256xf32, #tpu.memory_space<vmem>>, vector<8x256xf32>
    %cst_140 = arith.constant dense<0.000000e+00> : vector<8x256xf32>
    %449 = tpu.matmul %444, %8, %cst_140 {dimension_numbers = #tpu.dot_dimension_numbers<[1], [0], [0], [1], [0, 0, 1, 1], [], []>} : vector<8x64xf32>, vector<64x256xf32>, vector<8x256xf32> -> vector<8x256xf32>
    %450 = arith.addf %448, %449 : vector<8x256xf32>
    %451 = vector.extract_strided_slice %450 {offsets = [0, 0], sizes = [8, 128], strides = [1, 1]} : vector<8x256xf32> to vector<8x128xf32>
    %cst_141 = arith.constant 5.000000e-01 : f32
    %452 = vector.broadcast %cst_141 : f32 to vector<8x128xf32>
    %453 = arith.mulf %452, %451 : vector<8x128xf32>
    %454 = math.tanh %453 : vector<8x128xf32>
    %cst_142 = arith.constant 5.000000e-01 : f32
    %455 = vector.broadcast %cst_142 : f32 to vector<8x128xf32>
    %456 = arith.mulf %455, %454 : vector<8x128xf32>
    %cst_143 = arith.constant 5.000000e-01 : f32
    %457 = vector.broadcast %cst_143 : f32 to vector<8x128xf32>
    %458 = arith.addf %456, %457 : vector<8x128xf32>
    %459 = vector.extract_strided_slice %450 {offsets = [0, 128], sizes = [8, 64], strides = [1, 1]} : vector<8x256xf32> to vector<8x64xf32>
    %460 = math.tanh %459 : vector<8x64xf32>
    %461 = vector.extract_strided_slice %458 {offsets = [0, 64], sizes = [8, 64], strides = [1, 1]} : vector<8x128xf32> to vector<8x64xf32>
    %462 = arith.mulf %461, %434 : vector<8x64xf32>
    %463 = vector.extract_strided_slice %458 {offsets = [0, 0], sizes = [8, 64], strides = [1, 1]} : vector<8x128xf32> to vector<8x64xf32>
    %464 = arith.mulf %463, %460 : vector<8x64xf32>
    %465 = arith.addf %462, %464 : vector<8x64xf32>
    %466 = vector.extract_strided_slice %450 {offsets = [0, 192], sizes = [8, 64], strides = [1, 1]} : vector<8x256xf32> to vector<8x64xf32>
    %cst_144 = arith.constant 5.000000e-01 : f32
    %467 = vector.broadcast %cst_144 : f32 to vector<8x64xf32>
    %468 = arith.mulf %467, %466 : vector<8x64xf32>
    %469 = math.tanh %468 : vector<8x64xf32>
    %cst_145 = arith.constant 5.000000e-01 : f32
    %470 = vector.broadcast %cst_145 : f32 to vector<8x64xf32>
    %471 = arith.mulf %470, %469 : vector<8x64xf32>
    %cst_146 = arith.constant 5.000000e-01 : f32
    %472 = vector.broadcast %cst_146 : f32 to vector<8x64xf32>
    %473 = arith.addf %471, %472 : vector<8x64xf32>
    %474 = math.tanh %465 : vector<8x64xf32>
    %475 = arith.mulf %473, %474 : vector<8x64xf32>
    %c15_i32 = arith.constant 15 : i32
    %c8_i32_147 = arith.constant 8 : i32
    %476 = arith.muli %c15_i32, %c8_i32_147 : i32
    %477 = tpu.assume_multiple %476, 8 : i32
    %478 = arith.index_cast %477 : i32 to index
    %c0_148 = arith.constant 0 : index
    %479 = vector.load %arg8[%478, %c0_148] : memref<224x256xf32, #tpu.memory_space<vmem>>, vector<8x256xf32>
    %cst_149 = arith.constant dense<0.000000e+00> : vector<8x256xf32>
    %480 = tpu.matmul %475, %8, %cst_149 {dimension_numbers = #tpu.dot_dimension_numbers<[1], [0], [0], [1], [0, 0, 1, 1], [], []>} : vector<8x64xf32>, vector<64x256xf32>, vector<8x256xf32> -> vector<8x256xf32>
    %481 = arith.addf %479, %480 : vector<8x256xf32>
    %482 = vector.extract_strided_slice %481 {offsets = [0, 0], sizes = [8, 128], strides = [1, 1]} : vector<8x256xf32> to vector<8x128xf32>
    %cst_150 = arith.constant 5.000000e-01 : f32
    %483 = vector.broadcast %cst_150 : f32 to vector<8x128xf32>
    %484 = arith.mulf %483, %482 : vector<8x128xf32>
    %485 = math.tanh %484 : vector<8x128xf32>
    %cst_151 = arith.constant 5.000000e-01 : f32
    %486 = vector.broadcast %cst_151 : f32 to vector<8x128xf32>
    %487 = arith.mulf %486, %485 : vector<8x128xf32>
    %cst_152 = arith.constant 5.000000e-01 : f32
    %488 = vector.broadcast %cst_152 : f32 to vector<8x128xf32>
    %489 = arith.addf %487, %488 : vector<8x128xf32>
    %490 = vector.extract_strided_slice %481 {offsets = [0, 128], sizes = [8, 64], strides = [1, 1]} : vector<8x256xf32> to vector<8x64xf32>
    %491 = math.tanh %490 : vector<8x64xf32>
    %492 = vector.extract_strided_slice %489 {offsets = [0, 64], sizes = [8, 64], strides = [1, 1]} : vector<8x128xf32> to vector<8x64xf32>
    %493 = arith.mulf %492, %465 : vector<8x64xf32>
    %494 = vector.extract_strided_slice %489 {offsets = [0, 0], sizes = [8, 64], strides = [1, 1]} : vector<8x128xf32> to vector<8x64xf32>
    %495 = arith.mulf %494, %491 : vector<8x64xf32>
    %496 = arith.addf %493, %495 : vector<8x64xf32>
    %497 = vector.extract_strided_slice %481 {offsets = [0, 192], sizes = [8, 64], strides = [1, 1]} : vector<8x256xf32> to vector<8x64xf32>
    %cst_153 = arith.constant 5.000000e-01 : f32
    %498 = vector.broadcast %cst_153 : f32 to vector<8x64xf32>
    %499 = arith.mulf %498, %497 : vector<8x64xf32>
    %500 = math.tanh %499 : vector<8x64xf32>
    %cst_154 = arith.constant 5.000000e-01 : f32
    %501 = vector.broadcast %cst_154 : f32 to vector<8x64xf32>
    %502 = arith.mulf %501, %500 : vector<8x64xf32>
    %cst_155 = arith.constant 5.000000e-01 : f32
    %503 = vector.broadcast %cst_155 : f32 to vector<8x64xf32>
    %504 = arith.addf %502, %503 : vector<8x64xf32>
    %505 = math.tanh %496 : vector<8x64xf32>
    %506 = arith.mulf %504, %505 : vector<8x64xf32>
    %c16_i32 = arith.constant 16 : i32
    %c8_i32_156 = arith.constant 8 : i32
    %507 = arith.muli %c16_i32, %c8_i32_156 : i32
    %508 = tpu.assume_multiple %507, 8 : i32
    %509 = arith.index_cast %508 : i32 to index
    %c0_157 = arith.constant 0 : index
    %510 = vector.load %arg8[%509, %c0_157] : memref<224x256xf32, #tpu.memory_space<vmem>>, vector<8x256xf32>
    %cst_158 = arith.constant dense<0.000000e+00> : vector<8x256xf32>
    %511 = tpu.matmul %506, %8, %cst_158 {dimension_numbers = #tpu.dot_dimension_numbers<[1], [0], [0], [1], [0, 0, 1, 1], [], []>} : vector<8x64xf32>, vector<64x256xf32>, vector<8x256xf32> -> vector<8x256xf32>
    %512 = arith.addf %510, %511 : vector<8x256xf32>
    %513 = vector.extract_strided_slice %512 {offsets = [0, 0], sizes = [8, 128], strides = [1, 1]} : vector<8x256xf32> to vector<8x128xf32>
    %cst_159 = arith.constant 5.000000e-01 : f32
    %514 = vector.broadcast %cst_159 : f32 to vector<8x128xf32>
    %515 = arith.mulf %514, %513 : vector<8x128xf32>
    %516 = math.tanh %515 : vector<8x128xf32>
    %cst_160 = arith.constant 5.000000e-01 : f32
    %517 = vector.broadcast %cst_160 : f32 to vector<8x128xf32>
    %518 = arith.mulf %517, %516 : vector<8x128xf32>
    %cst_161 = arith.constant 5.000000e-01 : f32
    %519 = vector.broadcast %cst_161 : f32 to vector<8x128xf32>
    %520 = arith.addf %518, %519 : vector<8x128xf32>
    %521 = vector.extract_strided_slice %512 {offsets = [0, 128], sizes = [8, 64], strides = [1, 1]} : vector<8x256xf32> to vector<8x64xf32>
    %522 = math.tanh %521 : vector<8x64xf32>
    %523 = vector.extract_strided_slice %520 {offsets = [0, 64], sizes = [8, 64], strides = [1, 1]} : vector<8x128xf32> to vector<8x64xf32>
    %524 = arith.mulf %523, %496 : vector<8x64xf32>
    %525 = vector.extract_strided_slice %520 {offsets = [0, 0], sizes = [8, 64], strides = [1, 1]} : vector<8x128xf32> to vector<8x64xf32>
    %526 = arith.mulf %525, %522 : vector<8x64xf32>
    %527 = arith.addf %524, %526 : vector<8x64xf32>
    %528 = vector.extract_strided_slice %512 {offsets = [0, 192], sizes = [8, 64], strides = [1, 1]} : vector<8x256xf32> to vector<8x64xf32>
    %cst_162 = arith.constant 5.000000e-01 : f32
    %529 = vector.broadcast %cst_162 : f32 to vector<8x64xf32>
    %530 = arith.mulf %529, %528 : vector<8x64xf32>
    %531 = math.tanh %530 : vector<8x64xf32>
    %cst_163 = arith.constant 5.000000e-01 : f32
    %532 = vector.broadcast %cst_163 : f32 to vector<8x64xf32>
    %533 = arith.mulf %532, %531 : vector<8x64xf32>
    %cst_164 = arith.constant 5.000000e-01 : f32
    %534 = vector.broadcast %cst_164 : f32 to vector<8x64xf32>
    %535 = arith.addf %533, %534 : vector<8x64xf32>
    %536 = math.tanh %527 : vector<8x64xf32>
    %537 = arith.mulf %535, %536 : vector<8x64xf32>
    %c17_i32 = arith.constant 17 : i32
    %c8_i32_165 = arith.constant 8 : i32
    %538 = arith.muli %c17_i32, %c8_i32_165 : i32
    %539 = tpu.assume_multiple %538, 8 : i32
    %540 = arith.index_cast %539 : i32 to index
    %c0_166 = arith.constant 0 : index
    %541 = vector.load %arg8[%540, %c0_166] : memref<224x256xf32, #tpu.memory_space<vmem>>, vector<8x256xf32>
    %cst_167 = arith.constant dense<0.000000e+00> : vector<8x256xf32>
    %542 = tpu.matmul %537, %8, %cst_167 {dimension_numbers = #tpu.dot_dimension_numbers<[1], [0], [0], [1], [0, 0, 1, 1], [], []>} : vector<8x64xf32>, vector<64x256xf32>, vector<8x256xf32> -> vector<8x256xf32>
    %543 = arith.addf %541, %542 : vector<8x256xf32>
    %544 = vector.extract_strided_slice %543 {offsets = [0, 0], sizes = [8, 128], strides = [1, 1]} : vector<8x256xf32> to vector<8x128xf32>
    %cst_168 = arith.constant 5.000000e-01 : f32
    %545 = vector.broadcast %cst_168 : f32 to vector<8x128xf32>
    %546 = arith.mulf %545, %544 : vector<8x128xf32>
    %547 = math.tanh %546 : vector<8x128xf32>
    %cst_169 = arith.constant 5.000000e-01 : f32
    %548 = vector.broadcast %cst_169 : f32 to vector<8x128xf32>
    %549 = arith.mulf %548, %547 : vector<8x128xf32>
    %cst_170 = arith.constant 5.000000e-01 : f32
    %550 = vector.broadcast %cst_170 : f32 to vector<8x128xf32>
    %551 = arith.addf %549, %550 : vector<8x128xf32>
    %552 = vector.extract_strided_slice %543 {offsets = [0, 128], sizes = [8, 64], strides = [1, 1]} : vector<8x256xf32> to vector<8x64xf32>
    %553 = math.tanh %552 : vector<8x64xf32>
    %554 = vector.extract_strided_slice %551 {offsets = [0, 64], sizes = [8, 64], strides = [1, 1]} : vector<8x128xf32> to vector<8x64xf32>
    %555 = arith.mulf %554, %527 : vector<8x64xf32>
    %556 = vector.extract_strided_slice %551 {offsets = [0, 0], sizes = [8, 64], strides = [1, 1]} : vector<8x128xf32> to vector<8x64xf32>
    %557 = arith.mulf %556, %553 : vector<8x64xf32>
    %558 = arith.addf %555, %557 : vector<8x64xf32>
    %559 = vector.extract_strided_slice %543 {offsets = [0, 192], sizes = [8, 64], strides = [1, 1]} : vector<8x256xf32> to vector<8x64xf32>
    %cst_171 = arith.constant 5.000000e-01 : f32
    %560 = vector.broadcast %cst_171 : f32 to vector<8x64xf32>
    %561 = arith.mulf %560, %559 : vector<8x64xf32>
    %562 = math.tanh %561 : vector<8x64xf32>
    %cst_172 = arith.constant 5.000000e-01 : f32
    %563 = vector.broadcast %cst_172 : f32 to vector<8x64xf32>
    %564 = arith.mulf %563, %562 : vector<8x64xf32>
    %cst_173 = arith.constant 5.000000e-01 : f32
    %565 = vector.broadcast %cst_173 : f32 to vector<8x64xf32>
    %566 = arith.addf %564, %565 : vector<8x64xf32>
    %567 = math.tanh %558 : vector<8x64xf32>
    %568 = arith.mulf %566, %567 : vector<8x64xf32>
    %c18_i32 = arith.constant 18 : i32
    %c8_i32_174 = arith.constant 8 : i32
    %569 = arith.muli %c18_i32, %c8_i32_174 : i32
    %570 = tpu.assume_multiple %569, 8 : i32
    %571 = arith.index_cast %570 : i32 to index
    %c0_175 = arith.constant 0 : index
    %572 = vector.load %arg8[%571, %c0_175] : memref<224x256xf32, #tpu.memory_space<vmem>>, vector<8x256xf32>
    %cst_176 = arith.constant dense<0.000000e+00> : vector<8x256xf32>
    %573 = tpu.matmul %568, %8, %cst_176 {dimension_numbers = #tpu.dot_dimension_numbers<[1], [0], [0], [1], [0, 0, 1, 1], [], []>} : vector<8x64xf32>, vector<64x256xf32>, vector<8x256xf32> -> vector<8x256xf32>
    %574 = arith.addf %572, %573 : vector<8x256xf32>
    %575 = vector.extract_strided_slice %574 {offsets = [0, 0], sizes = [8, 128], strides = [1, 1]} : vector<8x256xf32> to vector<8x128xf32>
    %cst_177 = arith.constant 5.000000e-01 : f32
    %576 = vector.broadcast %cst_177 : f32 to vector<8x128xf32>
    %577 = arith.mulf %576, %575 : vector<8x128xf32>
    %578 = math.tanh %577 : vector<8x128xf32>
    %cst_178 = arith.constant 5.000000e-01 : f32
    %579 = vector.broadcast %cst_178 : f32 to vector<8x128xf32>
    %580 = arith.mulf %579, %578 : vector<8x128xf32>
    %cst_179 = arith.constant 5.000000e-01 : f32
    %581 = vector.broadcast %cst_179 : f32 to vector<8x128xf32>
    %582 = arith.addf %580, %581 : vector<8x128xf32>
    %583 = vector.extract_strided_slice %574 {offsets = [0, 128], sizes = [8, 64], strides = [1, 1]} : vector<8x256xf32> to vector<8x64xf32>
    %584 = math.tanh %583 : vector<8x64xf32>
    %585 = vector.extract_strided_slice %582 {offsets = [0, 64], sizes = [8, 64], strides = [1, 1]} : vector<8x128xf32> to vector<8x64xf32>
    %586 = arith.mulf %585, %558 : vector<8x64xf32>
    %587 = vector.extract_strided_slice %582 {offsets = [0, 0], sizes = [8, 64], strides = [1, 1]} : vector<8x128xf32> to vector<8x64xf32>
    %588 = arith.mulf %587, %584 : vector<8x64xf32>
    %589 = arith.addf %586, %588 : vector<8x64xf32>
    %590 = vector.extract_strided_slice %574 {offsets = [0, 192], sizes = [8, 64], strides = [1, 1]} : vector<8x256xf32> to vector<8x64xf32>
    %cst_180 = arith.constant 5.000000e-01 : f32
    %591 = vector.broadcast %cst_180 : f32 to vector<8x64xf32>
    %592 = arith.mulf %591, %590 : vector<8x64xf32>
    %593 = math.tanh %592 : vector<8x64xf32>
    %cst_181 = arith.constant 5.000000e-01 : f32
    %594 = vector.broadcast %cst_181 : f32 to vector<8x64xf32>
    %595 = arith.mulf %594, %593 : vector<8x64xf32>
    %cst_182 = arith.constant 5.000000e-01 : f32
    %596 = vector.broadcast %cst_182 : f32 to vector<8x64xf32>
    %597 = arith.addf %595, %596 : vector<8x64xf32>
    %598 = math.tanh %589 : vector<8x64xf32>
    %599 = arith.mulf %597, %598 : vector<8x64xf32>
    %c19_i32 = arith.constant 19 : i32
    %c8_i32_183 = arith.constant 8 : i32
    %600 = arith.muli %c19_i32, %c8_i32_183 : i32
    %601 = tpu.assume_multiple %600, 8 : i32
    %602 = arith.index_cast %601 : i32 to index
    %c0_184 = arith.constant 0 : index
    %603 = vector.load %arg8[%602, %c0_184] : memref<224x256xf32, #tpu.memory_space<vmem>>, vector<8x256xf32>
    %cst_185 = arith.constant dense<0.000000e+00> : vector<8x256xf32>
    %604 = tpu.matmul %599, %8, %cst_185 {dimension_numbers = #tpu.dot_dimension_numbers<[1], [0], [0], [1], [0, 0, 1, 1], [], []>} : vector<8x64xf32>, vector<64x256xf32>, vector<8x256xf32> -> vector<8x256xf32>
    %605 = arith.addf %603, %604 : vector<8x256xf32>
    %606 = vector.extract_strided_slice %605 {offsets = [0, 0], sizes = [8, 128], strides = [1, 1]} : vector<8x256xf32> to vector<8x128xf32>
    %cst_186 = arith.constant 5.000000e-01 : f32
    %607 = vector.broadcast %cst_186 : f32 to vector<8x128xf32>
    %608 = arith.mulf %607, %606 : vector<8x128xf32>
    %609 = math.tanh %608 : vector<8x128xf32>
    %cst_187 = arith.constant 5.000000e-01 : f32
    %610 = vector.broadcast %cst_187 : f32 to vector<8x128xf32>
    %611 = arith.mulf %610, %609 : vector<8x128xf32>
    %cst_188 = arith.constant 5.000000e-01 : f32
    %612 = vector.broadcast %cst_188 : f32 to vector<8x128xf32>
    %613 = arith.addf %611, %612 : vector<8x128xf32>
    %614 = vector.extract_strided_slice %605 {offsets = [0, 128], sizes = [8, 64], strides = [1, 1]} : vector<8x256xf32> to vector<8x64xf32>
    %615 = math.tanh %614 : vector<8x64xf32>
    %616 = vector.extract_strided_slice %613 {offsets = [0, 64], sizes = [8, 64], strides = [1, 1]} : vector<8x128xf32> to vector<8x64xf32>
    %617 = arith.mulf %616, %589 : vector<8x64xf32>
    %618 = vector.extract_strided_slice %613 {offsets = [0, 0], sizes = [8, 64], strides = [1, 1]} : vector<8x128xf32> to vector<8x64xf32>
    %619 = arith.mulf %618, %615 : vector<8x64xf32>
    %620 = arith.addf %617, %619 : vector<8x64xf32>
    %621 = vector.extract_strided_slice %605 {offsets = [0, 192], sizes = [8, 64], strides = [1, 1]} : vector<8x256xf32> to vector<8x64xf32>
    %cst_189 = arith.constant 5.000000e-01 : f32
    %622 = vector.broadcast %cst_189 : f32 to vector<8x64xf32>
    %623 = arith.mulf %622, %621 : vector<8x64xf32>
    %624 = math.tanh %623 : vector<8x64xf32>
    %cst_190 = arith.constant 5.000000e-01 : f32
    %625 = vector.broadcast %cst_190 : f32 to vector<8x64xf32>
    %626 = arith.mulf %625, %624 : vector<8x64xf32>
    %cst_191 = arith.constant 5.000000e-01 : f32
    %627 = vector.broadcast %cst_191 : f32 to vector<8x64xf32>
    %628 = arith.addf %626, %627 : vector<8x64xf32>
    %629 = math.tanh %620 : vector<8x64xf32>
    %630 = arith.mulf %628, %629 : vector<8x64xf32>
    %c20_i32 = arith.constant 20 : i32
    %c8_i32_192 = arith.constant 8 : i32
    %631 = arith.muli %c20_i32, %c8_i32_192 : i32
    %632 = tpu.assume_multiple %631, 8 : i32
    %633 = arith.index_cast %632 : i32 to index
    %c0_193 = arith.constant 0 : index
    %634 = vector.load %arg8[%633, %c0_193] : memref<224x256xf32, #tpu.memory_space<vmem>>, vector<8x256xf32>
    %cst_194 = arith.constant dense<0.000000e+00> : vector<8x256xf32>
    %635 = tpu.matmul %630, %8, %cst_194 {dimension_numbers = #tpu.dot_dimension_numbers<[1], [0], [0], [1], [0, 0, 1, 1], [], []>} : vector<8x64xf32>, vector<64x256xf32>, vector<8x256xf32> -> vector<8x256xf32>
    %636 = arith.addf %634, %635 : vector<8x256xf32>
    %637 = vector.extract_strided_slice %636 {offsets = [0, 0], sizes = [8, 128], strides = [1, 1]} : vector<8x256xf32> to vector<8x128xf32>
    %cst_195 = arith.constant 5.000000e-01 : f32
    %638 = vector.broadcast %cst_195 : f32 to vector<8x128xf32>
    %639 = arith.mulf %638, %637 : vector<8x128xf32>
    %640 = math.tanh %639 : vector<8x128xf32>
    %cst_196 = arith.constant 5.000000e-01 : f32
    %641 = vector.broadcast %cst_196 : f32 to vector<8x128xf32>
    %642 = arith.mulf %641, %640 : vector<8x128xf32>
    %cst_197 = arith.constant 5.000000e-01 : f32
    %643 = vector.broadcast %cst_197 : f32 to vector<8x128xf32>
    %644 = arith.addf %642, %643 : vector<8x128xf32>
    %645 = vector.extract_strided_slice %636 {offsets = [0, 128], sizes = [8, 64], strides = [1, 1]} : vector<8x256xf32> to vector<8x64xf32>
    %646 = math.tanh %645 : vector<8x64xf32>
    %647 = vector.extract_strided_slice %644 {offsets = [0, 64], sizes = [8, 64], strides = [1, 1]} : vector<8x128xf32> to vector<8x64xf32>
    %648 = arith.mulf %647, %620 : vector<8x64xf32>
    %649 = vector.extract_strided_slice %644 {offsets = [0, 0], sizes = [8, 64], strides = [1, 1]} : vector<8x128xf32> to vector<8x64xf32>
    %650 = arith.mulf %649, %646 : vector<8x64xf32>
    %651 = arith.addf %648, %650 : vector<8x64xf32>
    %652 = vector.extract_strided_slice %636 {offsets = [0, 192], sizes = [8, 64], strides = [1, 1]} : vector<8x256xf32> to vector<8x64xf32>
    %cst_198 = arith.constant 5.000000e-01 : f32
    %653 = vector.broadcast %cst_198 : f32 to vector<8x64xf32>
    %654 = arith.mulf %653, %652 : vector<8x64xf32>
    %655 = math.tanh %654 : vector<8x64xf32>
    %cst_199 = arith.constant 5.000000e-01 : f32
    %656 = vector.broadcast %cst_199 : f32 to vector<8x64xf32>
    %657 = arith.mulf %656, %655 : vector<8x64xf32>
    %cst_200 = arith.constant 5.000000e-01 : f32
    %658 = vector.broadcast %cst_200 : f32 to vector<8x64xf32>
    %659 = arith.addf %657, %658 : vector<8x64xf32>
    %660 = math.tanh %651 : vector<8x64xf32>
    %661 = arith.mulf %659, %660 : vector<8x64xf32>
    %c21_i32 = arith.constant 21 : i32
    %c8_i32_201 = arith.constant 8 : i32
    %662 = arith.muli %c21_i32, %c8_i32_201 : i32
    %663 = tpu.assume_multiple %662, 8 : i32
    %664 = arith.index_cast %663 : i32 to index
    %c0_202 = arith.constant 0 : index
    %665 = vector.load %arg8[%664, %c0_202] : memref<224x256xf32, #tpu.memory_space<vmem>>, vector<8x256xf32>
    %cst_203 = arith.constant dense<0.000000e+00> : vector<8x256xf32>
    %666 = tpu.matmul %661, %8, %cst_203 {dimension_numbers = #tpu.dot_dimension_numbers<[1], [0], [0], [1], [0, 0, 1, 1], [], []>} : vector<8x64xf32>, vector<64x256xf32>, vector<8x256xf32> -> vector<8x256xf32>
    %667 = arith.addf %665, %666 : vector<8x256xf32>
    %668 = vector.extract_strided_slice %667 {offsets = [0, 0], sizes = [8, 128], strides = [1, 1]} : vector<8x256xf32> to vector<8x128xf32>
    %cst_204 = arith.constant 5.000000e-01 : f32
    %669 = vector.broadcast %cst_204 : f32 to vector<8x128xf32>
    %670 = arith.mulf %669, %668 : vector<8x128xf32>
    %671 = math.tanh %670 : vector<8x128xf32>
    %cst_205 = arith.constant 5.000000e-01 : f32
    %672 = vector.broadcast %cst_205 : f32 to vector<8x128xf32>
    %673 = arith.mulf %672, %671 : vector<8x128xf32>
    %cst_206 = arith.constant 5.000000e-01 : f32
    %674 = vector.broadcast %cst_206 : f32 to vector<8x128xf32>
    %675 = arith.addf %673, %674 : vector<8x128xf32>
    %676 = vector.extract_strided_slice %667 {offsets = [0, 128], sizes = [8, 64], strides = [1, 1]} : vector<8x256xf32> to vector<8x64xf32>
    %677 = math.tanh %676 : vector<8x64xf32>
    %678 = vector.extract_strided_slice %675 {offsets = [0, 64], sizes = [8, 64], strides = [1, 1]} : vector<8x128xf32> to vector<8x64xf32>
    %679 = arith.mulf %678, %651 : vector<8x64xf32>
    %680 = vector.extract_strided_slice %675 {offsets = [0, 0], sizes = [8, 64], strides = [1, 1]} : vector<8x128xf32> to vector<8x64xf32>
    %681 = arith.mulf %680, %677 : vector<8x64xf32>
    %682 = arith.addf %679, %681 : vector<8x64xf32>
    %683 = vector.extract_strided_slice %667 {offsets = [0, 192], sizes = [8, 64], strides = [1, 1]} : vector<8x256xf32> to vector<8x64xf32>
    %cst_207 = arith.constant 5.000000e-01 : f32
    %684 = vector.broadcast %cst_207 : f32 to vector<8x64xf32>
    %685 = arith.mulf %684, %683 : vector<8x64xf32>
    %686 = math.tanh %685 : vector<8x64xf32>
    %cst_208 = arith.constant 5.000000e-01 : f32
    %687 = vector.broadcast %cst_208 : f32 to vector<8x64xf32>
    %688 = arith.mulf %687, %686 : vector<8x64xf32>
    %cst_209 = arith.constant 5.000000e-01 : f32
    %689 = vector.broadcast %cst_209 : f32 to vector<8x64xf32>
    %690 = arith.addf %688, %689 : vector<8x64xf32>
    %691 = math.tanh %682 : vector<8x64xf32>
    %692 = arith.mulf %690, %691 : vector<8x64xf32>
    %c22_i32 = arith.constant 22 : i32
    %c8_i32_210 = arith.constant 8 : i32
    %693 = arith.muli %c22_i32, %c8_i32_210 : i32
    %694 = tpu.assume_multiple %693, 8 : i32
    %695 = arith.index_cast %694 : i32 to index
    %c0_211 = arith.constant 0 : index
    %696 = vector.load %arg8[%695, %c0_211] : memref<224x256xf32, #tpu.memory_space<vmem>>, vector<8x256xf32>
    %cst_212 = arith.constant dense<0.000000e+00> : vector<8x256xf32>
    %697 = tpu.matmul %692, %8, %cst_212 {dimension_numbers = #tpu.dot_dimension_numbers<[1], [0], [0], [1], [0, 0, 1, 1], [], []>} : vector<8x64xf32>, vector<64x256xf32>, vector<8x256xf32> -> vector<8x256xf32>
    %698 = arith.addf %696, %697 : vector<8x256xf32>
    %699 = vector.extract_strided_slice %698 {offsets = [0, 0], sizes = [8, 128], strides = [1, 1]} : vector<8x256xf32> to vector<8x128xf32>
    %cst_213 = arith.constant 5.000000e-01 : f32
    %700 = vector.broadcast %cst_213 : f32 to vector<8x128xf32>
    %701 = arith.mulf %700, %699 : vector<8x128xf32>
    %702 = math.tanh %701 : vector<8x128xf32>
    %cst_214 = arith.constant 5.000000e-01 : f32
    %703 = vector.broadcast %cst_214 : f32 to vector<8x128xf32>
    %704 = arith.mulf %703, %702 : vector<8x128xf32>
    %cst_215 = arith.constant 5.000000e-01 : f32
    %705 = vector.broadcast %cst_215 : f32 to vector<8x128xf32>
    %706 = arith.addf %704, %705 : vector<8x128xf32>
    %707 = vector.extract_strided_slice %698 {offsets = [0, 128], sizes = [8, 64], strides = [1, 1]} : vector<8x256xf32> to vector<8x64xf32>
    %708 = math.tanh %707 : vector<8x64xf32>
    %709 = vector.extract_strided_slice %706 {offsets = [0, 64], sizes = [8, 64], strides = [1, 1]} : vector<8x128xf32> to vector<8x64xf32>
    %710 = arith.mulf %709, %682 : vector<8x64xf32>
    %711 = vector.extract_strided_slice %706 {offsets = [0, 0], sizes = [8, 64], strides = [1, 1]} : vector<8x128xf32> to vector<8x64xf32>
    %712 = arith.mulf %711, %708 : vector<8x64xf32>
    %713 = arith.addf %710, %712 : vector<8x64xf32>
    %714 = vector.extract_strided_slice %698 {offsets = [0, 192], sizes = [8, 64], strides = [1, 1]} : vector<8x256xf32> to vector<8x64xf32>
    %cst_216 = arith.constant 5.000000e-01 : f32
    %715 = vector.broadcast %cst_216 : f32 to vector<8x64xf32>
    %716 = arith.mulf %715, %714 : vector<8x64xf32>
    %717 = math.tanh %716 : vector<8x64xf32>
    %cst_217 = arith.constant 5.000000e-01 : f32
    %718 = vector.broadcast %cst_217 : f32 to vector<8x64xf32>
    %719 = arith.mulf %718, %717 : vector<8x64xf32>
    %cst_218 = arith.constant 5.000000e-01 : f32
    %720 = vector.broadcast %cst_218 : f32 to vector<8x64xf32>
    %721 = arith.addf %719, %720 : vector<8x64xf32>
    %722 = math.tanh %713 : vector<8x64xf32>
    %723 = arith.mulf %721, %722 : vector<8x64xf32>
    %c23_i32 = arith.constant 23 : i32
    %c8_i32_219 = arith.constant 8 : i32
    %724 = arith.muli %c23_i32, %c8_i32_219 : i32
    %725 = tpu.assume_multiple %724, 8 : i32
    %726 = arith.index_cast %725 : i32 to index
    %c0_220 = arith.constant 0 : index
    %727 = vector.load %arg8[%726, %c0_220] : memref<224x256xf32, #tpu.memory_space<vmem>>, vector<8x256xf32>
    %cst_221 = arith.constant dense<0.000000e+00> : vector<8x256xf32>
    %728 = tpu.matmul %723, %8, %cst_221 {dimension_numbers = #tpu.dot_dimension_numbers<[1], [0], [0], [1], [0, 0, 1, 1], [], []>} : vector<8x64xf32>, vector<64x256xf32>, vector<8x256xf32> -> vector<8x256xf32>
    %729 = arith.addf %727, %728 : vector<8x256xf32>
    %730 = vector.extract_strided_slice %729 {offsets = [0, 0], sizes = [8, 128], strides = [1, 1]} : vector<8x256xf32> to vector<8x128xf32>
    %cst_222 = arith.constant 5.000000e-01 : f32
    %731 = vector.broadcast %cst_222 : f32 to vector<8x128xf32>
    %732 = arith.mulf %731, %730 : vector<8x128xf32>
    %733 = math.tanh %732 : vector<8x128xf32>
    %cst_223 = arith.constant 5.000000e-01 : f32
    %734 = vector.broadcast %cst_223 : f32 to vector<8x128xf32>
    %735 = arith.mulf %734, %733 : vector<8x128xf32>
    %cst_224 = arith.constant 5.000000e-01 : f32
    %736 = vector.broadcast %cst_224 : f32 to vector<8x128xf32>
    %737 = arith.addf %735, %736 : vector<8x128xf32>
    %738 = vector.extract_strided_slice %729 {offsets = [0, 128], sizes = [8, 64], strides = [1, 1]} : vector<8x256xf32> to vector<8x64xf32>
    %739 = math.tanh %738 : vector<8x64xf32>
    %740 = vector.extract_strided_slice %737 {offsets = [0, 64], sizes = [8, 64], strides = [1, 1]} : vector<8x128xf32> to vector<8x64xf32>
    %741 = arith.mulf %740, %713 : vector<8x64xf32>
    %742 = vector.extract_strided_slice %737 {offsets = [0, 0], sizes = [8, 64], strides = [1, 1]} : vector<8x128xf32> to vector<8x64xf32>
    %743 = arith.mulf %742, %739 : vector<8x64xf32>
    %744 = arith.addf %741, %743 : vector<8x64xf32>
    %745 = vector.extract_strided_slice %729 {offsets = [0, 192], sizes = [8, 64], strides = [1, 1]} : vector<8x256xf32> to vector<8x64xf32>
    %cst_225 = arith.constant 5.000000e-01 : f32
    %746 = vector.broadcast %cst_225 : f32 to vector<8x64xf32>
    %747 = arith.mulf %746, %745 : vector<8x64xf32>
    %748 = math.tanh %747 : vector<8x64xf32>
    %cst_226 = arith.constant 5.000000e-01 : f32
    %749 = vector.broadcast %cst_226 : f32 to vector<8x64xf32>
    %750 = arith.mulf %749, %748 : vector<8x64xf32>
    %cst_227 = arith.constant 5.000000e-01 : f32
    %751 = vector.broadcast %cst_227 : f32 to vector<8x64xf32>
    %752 = arith.addf %750, %751 : vector<8x64xf32>
    %753 = math.tanh %744 : vector<8x64xf32>
    %754 = arith.mulf %752, %753 : vector<8x64xf32>
    %c24_i32 = arith.constant 24 : i32
    %c8_i32_228 = arith.constant 8 : i32
    %755 = arith.muli %c24_i32, %c8_i32_228 : i32
    %756 = tpu.assume_multiple %755, 8 : i32
    %757 = arith.index_cast %756 : i32 to index
    %c0_229 = arith.constant 0 : index
    %758 = vector.load %arg8[%757, %c0_229] : memref<224x256xf32, #tpu.memory_space<vmem>>, vector<8x256xf32>
    %cst_230 = arith.constant dense<0.000000e+00> : vector<8x256xf32>
    %759 = tpu.matmul %754, %8, %cst_230 {dimension_numbers = #tpu.dot_dimension_numbers<[1], [0], [0], [1], [0, 0, 1, 1], [], []>} : vector<8x64xf32>, vector<64x256xf32>, vector<8x256xf32> -> vector<8x256xf32>
    %760 = arith.addf %758, %759 : vector<8x256xf32>
    %761 = vector.extract_strided_slice %760 {offsets = [0, 0], sizes = [8, 128], strides = [1, 1]} : vector<8x256xf32> to vector<8x128xf32>
    %cst_231 = arith.constant 5.000000e-01 : f32
    %762 = vector.broadcast %cst_231 : f32 to vector<8x128xf32>
    %763 = arith.mulf %762, %761 : vector<8x128xf32>
    %764 = math.tanh %763 : vector<8x128xf32>
    %cst_232 = arith.constant 5.000000e-01 : f32
    %765 = vector.broadcast %cst_232 : f32 to vector<8x128xf32>
    %766 = arith.mulf %765, %764 : vector<8x128xf32>
    %cst_233 = arith.constant 5.000000e-01 : f32
    %767 = vector.broadcast %cst_233 : f32 to vector<8x128xf32>
    %768 = arith.addf %766, %767 : vector<8x128xf32>
    %769 = vector.extract_strided_slice %760 {offsets = [0, 128], sizes = [8, 64], strides = [1, 1]} : vector<8x256xf32> to vector<8x64xf32>
    %770 = math.tanh %769 : vector<8x64xf32>
    %771 = vector.extract_strided_slice %768 {offsets = [0, 64], sizes = [8, 64], strides = [1, 1]} : vector<8x128xf32> to vector<8x64xf32>
    %772 = arith.mulf %771, %744 : vector<8x64xf32>
    %773 = vector.extract_strided_slice %768 {offsets = [0, 0], sizes = [8, 64], strides = [1, 1]} : vector<8x128xf32> to vector<8x64xf32>
    %774 = arith.mulf %773, %770 : vector<8x64xf32>
    %775 = arith.addf %772, %774 : vector<8x64xf32>
    %776 = vector.extract_strided_slice %760 {offsets = [0, 192], sizes = [8, 64], strides = [1, 1]} : vector<8x256xf32> to vector<8x64xf32>
    %cst_234 = arith.constant 5.000000e-01 : f32
    %777 = vector.broadcast %cst_234 : f32 to vector<8x64xf32>
    %778 = arith.mulf %777, %776 : vector<8x64xf32>
    %779 = math.tanh %778 : vector<8x64xf32>
    %cst_235 = arith.constant 5.000000e-01 : f32
    %780 = vector.broadcast %cst_235 : f32 to vector<8x64xf32>
    %781 = arith.mulf %780, %779 : vector<8x64xf32>
    %cst_236 = arith.constant 5.000000e-01 : f32
    %782 = vector.broadcast %cst_236 : f32 to vector<8x64xf32>
    %783 = arith.addf %781, %782 : vector<8x64xf32>
    %784 = math.tanh %775 : vector<8x64xf32>
    %785 = arith.mulf %783, %784 : vector<8x64xf32>
    %c25_i32 = arith.constant 25 : i32
    %c8_i32_237 = arith.constant 8 : i32
    %786 = arith.muli %c25_i32, %c8_i32_237 : i32
    %787 = tpu.assume_multiple %786, 8 : i32
    %788 = arith.index_cast %787 : i32 to index
    %c0_238 = arith.constant 0 : index
    %789 = vector.load %arg8[%788, %c0_238] : memref<224x256xf32, #tpu.memory_space<vmem>>, vector<8x256xf32>
    %cst_239 = arith.constant dense<0.000000e+00> : vector<8x256xf32>
    %790 = tpu.matmul %785, %8, %cst_239 {dimension_numbers = #tpu.dot_dimension_numbers<[1], [0], [0], [1], [0, 0, 1, 1], [], []>} : vector<8x64xf32>, vector<64x256xf32>, vector<8x256xf32> -> vector<8x256xf32>
    %791 = arith.addf %789, %790 : vector<8x256xf32>
    %792 = vector.extract_strided_slice %791 {offsets = [0, 0], sizes = [8, 128], strides = [1, 1]} : vector<8x256xf32> to vector<8x128xf32>
    %cst_240 = arith.constant 5.000000e-01 : f32
    %793 = vector.broadcast %cst_240 : f32 to vector<8x128xf32>
    %794 = arith.mulf %793, %792 : vector<8x128xf32>
    %795 = math.tanh %794 : vector<8x128xf32>
    %cst_241 = arith.constant 5.000000e-01 : f32
    %796 = vector.broadcast %cst_241 : f32 to vector<8x128xf32>
    %797 = arith.mulf %796, %795 : vector<8x128xf32>
    %cst_242 = arith.constant 5.000000e-01 : f32
    %798 = vector.broadcast %cst_242 : f32 to vector<8x128xf32>
    %799 = arith.addf %797, %798 : vector<8x128xf32>
    %800 = vector.extract_strided_slice %791 {offsets = [0, 128], sizes = [8, 64], strides = [1, 1]} : vector<8x256xf32> to vector<8x64xf32>
    %801 = math.tanh %800 : vector<8x64xf32>
    %802 = vector.extract_strided_slice %799 {offsets = [0, 64], sizes = [8, 64], strides = [1, 1]} : vector<8x128xf32> to vector<8x64xf32>
    %803 = arith.mulf %802, %775 : vector<8x64xf32>
    %804 = vector.extract_strided_slice %799 {offsets = [0, 0], sizes = [8, 64], strides = [1, 1]} : vector<8x128xf32> to vector<8x64xf32>
    %805 = arith.mulf %804, %801 : vector<8x64xf32>
    %806 = arith.addf %803, %805 : vector<8x64xf32>
    %807 = vector.extract_strided_slice %791 {offsets = [0, 192], sizes = [8, 64], strides = [1, 1]} : vector<8x256xf32> to vector<8x64xf32>
    %cst_243 = arith.constant 5.000000e-01 : f32
    %808 = vector.broadcast %cst_243 : f32 to vector<8x64xf32>
    %809 = arith.mulf %808, %807 : vector<8x64xf32>
    %810 = math.tanh %809 : vector<8x64xf32>
    %cst_244 = arith.constant 5.000000e-01 : f32
    %811 = vector.broadcast %cst_244 : f32 to vector<8x64xf32>
    %812 = arith.mulf %811, %810 : vector<8x64xf32>
    %cst_245 = arith.constant 5.000000e-01 : f32
    %813 = vector.broadcast %cst_245 : f32 to vector<8x64xf32>
    %814 = arith.addf %812, %813 : vector<8x64xf32>
    %815 = math.tanh %806 : vector<8x64xf32>
    %816 = arith.mulf %814, %815 : vector<8x64xf32>
    %c26_i32 = arith.constant 26 : i32
    %c8_i32_246 = arith.constant 8 : i32
    %817 = arith.muli %c26_i32, %c8_i32_246 : i32
    %818 = tpu.assume_multiple %817, 8 : i32
    %819 = arith.index_cast %818 : i32 to index
    %c0_247 = arith.constant 0 : index
    %820 = vector.load %arg8[%819, %c0_247] : memref<224x256xf32, #tpu.memory_space<vmem>>, vector<8x256xf32>
    %cst_248 = arith.constant dense<0.000000e+00> : vector<8x256xf32>
    %821 = tpu.matmul %816, %8, %cst_248 {dimension_numbers = #tpu.dot_dimension_numbers<[1], [0], [0], [1], [0, 0, 1, 1], [], []>} : vector<8x64xf32>, vector<64x256xf32>, vector<8x256xf32> -> vector<8x256xf32>
    %822 = arith.addf %820, %821 : vector<8x256xf32>
    %823 = vector.extract_strided_slice %822 {offsets = [0, 0], sizes = [8, 128], strides = [1, 1]} : vector<8x256xf32> to vector<8x128xf32>
    %cst_249 = arith.constant 5.000000e-01 : f32
    %824 = vector.broadcast %cst_249 : f32 to vector<8x128xf32>
    %825 = arith.mulf %824, %823 : vector<8x128xf32>
    %826 = math.tanh %825 : vector<8x128xf32>
    %cst_250 = arith.constant 5.000000e-01 : f32
    %827 = vector.broadcast %cst_250 : f32 to vector<8x128xf32>
    %828 = arith.mulf %827, %826 : vector<8x128xf32>
    %cst_251 = arith.constant 5.000000e-01 : f32
    %829 = vector.broadcast %cst_251 : f32 to vector<8x128xf32>
    %830 = arith.addf %828, %829 : vector<8x128xf32>
    %831 = vector.extract_strided_slice %822 {offsets = [0, 128], sizes = [8, 64], strides = [1, 1]} : vector<8x256xf32> to vector<8x64xf32>
    %832 = math.tanh %831 : vector<8x64xf32>
    %833 = vector.extract_strided_slice %830 {offsets = [0, 64], sizes = [8, 64], strides = [1, 1]} : vector<8x128xf32> to vector<8x64xf32>
    %834 = arith.mulf %833, %806 : vector<8x64xf32>
    %835 = vector.extract_strided_slice %830 {offsets = [0, 0], sizes = [8, 64], strides = [1, 1]} : vector<8x128xf32> to vector<8x64xf32>
    %836 = arith.mulf %835, %832 : vector<8x64xf32>
    %837 = arith.addf %834, %836 : vector<8x64xf32>
    %838 = vector.extract_strided_slice %822 {offsets = [0, 192], sizes = [8, 64], strides = [1, 1]} : vector<8x256xf32> to vector<8x64xf32>
    %cst_252 = arith.constant 5.000000e-01 : f32
    %839 = vector.broadcast %cst_252 : f32 to vector<8x64xf32>
    %840 = arith.mulf %839, %838 : vector<8x64xf32>
    %841 = math.tanh %840 : vector<8x64xf32>
    %cst_253 = arith.constant 5.000000e-01 : f32
    %842 = vector.broadcast %cst_253 : f32 to vector<8x64xf32>
    %843 = arith.mulf %842, %841 : vector<8x64xf32>
    %cst_254 = arith.constant 5.000000e-01 : f32
    %844 = vector.broadcast %cst_254 : f32 to vector<8x64xf32>
    %845 = arith.addf %843, %844 : vector<8x64xf32>
    %846 = math.tanh %837 : vector<8x64xf32>
    %847 = arith.mulf %845, %846 : vector<8x64xf32>
    %c27_i32 = arith.constant 27 : i32
    %c8_i32_255 = arith.constant 8 : i32
    %848 = arith.muli %c27_i32, %c8_i32_255 : i32
    %849 = tpu.assume_multiple %848, 8 : i32
    %850 = arith.index_cast %849 : i32 to index
    %c0_256 = arith.constant 0 : index
    %851 = vector.load %arg8[%850, %c0_256] : memref<224x256xf32, #tpu.memory_space<vmem>>, vector<8x256xf32>
    %cst_257 = arith.constant dense<0.000000e+00> : vector<8x256xf32>
    %852 = tpu.matmul %847, %8, %cst_257 {dimension_numbers = #tpu.dot_dimension_numbers<[1], [0], [0], [1], [0, 0, 1, 1], [], []>} : vector<8x64xf32>, vector<64x256xf32>, vector<8x256xf32> -> vector<8x256xf32>
    %853 = arith.addf %851, %852 : vector<8x256xf32>
    %854 = vector.extract_strided_slice %853 {offsets = [0, 0], sizes = [8, 128], strides = [1, 1]} : vector<8x256xf32> to vector<8x128xf32>
    %cst_258 = arith.constant 5.000000e-01 : f32
    %855 = vector.broadcast %cst_258 : f32 to vector<8x128xf32>
    %856 = arith.mulf %855, %854 : vector<8x128xf32>
    %857 = math.tanh %856 : vector<8x128xf32>
    %cst_259 = arith.constant 5.000000e-01 : f32
    %858 = vector.broadcast %cst_259 : f32 to vector<8x128xf32>
    %859 = arith.mulf %858, %857 : vector<8x128xf32>
    %cst_260 = arith.constant 5.000000e-01 : f32
    %860 = vector.broadcast %cst_260 : f32 to vector<8x128xf32>
    %861 = arith.addf %859, %860 : vector<8x128xf32>
    %862 = vector.extract_strided_slice %853 {offsets = [0, 128], sizes = [8, 64], strides = [1, 1]} : vector<8x256xf32> to vector<8x64xf32>
    %863 = math.tanh %862 : vector<8x64xf32>
    %864 = vector.extract_strided_slice %861 {offsets = [0, 64], sizes = [8, 64], strides = [1, 1]} : vector<8x128xf32> to vector<8x64xf32>
    %865 = arith.mulf %864, %837 : vector<8x64xf32>
    %866 = vector.extract_strided_slice %861 {offsets = [0, 0], sizes = [8, 64], strides = [1, 1]} : vector<8x128xf32> to vector<8x64xf32>
    %867 = arith.mulf %866, %863 : vector<8x64xf32>
    %868 = arith.addf %865, %867 : vector<8x64xf32>
    %869 = vector.extract_strided_slice %853 {offsets = [0, 192], sizes = [8, 64], strides = [1, 1]} : vector<8x256xf32> to vector<8x64xf32>
    %cst_261 = arith.constant 5.000000e-01 : f32
    %870 = vector.broadcast %cst_261 : f32 to vector<8x64xf32>
    %871 = arith.mulf %870, %869 : vector<8x64xf32>
    %872 = math.tanh %871 : vector<8x64xf32>
    %cst_262 = arith.constant 5.000000e-01 : f32
    %873 = vector.broadcast %cst_262 : f32 to vector<8x64xf32>
    %874 = arith.mulf %873, %872 : vector<8x64xf32>
    %cst_263 = arith.constant 5.000000e-01 : f32
    %875 = vector.broadcast %cst_263 : f32 to vector<8x64xf32>
    %876 = arith.addf %874, %875 : vector<8x64xf32>
    %877 = math.tanh %868 : vector<8x64xf32>
    %878 = arith.mulf %876, %877 : vector<8x64xf32>
    %c28_i32 = arith.constant 28 : i32
    %c0_264 = arith.constant 0 : index
    %c0_265 = arith.constant 0 : index
    %879 = vector.load %arg5[%c0_264, %c0_265] : memref<64x128xf32, #tpu.memory_space<vmem>>, vector<64x128xf32>
    %cst_266 = arith.constant dense<0.000000e+00> : vector<8x128xf32>
    %880 = tpu.matmul %878, %879, %cst_266 {dimension_numbers = #tpu.dot_dimension_numbers<[1], [0], [0], [1], [0, 0, 1, 1], [], []>} : vector<8x64xf32>, vector<64x128xf32>, vector<8x128xf32> -> vector<8x128xf32>
    %c0_267 = arith.constant 0 : index
    %c0_268 = arith.constant 0 : index
    %881 = vector.load %arg6[%c0_267, %c0_268] : memref<1x128xf32, #tpu.memory_space<vmem>>, vector<1x128xf32>
    %882 = vector.broadcast %881 : vector<1x128xf32> to vector<8x128xf32>
    %883 = arith.addf %880, %882 : vector<8x128xf32>
    %c0_269 = arith.constant 0 : index
    %c0_270 = arith.constant 0 : index
    %884 = vector.load %arg7[%c0_269, %c0_270] : memref<8x128xf32, #tpu.memory_space<vmem>>, vector<8x128xf32>
    tpu.vector_store %arg7[%c0_269, %c0_270], %883 {strides = array<i32>} : memref<8x128xf32, #tpu.memory_space<vmem>>, vector<8x128xf32>,
    return
  }
  func.func @transform_0(%arg0: i32) -> (i32, i32, i32) {
    %c0_i32 = arith.constant 0 : i32
    %c0_i32_0 = arith.constant 0 : i32
    %c0_i32_1 = arith.constant 0 : i32
    return %arg0, %c0_i32, %c0_i32_0 : i32, i32, i32
  }
  func.func @transform_1(%arg0: i32) -> (i32, i32) {
    %c0_i32 = arith.constant 0 : i32
    %c0_i32_0 = arith.constant 0 : i32
    %c0_i32_1 = arith.constant 0 : i32
    return %c0_i32, %c0_i32_0 : i32, i32
  }
  func.func @transform_2(%arg0: i32) -> (i32, i32) {
    %c0_i32 = arith.constant 0 : i32
    %c0_i32_0 = arith.constant 0 : i32
    %c0_i32_1 = arith.constant 0 : i32
    return %c0_i32, %c0_i32_0 : i32, i32
  }
  func.func @transform_3(%arg0: i32) -> (i32, i32) {
    %c0_i32 = arith.constant 0 : i32
    %c0_i32_0 = arith.constant 0 : i32
    %c0_i32_1 = arith.constant 0 : i32
    return %c0_i32, %c0_i32_0 : i32, i32
  }
  func.func @transform_4(%arg0: i32) -> (i32, i32) {
    %c0_i32 = arith.constant 0 : i32
    %c0_i32_0 = arith.constant 0 : i32
    %c0_i32_1 = arith.constant 0 : i32
    return %c0_i32, %c0_i32_0 : i32, i32
  }
  func.func @transform_5(%arg0: i32) -> (i32, i32) {
    %c0_i32 = arith.constant 0 : i32
    %c0_i32_0 = arith.constant 0 : i32
    %c0_i32_1 = arith.constant 0 : i32
    return %c0_i32, %c0_i32_0 : i32, i32
  }
  func.func @transform_6(%arg0: i32) -> (i32, i32) {
    %c0_i32 = arith.constant 0 : i32
    %c0_i32_0 = arith.constant 0 : i32
    return %arg0, %c0_i32 : i32, i32
  }
}

</mosaic_0001>

<llo_original>
// kernel: rnn_forward.1
$region0: #{rnn_forward.1}
  #allocation0 [shape = 'u32[]', space=smem, size = 0x4, offset = 0x4, fixed_abs, tag = 'smem constant byte address 0x4 - core index']
  #allocation1 [shape = 'u32[144,128]{1,0:T(1,128)}', space=vmem, size = 0x12000, scoped, tag = 'internal scratch']
  #allocation2 [shape = 'f32[224,256]{1,0:T(8,128)}', space=vmem, size = 0x38000, scoped, tag = 'scratch operand']
  %s0 = inlined_call_operand.vmem [shape: f32[1,224,28], index: 0, kind: input, shape index: {}]
  %s1 = inlined_call_operand.hbm [shape: f32[28,256], index: 1, kind: input, shape index: {}]
  %s2 = inlined_call_operand.vmem [shape: f32[64,256], index: 2, kind: input, shape index: {}]
  %s3 = inlined_call_operand.vmem [shape: f32[1,256], index: 3, kind: input, shape index: {}]
  %s4 = inlined_call_operand.vmem [shape: f32[64,128], index: 4, kind: input, shape index: {}]
  %s5 = inlined_call_operand.vmem [shape: f32[1,128], index: 5, kind: input, shape index: {}]
  %s6 = inlined_call_operand.hbm [shape: f32[8,128], index: 6, kind: output, shape index: {}]
  %s7 = sld [smem:[#allocation0]]
  $region38: #{rnn_forward.1} parent=0
    _
  %s9 = ssub.s32 1, %s7
  %s10 = scalar_select 0, %s9, %s7
  $region1: #{rnn_forward.1} parent=0
    #allocation3 [shape = 'u8[32768]{0}', space=vmem, size = 0x8000, scoped, tag = 'input window, operand 1, single buffered']
    #allocation4 [shape = 's32[1]{0}', space=sflag, size = 0x4, scoped, tag = 'scoped memory for rnn_forward.1']
    #allocation5 [shape = 's32[1]{0}', space=sflag, size = 0x4, scoped, tag = 'scoped memory for rnn_forward.1']
    #allocation6 [shape = 'u8[4096]{0}', space=vmem, size = 0x1000, scoped, tag = 'output window, operand 0, single buffered']
    %11 = vsyncpa [#allocation4], 0
    %12 = vsyncpa [#allocation5], 0
    // Predicated region
    $region2: #{rnn_forward.1} parent=1 // pred_check
      _
    $region3: #{rnn_forward.1} parent=1 // pred_check_branch
      %14 = sbr.rel (0) target = $region5
    $region4: #{rnn_forward.1} parent=1 // pred_region
      _
    $region5: #{rnn_forward.1} parent=1 // pred_fallthru
      _
    // Predicated region
    $region6: #{rnn_forward.1} parent=1 // pred_check
      _
    $region7: #{rnn_forward.1} parent=1 // pred_check_branch
      %16 = sbr.rel (0) target = $region9
    $region8: #{rnn_forward.1} parent=1 // pred_region
      %s18 = ssub.s32 1024, 1024
      %19 = vsyncadd [#allocation4], %s18
      %s20 = sshll.u32 [#allocation3], 4
      %s21 = int_to_ptr.vmem [resolvable:$true] %s20
      %26 = dma.hbm_to_vmem [thread:$0]  %s1, 1024, %s21, [#allocation4], 256, 256, 16
    $region9: #{rnn_forward.1} parent=1 // pred_fallthru
      _
    // Predicated region
    $region10: #{rnn_forward.1} parent=1 // pred_check
      _
    $region11: #{rnn_forward.1} parent=1 // pred_check_branch
      %28 = sbr.rel (0) target = $region13
    $region12: #{rnn_forward.1} parent=1 // pred_region
      _
    $region13: #{rnn_forward.1} parent=1 // pred_fallthru
      _
    // Predicated region
    $region14: #{rnn_forward.1} parent=1 // pred_check
      _
    $region15: #{rnn_forward.1} parent=1 // pred_check_branch
      %30 = sbr.rel (0) target = $region17
    $region16: #{rnn_forward.1} parent=1 // pred_region
      _
    $region17: #{rnn_forward.1} parent=1 // pred_fallthru
      _
    // Predicated region
    $region18: #{rnn_forward.1} parent=1 // pred_check
      _
    $region19: #{rnn_forward.1} parent=1 // pred_check_branch
      %32 = sbr.rel (0) target = $region21
    $region20: #{rnn_forward.1} parent=1 // pred_region
      _
    $region21: #{rnn_forward.1} parent=1 // pred_fallthru
      _
    // Predicated region
    $region22: #{rnn_forward.1} parent=1 // pred_check
      _
    $region23: #{rnn_forward.1} parent=1 // pred_check_branch
      %34 = sbr.rel (0) target = $region25
    $region24: #{rnn_forward.1} parent=1 // pred_region
      _
    $region25: #{rnn_forward.1} parent=1 // pred_fallthru
      _
    // Predicated region
    $region26: #{rnn_forward.1} parent=1 // pred_check
      _
    $region27: #{rnn_forward.1} parent=1 // pred_check_branch
      %36 = sbr.rel (0) target = $region29
    $region28: #{rnn_forward.1} parent=1 // pred_region
      %37 = dma.done [#allocation4], 1024
    $region29: #{rnn_forward.1} parent=1 // pred_fallthru
      _
    %v38 = vld [vmem:[%s0] sm:$0xff]
    %v39 = vld [vmem:[%s0 + $0x8] sm:$0xff]
    %v40 = vld [vmem:[%s0 + $0x10] sm:$0xff]
    %v41 = vld [vmem:[%s0 + $0x18] sm:$0xff]
    %v42 = vld [vmem:[%s0 + $0x20] sm:$0xff]
    %v43 = vld [vmem:[%s0 + $0x28] sm:$0xff]
    %v44 = vld [vmem:[%s0 + $0x30] sm:$0xff]
    %v45 = vld [vmem:[%s0 + $0x38] sm:$0xff]
    %v46 = vld [vmem:[%s0 + $0x40] sm:$0xff]
    %v47 = vld [vmem:[%s0 + $0x48] sm:$0xff]
    %v48 = vld [vmem:[%s0 + $0x50] sm:$0xff]
    %v49 = vld [vmem:[%s0 + $0x58] sm:$0xff]
    %v50 = vld [vmem:[%s0 + $0x60] sm:$0xff]
    %v51 = vld [vmem:[%s0 + $0x68] sm:$0xff]
    %v52 = vld [vmem:[%s0 + $0x70] sm:$0xff]
    %v53 = vld [vmem:[%s0 + $0x78] sm:$0xff]
    %v54 = vld [vmem:[%s0 + $0x80] sm:$0xff]
    %v55 = vld [vmem:[%s0 + $0x88] sm:$0xff]
    %v56 = vld [vmem:[%s0 + $0x90] sm:$0xff]
    %v57 = vld [vmem:[%s0 + $0x98] sm:$0xff]
    %v58 = vld [vmem:[%s0 + $0xa0] sm:$0xff]
    %v59 = vld [vmem:[%s0 + $0xa8] sm:$0xff]
    %v60 = vld [vmem:[%s0 + $0xb0] sm:$0xff]
    %v61 = vld [vmem:[%s0 + $0xb8] sm:$0xff]
    %v62 = vld [vmem:[%s0 + $0xc0] sm:$0xff]
    %v63 = vld [vmem:[%s0 + $0xc8] sm:$0xff]
    %v64 = vld [vmem:[%s0 + $0xd0] sm:$0xff]
    %v65 = vld [vmem:[%s0 + $0xd8] sm:$0xff]
    %v66 = vld [vmem:[#allocation3] sm:$0xff]
    %v67 = vld [vmem:[#allocation3 + $0x8] sm:$0xff]
    %v68 = vld [vmem:[#allocation3 + $0x10] sm:$0xff]
    %v69 = vld [vmem:[#allocation3 + $0x18] sm:$0xff]
    %v70 = vld [vmem:[#allocation3 + $0x20] sm:$0xff]
    %v71 = vld [vmem:[#allocation3 + $0x28] sm:$0xff]
    %v72 = vld [vmem:[#allocation3 + $0x30] sm:$0xf]
    %v73 = vld [vmem:[#allocation3 + $0x38] sm:$0xf]
    %v74 = vld [vmem:[%s3] sm:$0x3]
    %v76 = vlaneseq
    %v77 = vshrl.u32 %v76, 7
    %v78 = vsub.s32 0, %v77
    %v79 = vrot.slane %v74, %v78
    %v80 = vlaneseq
    %v81 = vshrl.u32 %v80, 7
    %v82 = vsub.s32 1, %v81
    %v83 = vrot.slane %v74, %v82
    %vm86 = vcmask 228352
    %v88 = vsel %vm86, %v38, 0
    %v91 = vsel %vm86, %v39, 0
    %v94 = vsel %vm86, %v40, 0
    %v97 = vsel %vm86, %v41, 0
    %v100 = vsel %vm86, %v42, 0
    %v103 = vsel %vm86, %v43, 0
    %v106 = vsel %vm86, %v44, 0
    %v109 = vsel %vm86, %v45, 0
    %v112 = vsel %vm86, %v46, 0
    %v115 = vsel %vm86, %v47, 0
    %v118 = vsel %vm86, %v48, 0
    %v121 = vsel %vm86, %v49, 0
    %v124 = vsel %vm86, %v50, 0
    %v127 = vsel %vm86, %v51, 0
    %v130 = vsel %vm86, %v52, 0
    %v133 = vsel %vm86, %v53, 0
    %v136 = vsel %vm86, %v54, 0
    %v139 = vsel %vm86, %v55, 0
    %v142 = vsel %vm86, %v56, 0
    %v145 = vsel %vm86, %v57, 0
    %v148 = vsel %vm86, %v58, 0
    %v151 = vsel %vm86, %v59, 0
    %v154 = vsel %vm86, %v60, 0
    %v157 = vsel %vm86, %v61, 0
    %v160 = vsel %vm86, %v62, 0
    %v163 = vsel %vm86, %v63, 0
    %v166 = vsel %vm86, %v64, 0
    %v169 = vsel %vm86, %v65, 0
    %vm171 = vcmask 1043456
    %v173 = vsel %vm171, %v72, 0
    %v176 = vsel %vm171, %v73, 0
    %178 = vmatprep.subr.mxu0 %v67
    %179 = vmatpush1.msra.mxu0 %v66
    %180 = vmatprep.subr.mxu0 %v69
    %181 = vmatpush1.msra.mxu0 %v68
    %182 = vmatprep.subr.mxu0 %v71
    %183 = vmatpush1.msra.mxu0 %v70
    %184 = vmatprep.subr.mxu0 %v176
    %185 = vmatpush1.msra.mxu0 %v173
    %186 = vmatprep.subr.mxu0 0.0
    %187 = vmatpush1.msra.mxu0 0.0
    %188 = vmatprep.subr.mxu0 0.0
    %189 = vmatpush1.msra.mxu0 0.0
    %190 = vmatprep.subr.mxu0 0.0
    %191 = vmatpush1.msra.mxu0 0.0
    %192 = vmatprep.subr.mxu0 0.0
    %193 = vmatpush1.msra.mxu0 0.0
    %194 = vmatprep.subr.mxu0 0.0
    %195 = vmatpush1.msra.mxu0 0.0
    %196 = vmatprep.subr.mxu0 0.0
    %197 = vmatpush1.msra.mxu0 0.0
    %198 = vmatprep.subr.mxu0 0.0
    %199 = vmatpush1.msra.mxu0 0.0
    %200 = vmatprep.subr.mxu0 0.0
    %201 = vmatpush1.msra.mxu0 0.0
    %202 = vmatprep.subr.mxu0 0.0
    %203 = vmatpush1.msra.mxu0 0.0
    %204 = vmatprep.subr.mxu0 0.0
    %205 = vmatpush1.msra.mxu0 0.0
    %206 = vmatprep.subr.mxu0 0.0
    %207 = vmatpush1.msra.mxu0 0.0
    %208 = vmatprep.subr.mxu0 0.0
    %209 = vmatpush1.msra.mxu0 0.0
    %210 = vmatprep.subr.mxu0 0.0
    %211 = vmatpush1.msra.mxu0 0.0
    %212 = vmatprep.subr.mxu0 0.0
    %213 = vmatpush1.msra.mxu0 0.0
    %214 = vmatprep.subr.mxu0 0.0
    %215 = vmatpush1.msra.mxu0 0.0
    %216 = vmatprep.subr.mxu0 0.0
    %217 = vmatpush1.msra.mxu0 0.0
    %218 = vmatprep.subr.mxu0 0.0
    %219 = vmatpush1.msra.mxu0 0.0
    %220 = vmatprep.subr.mxu0 0.0
    %221 = vmatpush1.msra.mxu0 0.0
    %222 = vmatprep.subr.mxu0 0.0
    %223 = vmatpush1.msra.mxu0 0.0
    %224 = vmatprep.subr.mxu0 0.0
    %225 = vmatpush1.msra.mxu0 0.0
    %226 = vmatprep.subr.mxu0 0.0
    %227 = vmatpush1.msra.mxu0 0.0
    %228 = vmatprep.subr.mxu0 0.0
    %229 = vmatpush1.msra.mxu0 0.0
    %230 = vmatprep.subr.mxu0 0.0
    %231 = vmatpush1.msra.mxu0 0.0
    %232 = vmatprep.subr.mxu0 0.0
    %233 = vmatpush1.msra.mxu0 0.0
    %234 = vmatprep.subr.mxu0 0.0
    %235 = vmatpush1.msra.mxu0 0.0
    %236 = vmatprep.subr.mxu0 0.0
    %237 = vmatpush1.msra.mxu0 0.0
    %238 = vmatprep.subr.mxu0 0.0
    %239 = vmatpush1.msra.mxu0 0.0
    %240 = vmatprep.subr.mxu0 0.0
    %241 = vmatpush1.msra.mxu0 0.0
    %242 = vmatprep.mubr.f32.mxu0 0.0
    %243 = vmatmul.mubr.f32.gmra.mrb[0].mxu0 %v88
    %v244 = vpop.f32.mrb[0].mxu0
    %v245 = vadd.f32 %v79, %v244
    %v246 = vpop.f32.mrb[0].mxu0
    %v247 = vadd.f32 %v83, %v246
    %248 = vmatprep.mubr.f32.mxu0 0.0
    %249 = vmatmul.mubr.f32.gmra.mrb[0].mxu0 %v91
    %v250 = vpop.f32.mrb[0].mxu0
    %v251 = vadd.f32 %v79, %v250
    %v252 = vpop.f32.mrb[0].mxu0
    %v253 = vadd.f32 %v83, %v252
    %254 = vmatprep.mubr.f32.mxu0 0.0
    %255 = vmatmul.mubr.f32.gmra.mrb[0].mxu0 %v94
    %v256 = vpop.f32.mrb[0].mxu0
    %v257 = vadd.f32 %v79, %v256
    %v258 = vpop.f32.mrb[0].mxu0
    %v259 = vadd.f32 %v83, %v258
    %260 = vmatprep.mubr.f32.mxu0 0.0
    %261 = vmatmul.mubr.f32.gmra.mrb[0].mxu0 %v97
    %v262 = vpop.f32.mrb[0].mxu0
    %v263 = vadd.f32 %v79, %v262
    %v264 = vpop.f32.mrb[0].mxu0
    %v265 = vadd.f32 %v83, %v264
    %266 = vmatprep.mubr.f32.mxu0 0.0
    %267 = vmatmul.mubr.f32.gmra.mrb[0].mxu0 %v100
    %v268 = vpop.f32.mrb[0].mxu0
    %v269 = vadd.f32 %v79, %v268
    %v270 = vpop.f32.mrb[0].mxu0
    %v271 = vadd.f32 %v83, %v270
    %272 = vmatprep.mubr.f32.mxu0 0.0
    %273 = vmatmul.mubr.f32.gmra.mrb[0].mxu0 %v103
    %v274 = vpop.f32.mrb[0].mxu0
    %v275 = vadd.f32 %v79, %v274
    %v276 = vpop.f32.mrb[0].mxu0
    %v277 = vadd.f32 %v83, %v276
    %278 = vmatprep.mubr.f32.mxu0 0.0
    %279 = vmatmul.mubr.f32.gmra.mrb[0].mxu0 %v106
    %v280 = vpop.f32.mrb[0].mxu0
    %v281 = vadd.f32 %v79, %v280
    %v282 = vpop.f32.mrb[0].mxu0
    %v283 = vadd.f32 %v83, %v282
    %284 = vmatprep.mubr.f32.mxu0 0.0
    %285 = vmatmul.mubr.f32.gmra.mrb[0].mxu0 %v109
    %v286 = vpop.f32.mrb[0].mxu0
    %v287 = vadd.f32 %v79, %v286
    %v288 = vpop.f32.mrb[0].mxu0
    %v289 = vadd.f32 %v83, %v288
    %290 = vmatprep.mubr.f32.mxu0 0.0
    %291 = vmatmul.mubr.f32.gmra.mrb[0].mxu0 %v112
    %v292 = vpop.f32.mrb[0].mxu0
    %v293 = vadd.f32 %v79, %v292
    %v294 = vpop.f32.mrb[0].mxu0
    %v295 = vadd.f32 %v83, %v294
    %296 = vmatprep.mubr.f32.mxu0 0.0
    %297 = vmatmul.mubr.f32.gmra.mrb[0].mxu0 %v115
    %v298 = vpop.f32.mrb[0].mxu0
    %v299 = vadd.f32 %v79, %v298
    %v300 = vpop.f32.mrb[0].mxu0
    %v301 = vadd.f32 %v83, %v300
    %302 = vmatprep.mubr.f32.mxu0 0.0
    %303 = vmatmul.mubr.f32.gmra.mrb[0].mxu0 %v118
    %v304 = vpop.f32.mrb[0].mxu0
    %v305 = vadd.f32 %v79, %v304
    %v306 = vpop.f32.mrb[0].mxu0
    %v307 = vadd.f32 %v83, %v306
    %308 = vmatprep.mubr.f32.mxu0 0.0
    %309 = vmatmul.mubr.f32.gmra.mrb[0].mxu0 %v121
    %v310 = vpop.f32.mrb[0].mxu0
    %v311 = vadd.f32 %v79, %v310
    %v312 = vpop.f32.mrb[0].mxu0
    %v313 = vadd.f32 %v83, %v312
    %314 = vmatprep.mubr.f32.mxu0 0.0
    %315 = vmatmul.mubr.f32.gmra.mrb[0].mxu0 %v124
    %v316 = vpop.f32.mrb[0].mxu0
    %v317 = vadd.f32 %v79, %v316
    %v318 = vpop.f32.mrb[0].mxu0
    %v319 = vadd.f32 %v83, %v318
    %320 = vmatprep.mubr.f32.mxu0 0.0
    %321 = vmatmul.mubr.f32.gmra.mrb[0].mxu0 %v127
    %v322 = vpop.f32.mrb[0].mxu0
    %v323 = vadd.f32 %v79, %v322
    %v324 = vpop.f32.mrb[0].mxu0
    %v325 = vadd.f32 %v83, %v324
    %326 = vmatprep.mubr.f32.mxu0 0.0
    %327 = vmatmul.mubr.f32.gmra.mrb[0].mxu0 %v130
    %v328 = vpop.f32.mrb[0].mxu0
    %v329 = vadd.f32 %v79, %v328
    %v330 = vpop.f32.mrb[0].mxu0
    %v331 = vadd.f32 %v83, %v330
    %332 = vmatprep.mubr.f32.mxu0 0.0
    %333 = vmatmul.mubr.f32.gmra.mrb[0].mxu0 %v133
    %v334 = vpop.f32.mrb[0].mxu0
    %v335 = vadd.f32 %v79, %v334
    %v336 = vpop.f32.mrb[0].mxu0
    %v337 = vadd.f32 %v83, %v336
    %338 = vmatprep.mubr.f32.mxu0 0.0
    %339 = vmatmul.mubr.f32.gmra.mrb[0].mxu0 %v136
    %v340 = vpop.f32.mrb[0].mxu0
    %v341 = vadd.f32 %v79, %v340
    %v342 = vpop.f32.mrb[0].mxu0
    %v343 = vadd.f32 %v83, %v342
    %344 = vmatprep.mubr.f32.mxu0 0.0
    %345 = vmatmul.mubr.f32.gmra.mrb[0].mxu0 %v139
    %v346 = vpop.f32.mrb[0].mxu0
    %v347 = vadd.f32 %v79, %v346
    %v348 = vpop.f32.mrb[0].mxu0
    %v349 = vadd.f32 %v83, %v348
    %350 = vmatprep.mubr.f32.mxu0 0.0
    %351 = vmatmul.mubr.f32.gmra.mrb[0].mxu0 %v142
    %v352 = vpop.f32.mrb[0].mxu0
    %v353 = vadd.f32 %v79, %v352
    %v354 = vpop.f32.mrb[0].mxu0
    %v355 = vadd.f32 %v83, %v354
    %356 = vmatprep.mubr.f32.mxu0 0.0
    %357 = vmatmul.mubr.f32.gmra.mrb[0].mxu0 %v145
    %v358 = vpop.f32.mrb[0].mxu0
    %v359 = vadd.f32 %v79, %v358
    %v360 = vpop.f32.mrb[0].mxu0
    %v361 = vadd.f32 %v83, %v360
    %362 = vmatprep.mubr.f32.mxu0 0.0
    %363 = vmatmul.mubr.f32.gmra.mrb[0].mxu0 %v148
    %v364 = vpop.f32.mrb[0].mxu0
    %v365 = vadd.f32 %v79, %v364
    %v366 = vpop.f32.mrb[0].mxu0
    %v367 = vadd.f32 %v83, %v366
    %368 = vmatprep.mubr.f32.mxu0 0.0
    %369 = vmatmul.mubr.f32.gmra.mrb[0].mxu0 %v151
    %v370 = vpop.f32.mrb[0].mxu0
    %v371 = vadd.f32 %v79, %v370
    %v372 = vpop.f32.mrb[0].mxu0
    %v373 = vadd.f32 %v83, %v372
    %374 = vmatprep.mubr.f32.mxu0 0.0
    %375 = vmatmul.mubr.f32.gmra.mrb[0].mxu0 %v154
    %v376 = vpop.f32.mrb[0].mxu0
    %v377 = vadd.f32 %v79, %v376
    %v378 = vpop.f32.mrb[0].mxu0
    %v379 = vadd.f32 %v83, %v378
    %380 = vmatprep.mubr.f32.mxu0 0.0
    %381 = vmatmul.mubr.f32.gmra.mrb[0].mxu0 %v157
    %v382 = vpop.f32.mrb[0].mxu0
    %v383 = vadd.f32 %v79, %v382
    %v384 = vpop.f32.mrb[0].mxu0
    %v385 = vadd.f32 %v83, %v384
    %386 = vmatprep.mubr.f32.mxu0 0.0
    %387 = vmatmul.mubr.f32.gmra.mrb[0].mxu0 %v160
    %v388 = vpop.f32.mrb[0].mxu0
    %v389 = vadd.f32 %v79, %v388
    %v390 = vpop.f32.mrb[0].mxu0
    %v391 = vadd.f32 %v83, %v390
    %392 = vmatprep.mubr.f32.mxu0 0.0
    %393 = vmatmul.mubr.f32.gmra.mrb[0].mxu0 %v163
    %v394 = vpop.f32.mrb[0].mxu0
    %v395 = vadd.f32 %v79, %v394
    %v396 = vpop.f32.mrb[0].mxu0
    %v397 = vadd.f32 %v83, %v396
    %398 = vmatprep.mubr.f32.mxu0 0.0
    %399 = vmatmul.mubr.f32.gmra.mrb[0].mxu0 %v166
    %v400 = vpop.f32.mrb[0].mxu0
    %v401 = vadd.f32 %v79, %v400
    %v402 = vpop.f32.mrb[0].mxu0
    %v403 = vadd.f32 %v83, %v402
    %404 = vmatprep.mubr.f32.mxu0 0.0
    %405 = vmatmul.mubr.f32.gmra.mrb[0].mxu0 %v169
    %v406 = vpop.f32.mrb[0].mxu0
    %v407 = vadd.f32 %v79, %v406
    %v408 = vpop.f32.mrb[0].mxu0
    %v409 = vadd.f32 %v83, %v408
    %410 = vdwg.mxu0
    %411 = vst [vmem:[#allocation2] sm:$0xff] %v245
    %412 = vst [vmem:[#allocation2 + $0x8] sm:$0xff] %v247
    %413 = vst [vmem:[#allocation2 + $0x10] sm:$0xff] %v251
    %414 = vst [vmem:[#allocation2 + $0x18] sm:$0xff] %v253
    %415 = vst [vmem:[#allocation2 + $0x20] sm:$0xff] %v257
    %416 = vst [vmem:[#allocation2 + $0x28] sm:$0xff] %v259
    %417 = vst [vmem:[#allocation2 + $0x30] sm:$0xff] %v263
    %418 = vst [vmem:[#allocation2 + $0x38] sm:$0xff] %v265
    %419 = vst [vmem:[#allocation2 + $0x40] sm:$0xff] %v269
    %420 = vst [vmem:[#allocation2 + $0x48] sm:$0xff] %v271
    %421 = vst [vmem:[#allocation2 + $0x50] sm:$0xff] %v275
    %422 = vst [vmem:[#allocation2 + $0x58] sm:$0xff] %v277
    %423 = vst [vmem:[#allocation2 + $0x60] sm:$0xff] %v281
    %424 = vst [vmem:[#allocation2 + $0x68] sm:$0xff] %v283
    %425 = vst [vmem:[#allocation2 + $0x70] sm:$0xff] %v287
    %426 = vst [vmem:[#allocation2 + $0x78] sm:$0xff] %v289
    %427 = vst [vmem:[#allocation2 + $0x80] sm:$0xff] %v293
    %428 = vst [vmem:[#allocation2 + $0x88] sm:$0xff] %v295
    %429 = vst [vmem:[#allocation2 + $0x90] sm:$0xff] %v299
    %430 = vst [vmem:[#allocation2 + $0x98] sm:$0xff] %v301
    %431 = vst [vmem:[#allocation2 + $0xa0] sm:$0xff] %v305
    %432 = vst [vmem:[#allocation2 + $0xa8] sm:$0xff] %v307
    %433 = vst [vmem:[#allocation2 + $0xb0] sm:$0xff] %v311
    %434 = vst [vmem:[#allocation2 + $0xb8] sm:$0xff] %v313
    %435 = vst [vmem:[#allocation2 + $0xc0] sm:$0xff] %v317
    %436 = vst [vmem:[#allocation2 + $0xc8] sm:$0xff] %v319
    %437 = vst [vmem:[#allocation2 + $0xd0] sm:$0xff] %v323
    %438 = vst [vmem:[#allocation2 + $0xd8] sm:$0xff] %v325
    %439 = vst [vmem:[#allocation2 + $0xe0] sm:$0xff] %v329
    %440 = vst [vmem:[#allocation2 + $0xe8] sm:$0xff] %v331
    %441 = vst [vmem:[#allocation2 + $0xf0] sm:$0xff] %v335
    %442 = vst [vmem:[#allocation2 + $0xf8] sm:$0xff] %v337
    %443 = vst [vmem:[#allocation2 + $0x100] sm:$0xff] %v341
    %444 = vst [vmem:[#allocation2 + $0x108] sm:$0xff] %v343
    %445 = vst [vmem:[#allocation2 + $0x110] sm:$0xff] %v347
    %446 = vst [vmem:[#allocation2 + $0x118] sm:$0xff] %v349
    %447 = vst [vmem:[#allocation2 + $0x120] sm:$0xff] %v353
    %448 = vst [vmem:[#allocation2 + $0x128] sm:$0xff] %v355
    %449 = vst [vmem:[#allocation2 + $0x130] sm:$0xff] %v359
    %450 = vst [vmem:[#allocation2 + $0x138] sm:$0xff] %v361
    %451 = vst [vmem:[#allocation2 + $0x140] sm:$0xff] %v365
    %452 = vst [vmem:[#allocation2 + $0x148] sm:$0xff] %v367
    %453 = vst [vmem:[#allocation2 + $0x150] sm:$0xff] %v371
    %454 = vst [vmem:[#allocation2 + $0x158] sm:$0xff] %v373
    %455 = vst [vmem:[#allocation2 + $0x160] sm:$0xff] %v377
    %456 = vst [vmem:[#allocation2 + $0x168] sm:$0xff] %v379
    %457 = vst [vmem:[#allocation2 + $0x170] sm:$0xff] %v383
    %458 = vst [vmem:[#allocation2 + $0x178] sm:$0xff] %v385
    %459 = vst [vmem:[#allocation2 + $0x180] sm:$0xff] %v389
    %460 = vst [vmem:[#allocation2 + $0x188] sm:$0xff] %v391
    %461 = vst [vmem:[#allocation2 + $0x190] sm:$0xff] %v395
    %462 = vst [vmem:[#allocation2 + $0x198] sm:$0xff] %v397
    %463 = vst [vmem:[#allocation2 + $0x1a0] sm:$0xff] %v401
    %464 = vst [vmem:[#allocation2 + $0x1a8] sm:$0xff] %v403
    %465 = vst [vmem:[#allocation2 + $0x1b0] sm:$0xff] %v407
    %466 = vst [vmem:[#allocation2 + $0x1b8] sm:$0xff] %v409
    %v467 = vld [vmem:[%s2] sm:$0xff]
    %v468 = vld [vmem:[%s2 + $0x8] sm:$0xff]
    %v469 = vld [vmem:[%s2 + $0x10] sm:$0xff]
    %v470 = vld [vmem:[%s2 + $0x18] sm:$0xff]
    %v471 = vld [vmem:[%s2 + $0x20] sm:$0xff]
    %v472 = vld [vmem:[%s2 + $0x28] sm:$0xff]
    %v473 = vld [vmem:[%s2 + $0x30] sm:$0xff]
    %v474 = vld [vmem:[%s2 + $0x38] sm:$0xff]
    %v475 = vld [vmem:[%s2 + $0x40] sm:$0xff]
    %v476 = vld [vmem:[%s2 + $0x48] sm:$0xff]
    %v477 = vld [vmem:[%s2 + $0x50] sm:$0xff]
    %v478 = vld [vmem:[%s2 + $0x58] sm:$0xff]
    %v479 = vld [vmem:[%s2 + $0x60] sm:$0xff]
    %v480 = vld [vmem:[%s2 + $0x68] sm:$0xff]
    %v481 = vld [vmem:[%s2 + $0x70] sm:$0xff]
    %v482 = vld [vmem:[%s2 + $0x78] sm:$0xff]
    %s483 = smul.u32 0, 2
    %s484 = smul.addr %s483, 8
    %s485 = scalar_lea.vmem [#allocation2], %s484
    %v486 = vld [vmem:[%s485] sm:$0xff]
    %v487 = vld [vmem:[%s485 + $0x8] sm:$0xff]
    %vm488 = vcmask 523264
    %v490 = vsel %vm488, 0.0, 0
    %492 = vmatprep.subr.mxu0 %v468
    %493 = vmatpush1.msra.mxu0 %v467
    %494 = vmatprep.subr.mxu0 %v470
    %495 = vmatpush1.msra.mxu0 %v469
    %496 = vmatprep.subr.mxu0 %v472
    %497 = vmatpush1.msra.mxu0 %v471
    %498 = vmatprep.subr.mxu0 %v474
    %499 = vmatpush1.msra.mxu0 %v473
    %500 = vmatprep.subr.mxu0 %v476
    %501 = vmatpush1.msra.mxu0 %v475
    %502 = vmatprep.subr.mxu0 %v478
    %503 = vmatpush1.msra.mxu0 %v477
    %504 = vmatprep.subr.mxu0 %v480
    %505 = vmatpush1.msra.mxu0 %v479
    %506 = vmatprep.subr.mxu0 %v482
    %507 = vmatpush1.msra.mxu0 %v481
    %508 = vmatprep.subr.mxu0 0.0
    %509 = vmatpush1.msra.mxu0 0.0
    %510 = vmatprep.subr.mxu0 0.0
    %511 = vmatpush1.msra.mxu0 0.0
    %512 = vmatprep.subr.mxu0 0.0
    %513 = vmatpush1.msra.mxu0 0.0
    %514 = vmatprep.subr.mxu0 0.0
    %515 = vmatpush1.msra.mxu0 0.0
    %516 = vmatprep.subr.mxu0 0.0
    %517 = vmatpush1.msra.mxu0 0.0
    %518 = vmatprep.subr.mxu0 0.0
    %519 = vmatpush1.msra.mxu0 0.0
    %520 = vmatprep.subr.mxu0 0.0
    %521 = vmatpush1.msra.mxu0 0.0
    %522 = vmatprep.subr.mxu0 0.0
    %523 = vmatpush1.msra.mxu0 0.0
    %524 = vmatprep.subr.mxu0 0.0
    %525 = vmatpush1.msra.mxu0 0.0
    %526 = vmatprep.subr.mxu0 0.0
    %527 = vmatpush1.msra.mxu0 0.0
    %528 = vmatprep.subr.mxu0 0.0
    %529 = vmatpush1.msra.mxu0 0.0
    %530 = vmatprep.subr.mxu0 0.0
    %531 = vmatpush1.msra.mxu0 0.0
    %532 = vmatprep.subr.mxu0 0.0
    %533 = vmatpush1.msra.mxu0 0.0
    %534 = vmatprep.subr.mxu0 0.0
    %535 = vmatpush1.msra.mxu0 0.0
    %536 = vmatprep.subr.mxu0 0.0
    %537 = vmatpush1.msra.mxu0 0.0
    %538 = vmatprep.subr.mxu0 0.0
    %539 = vmatpush1.msra.mxu0 0.0
    %540 = vmatprep.subr.mxu0 0.0
    %541 = vmatpush1.msra.mxu0 0.0
    %542 = vmatprep.subr.mxu0 0.0
    %543 = vmatpush1.msra.mxu0 0.0
    %544 = vmatprep.subr.mxu0 0.0
    %545 = vmatpush1.msra.mxu0 0.0
    %546 = vmatprep.subr.mxu0 0.0
    %547 = vmatpush1.msra.mxu0 0.0
    %548 = vmatprep.subr.mxu0 0.0
    %549 = vmatpush1.msra.mxu0 0.0
    %550 = vmatprep.subr.mxu0 0.0
    %551 = vmatpush1.msra.mxu0 0.0
    %552 = vmatprep.subr.mxu0 0.0
    %553 = vmatpush1.msra.mxu0 0.0
    %554 = vmatprep.subr.mxu0 0.0
    %555 = vmatpush1.msra.mxu0 0.0
    %556 = vmatprep.mubr.f32.mxu0 0.0
    %557 = vmatmul.mubr.f32.gmra.mrb[0].mxu0 %v490
    %v558 = vpop.f32.mrb[0].mxu0
    %v559 = vadd.f32 0.0, %v558
    %v560 = vpop.f32.mrb[0].mxu0
    %v561 = vadd.f32 0.0, %v560
    %562 = vdwg.mxu0
    %v563 = vadd.f32 %v486, %v559
    %v564 = vadd.f32 %v487, %v561
    %v565 = vmul.f32 %v563, 0.5
    %v566 = vtanh.pop %v565
    %v567 = vmul.f32 %v566, 0.5
    %v568 = vadd.f32 %v567, 0.5
    %v569 = vtanh.pop %v564
    %v570 = vmul.f32 %v568, 0.0
    %v571 = vmul.f32 %v568, %v569
    %573 = vrot.lane.b32.xlu0 %v571, 64
    %v574 = vpop.permute.xlu0 %573
    %v576 = vadd.f32 %v570, %v574
    %v577 = vmul.f32 %v564, 0.5
    %v578 = vtanh.pop %v577
    %v579 = vmul.f32 %v578, 0.5
    %v580 = vadd.f32 %v579, 0.5
    %v581 = vtanh.pop %v576
    %v582 = vmul.f32 %v580, %v581
    %s583 = smul.u32 1, 2
    %s584 = smul.addr %s583, 8
    %s585 = scalar_lea.vmem [#allocation2], %s584
    %v586 = vld [vmem:[%s585] sm:$0xff]
    %v587 = vld [vmem:[%s585 + $0x8] sm:$0xff]
    %589 = vrot.lane.b32.xlu0 %v582, 64
    %v590 = vpop.permute.xlu0 %589
    %v591 = vsel %vm488, %v590, 0
    %593 = vmatprep.subr.mxu0 %v468
    %594 = vmatpush1.msra.mxu0 %v467
    %595 = vmatprep.subr.mxu0 %v470
    %596 = vmatpush1.msra.mxu0 %v469
    %597 = vmatprep.subr.mxu0 %v472
    %598 = vmatpush1.msra.mxu0 %v471
    %599 = vmatprep.subr.mxu0 %v474
    %600 = vmatpush1.msra.mxu0 %v473
    %601 = vmatprep.subr.mxu0 %v476
    %602 = vmatpush1.msra.mxu0 %v475
    %603 = vmatprep.subr.mxu0 %v478
    %604 = vmatpush1.msra.mxu0 %v477
    %605 = vmatprep.subr.mxu0 %v480
    %606 = vmatpush1.msra.mxu0 %v479
    %607 = vmatprep.subr.mxu0 %v482
    %608 = vmatpush1.msra.mxu0 %v481
    %609 = vmatprep.subr.mxu0 0.0
    %610 = vmatpush1.msra.mxu0 0.0
    %611 = vmatprep.subr.mxu0 0.0
    %612 = vmatpush1.msra.mxu0 0.0
    %613 = vmatprep.subr.mxu0 0.0
    %614 = vmatpush1.msra.mxu0 0.0
    %615 = vmatprep.subr.mxu0 0.0
    %616 = vmatpush1.msra.mxu0 0.0
    %617 = vmatprep.subr.mxu0 0.0
    %618 = vmatpush1.msra.mxu0 0.0
    %619 = vmatprep.subr.mxu0 0.0
    %620 = vmatpush1.msra.mxu0 0.0
    %621 = vmatprep.subr.mxu0 0.0
    %622 = vmatpush1.msra.mxu0 0.0
    %623 = vmatprep.subr.mxu0 0.0
    %624 = vmatpush1.msra.mxu0 0.0
    %625 = vmatprep.subr.mxu0 0.0
    %626 = vmatpush1.msra.mxu0 0.0
    %627 = vmatprep.subr.mxu0 0.0
    %628 = vmatpush1.msra.mxu0 0.0
    %629 = vmatprep.subr.mxu0 0.0
    %630 = vmatpush1.msra.mxu0 0.0
    %631 = vmatprep.subr.mxu0 0.0
    %632 = vmatpush1.msra.mxu0 0.0
    %633 = vmatprep.subr.mxu0 0.0
    %634 = vmatpush1.msra.mxu0 0.0
    %635 = vmatprep.subr.mxu0 0.0
    %636 = vmatpush1.msra.mxu0 0.0
    %637 = vmatprep.subr.mxu0 0.0
    %638 = vmatpush1.msra.mxu0 0.0
    %639 = vmatprep.subr.mxu0 0.0
    %640 = vmatpush1.msra.mxu0 0.0
    %641 = vmatprep.subr.mxu0 0.0
    %642 = vmatpush1.msra.mxu0 0.0
    %643 = vmatprep.subr.mxu0 0.0
    %644 = vmatpush1.msra.mxu0 0.0
    %645 = vmatprep.subr.mxu0 0.0
    %646 = vmatpush1.msra.mxu0 0.0
    %647 = vmatprep.subr.mxu0 0.0
    %648 = vmatpush1.msra.mxu0 0.0
    %649 = vmatprep.subr.mxu0 0.0
    %650 = vmatpush1.msra.mxu0 0.0
    %651 = vmatprep.subr.mxu0 0.0
    %652 = vmatpush1.msra.mxu0 0.0
    %653 = vmatprep.subr.mxu0 0.0
    %654 = vmatpush1.msra.mxu0 0.0
    %655 = vmatprep.subr.mxu0 0.0
    %656 = vmatpush1.msra.mxu0 0.0
    %657 = vmatprep.mubr.f32.mxu0 0.0
    %658 = vmatmul.mubr.f32.gmra.mrb[0].mxu0 %v591
    %v659 = vpop.f32.mrb[0].mxu0
    %v660 = vadd.f32 0.0, %v659
    %v661 = vpop.f32.mrb[0].mxu0
    %v662 = vadd.f32 0.0, %v661
    %663 = vdwg.mxu0
    %v664 = vadd.f32 %v586, %v660
    %v665 = vadd.f32 %v587, %v662
    %v666 = vmul.f32 %v664, 0.5
    %v667 = vtanh.pop %v666
    %v668 = vmul.f32 %v667, 0.5
    %v669 = vadd.f32 %v668, 0.5
    %v670 = vtanh.pop %v665
    %v671 = vmul.f32 %v669, %v576
    %v672 = vmul.f32 %v669, %v670
    %674 = vrot.lane.b32.xlu0 %v672, 64
    %v675 = vpop.permute.xlu0 %674
    %v677 = vadd.f32 %v671, %v675
    %v678 = vmul.f32 %v665, 0.5
    %v679 = vtanh.pop %v678
    %v680 = vmul.f32 %v679, 0.5
    %v681 = vadd.f32 %v680, 0.5
    %v682 = vtanh.pop %v677
    %v683 = vmul.f32 %v681, %v682
    %s684 = smul.u32 2, 2
    %s685 = smul.addr %s684, 8
    %s686 = scalar_lea.vmem [#allocation2], %s685
    %v687 = vld [vmem:[%s686] sm:$0xff]
    %v688 = vld [vmem:[%s686 + $0x8] sm:$0xff]
    %690 = vrot.lane.b32.xlu0 %v683, 64
    %v691 = vpop.permute.xlu0 %690
    %v692 = vsel %vm488, %v691, 0
    %694 = vmatprep.subr.mxu0 %v468
    %695 = vmatpush1.msra.mxu0 %v467
    %696 = vmatprep.subr.mxu0 %v470
    %697 = vmatpush1.msra.mxu0 %v469
    %698 = vmatprep.subr.mxu0 %v472
    %699 = vmatpush1.msra.mxu0 %v471
    %700 = vmatprep.subr.mxu0 %v474
    %701 = vmatpush1.msra.mxu0 %v473
    %702 = vmatprep.subr.mxu0 %v476
    %703 = vmatpush1.msra.mxu0 %v475
    %704 = vmatprep.subr.mxu0 %v478
    %705 = vmatpush1.msra.mxu0 %v477
    %706 = vmatprep.subr.mxu0 %v480
    %707 = vmatpush1.msra.mxu0 %v479
    %708 = vmatprep.subr.mxu0 %v482
    %709 = vmatpush1.msra.mxu0 %v481
    %710 = vmatprep.subr.mxu0 0.0
    %711 = vmatpush1.msra.mxu0 0.0
    %712 = vmatprep.subr.mxu0 0.0
    %713 = vmatpush1.msra.mxu0 0.0
    %714 = vmatprep.subr.mxu0 0.0
    %715 = vmatpush1.msra.mxu0 0.0
    %716 = vmatprep.subr.mxu0 0.0
    %717 = vmatpush1.msra.mxu0 0.0
    %718 = vmatprep.subr.mxu0 0.0
    %719 = vmatpush1.msra.mxu0 0.0
    %720 = vmatprep.subr.mxu0 0.0
    %721 = vmatpush1.msra.mxu0 0.0
    %722 = vmatprep.subr.mxu0 0.0
    %723 = vmatpush1.msra.mxu0 0.0
    %724 = vmatprep.subr.mxu0 0.0
    %725 = vmatpush1.msra.mxu0 0.0
    %726 = vmatprep.subr.mxu0 0.0
    %727 = vmatpush1.msra.mxu0 0.0
    %728 = vmatprep.subr.mxu0 0.0
    %729 = vmatpush1.msra.mxu0 0.0
    %730 = vmatprep.subr.mxu0 0.0
    %731 = vmatpush1.msra.mxu0 0.0
    %732 = vmatprep.subr.mxu0 0.0
    %733 = vmatpush1.msra.mxu0 0.0
    %734 = vmatprep.subr.mxu0 0.0
    %735 = vmatpush1.msra.mxu0 0.0
    %736 = vmatprep.subr.mxu0 0.0
    %737 = vmatpush1.msra.mxu0 0.0
    %738 = vmatprep.subr.mxu0 0.0
    %739 = vmatpush1.msra.mxu0 0.0
    %740 = vmatprep.subr.mxu0 0.0
    %741 = vmatpush1.msra.mxu0 0.0
    %742 = vmatprep.subr.mxu0 0.0
    %743 = vmatpush1.msra.mxu0 0.0
    %744 = vmatprep.subr.mxu0 0.0
    %745 = vmatpush1.msra.mxu0 0.0
    %746 = vmatprep.subr.mxu0 0.0
    %747 = vmatpush1.msra.mxu0 0.0
    %748 = vmatprep.subr.mxu0 0.0
    %749 = vmatpush1.msra.mxu0 0.0
    %750 = vmatprep.subr.mxu0 0.0
    %751 = vmatpush1.msra.mxu0 0.0
    %752 = vmatprep.subr.mxu0 0.0
    %753 = vmatpush1.msra.mxu0 0.0
    %754 = vmatprep.subr.mxu0 0.0
    %755 = vmatpush1.msra.mxu0 0.0
    %756 = vmatprep.subr.mxu0 0.0
    %757 = vmatpush1.msra.mxu0 0.0
    %758 = vmatprep.mubr.f32.mxu0 0.0
    %759 = vmatmul.mubr.f32.gmra.mrb[0].mxu0 %v692
    %v760 = vpop.f32.mrb[0].mxu0
    %v761 = vadd.f32 0.0, %v760
    %v762 = vpop.f32.mrb[0].mxu0
    %v763 = vadd.f32 0.0, %v762
    %764 = vdwg.mxu0
    %v765 = vadd.f32 %v687, %v761
    %v766 = vadd.f32 %v688, %v763
    %v767 = vmul.f32 %v765, 0.5
    %v768 = vtanh.pop %v767
    %v769 = vmul.f32 %v768, 0.5
    %v770 = vadd.f32 %v769, 0.5
    %v771 = vtanh.pop %v766
    %v772 = vmul.f32 %v770, %v677
    %v773 = vmul.f32 %v770, %v771
    %775 = vrot.lane.b32.xlu0 %v773, 64
    %v776 = vpop.permute.xlu0 %775
    %v778 = vadd.f32 %v772, %v776
    %v779 = vmul.f32 %v766, 0.5
    %v780 = vtanh.pop %v779
    %v781 = vmul.f32 %v780, 0.5
    %v782 = vadd.f32 %v781, 0.5
    %v783 = vtanh.pop %v778
    %v784 = vmul.f32 %v782, %v783
    %s785 = smul.u32 3, 2
    %s786 = smul.addr %s785, 8
    %s787 = scalar_lea.vmem [#allocation2], %s786
    %v788 = vld [vmem:[%s787] sm:$0xff]
    %v789 = vld [vmem:[%s787 + $0x8] sm:$0xff]
    %791 = vrot.lane.b32.xlu0 %v784, 64
    %v792 = vpop.permute.xlu0 %791
    %v793 = vsel %vm488, %v792, 0
    %795 = vmatprep.subr.mxu0 %v468
    %796 = vmatpush1.msra.mxu0 %v467
    %797 = vmatprep.subr.mxu0 %v470
    %798 = vmatpush1.msra.mxu0 %v469
    %799 = vmatprep.subr.mxu0 %v472
    %800 = vmatpush1.msra.mxu0 %v471
    %801 = vmatprep.subr.mxu0 %v474
    %802 = vmatpush1.msra.mxu0 %v473
    %803 = vmatprep.subr.mxu0 %v476
    %804 = vmatpush1.msra.mxu0 %v475
    %805 = vmatprep.subr.mxu0 %v478
    %806 = vmatpush1.msra.mxu0 %v477
    %807 = vmatprep.subr.mxu0 %v480
    %808 = vmatpush1.msra.mxu0 %v479
    %809 = vmatprep.subr.mxu0 %v482
    %810 = vmatpush1.msra.mxu0 %v481
    %811 = vmatprep.subr.mxu0 0.0
    %812 = vmatpush1.msra.mxu0 0.0
    %813 = vmatprep.subr.mxu0 0.0
    %814 = vmatpush1.msra.mxu0 0.0
    %815 = vmatprep.subr.mxu0 0.0
    %816 = vmatpush1.msra.mxu0 0.0
    %817 = vmatprep.subr.mxu0 0.0
    %818 = vmatpush1.msra.mxu0 0.0
    %819 = vmatprep.subr.mxu0 0.0
    %820 = vmatpush1.msra.mxu0 0.0
    %821 = vmatprep.subr.mxu0 0.0
    %822 = vmatpush1.msra.mxu0 0.0
    %823 = vmatprep.subr.mxu0 0.0
    %824 = vmatpush1.msra.mxu0 0.0
    %825 = vmatprep.subr.mxu0 0.0
    %826 = vmatpush1.msra.mxu0 0.0
    %827 = vmatprep.subr.mxu0 0.0
    %828 = vmatpush1.msra.mxu0 0.0
    %829 = vmatprep.subr.mxu0 0.0
    %830 = vmatpush1.msra.mxu0 0.0
    %831 = vmatprep.subr.mxu0 0.0
    %832 = vmatpush1.msra.mxu0 0.0
    %833 = vmatprep.subr.mxu0 0.0
    %834 = vmatpush1.msra.mxu0 0.0
    %835 = vmatprep.subr.mxu0 0.0
    %836 = vmatpush1.msra.mxu0 0.0
    %837 = vmatprep.subr.mxu0 0.0
    %838 = vmatpush1.msra.mxu0 0.0
    %839 = vmatprep.subr.mxu0 0.0
    %840 = vmatpush1.msra.mxu0 0.0
    %841 = vmatprep.subr.mxu0 0.0
    %842 = vmatpush1.msra.mxu0 0.0
    %843 = vmatprep.subr.mxu0 0.0
    %844 = vmatpush1.msra.mxu0 0.0
    %845 = vmatprep.subr.mxu0 0.0
    %846 = vmatpush1.msra.mxu0 0.0
    %847 = vmatprep.subr.mxu0 0.0
    %848 = vmatpush1.msra.mxu0 0.0
    %849 = vmatprep.subr.mxu0 0.0
    %850 = vmatpush1.msra.mxu0 0.0
    %851 = vmatprep.subr.mxu0 0.0
    %852 = vmatpush1.msra.mxu0 0.0
    %853 = vmatprep.subr.mxu0 0.0
    %854 = vmatpush1.msra.mxu0 0.0
    %855 = vmatprep.subr.mxu0 0.0
    %856 = vmatpush1.msra.mxu0 0.0
    %857 = vmatprep.subr.mxu0 0.0
    %858 = vmatpush1.msra.mxu0 0.0
    %859 = vmatprep.mubr.f32.mxu0 0.0
    %860 = vmatmul.mubr.f32.gmra.mrb[0].mxu0 %v793
    %v861 = vpop.f32.mrb[0].mxu0
    %v862 = vadd.f32 0.0, %v861
    %v863 = vpop.f32.mrb[0].mxu0
    %v864 = vadd.f32 0.0, %v863
    %865 = vdwg.mxu0
    %v866 = vadd.f32 %v788, %v862
    %v867 = vadd.f32 %v789, %v864
    %v868 = vmul.f32 %v866, 0.5
    %v869 = vtanh.pop %v868
    %v870 = vmul.f32 %v869, 0.5
    %v871 = vadd.f32 %v870, 0.5
    %v872 = vtanh.pop %v867
    %v873 = vmul.f32 %v871, %v778
    %v874 = vmul.f32 %v871, %v872
    %876 = vrot.lane.b32.xlu0 %v874, 64
    %v877 = vpop.permute.xlu0 %876
    %v879 = vadd.f32 %v873, %v877
    %v880 = vmul.f32 %v867, 0.5
    %v881 = vtanh.pop %v880
    %v882 = vmul.f32 %v881, 0.5
    %v883 = vadd.f32 %v882, 0.5
    %v884 = vtanh.pop %v879
    %v885 = vmul.f32 %v883, %v884
    %s886 = smul.u32 4, 2
    %s887 = smul.addr %s886, 8
    %s888 = scalar_lea.vmem [#allocation2], %s887
    %v889 = vld [vmem:[%s888] sm:$0xff]
    %v890 = vld [vmem:[%s888 + $0x8] sm:$0xff]
    %892 = vrot.lane.b32.xlu0 %v885, 64
    %v893 = vpop.permute.xlu0 %892
    %v894 = vsel %vm488, %v893, 0
    %896 = vmatprep.subr.mxu0 %v468
    %897 = vmatpush1.msra.mxu0 %v467
    %898 = vmatprep.subr.mxu0 %v470
    %899 = vmatpush1.msra.mxu0 %v469
    %900 = vmatprep.subr.mxu0 %v472
    %901 = vmatpush1.msra.mxu0 %v471
    %902 = vmatprep.subr.mxu0 %v474
    %903 = vmatpush1.msra.mxu0 %v473
    %904 = vmatprep.subr.mxu0 %v476
    %905 = vmatpush1.msra.mxu0 %v475
    %906 = vmatprep.subr.mxu0 %v478
    %907 = vmatpush1.msra.mxu0 %v477
    %908 = vmatprep.subr.mxu0 %v480
    %909 = vmatpush1.msra.mxu0 %v479
    %910 = vmatprep.subr.mxu0 %v482
    %911 = vmatpush1.msra.mxu0 %v481
    %912 = vmatprep.subr.mxu0 0.0
    %913 = vmatpush1.msra.mxu0 0.0
    %914 = vmatprep.subr.mxu0 0.0
    %915 = vmatpush1.msra.mxu0 0.0
    %916 = vmatprep.subr.mxu0 0.0
    %917 = vmatpush1.msra.mxu0 0.0
    %918 = vmatprep.subr.mxu0 0.0
    %919 = vmatpush1.msra.mxu0 0.0
    %920 = vmatprep.subr.mxu0 0.0
    %921 = vmatpush1.msra.mxu0 0.0
    %922 = vmatprep.subr.mxu0 0.0
    %923 = vmatpush1.msra.mxu0 0.0
    %924 = vmatprep.subr.mxu0 0.0
    %925 = vmatpush1.msra.mxu0 0.0
    %926 = vmatprep.subr.mxu0 0.0
    %927 = vmatpush1.msra.mxu0 0.0
    %928 = vmatprep.subr.mxu0 0.0
    %929 = vmatpush1.msra.mxu0 0.0
    %930 = vmatprep.subr.mxu0 0.0
    %931 = vmatpush1.msra.mxu0 0.0
    %932 = vmatprep.subr.mxu0 0.0
    %933 = vmatpush1.msra.mxu0 0.0
    %934 = vmatprep.subr.mxu0 0.0
    %935 = vmatpush1.msra.mxu0 0.0
    %936 = vmatprep.subr.mxu0 0.0
    %937 = vmatpush1.msra.mxu0 0.0
    %938 = vmatprep.subr.mxu0 0.0
    %939 = vmatpush1.msra.mxu0 0.0
    %940 = vmatprep.subr.mxu0 0.0
    %941 = vmatpush1.msra.mxu0 0.0
    %942 = vmatprep.subr.mxu0 0.0
    %943 = vmatpush1.msra.mxu0 0.0
    %944 = vmatprep.subr.mxu0 0.0
    %945 = vmatpush1.msra.mxu0 0.0
    %946 = vmatprep.subr.mxu0 0.0
    %947 = vmatpush1.msra.mxu0 0.0
    %948 = vmatprep.subr.mxu0 0.0
    %949 = vmatpush1.msra.mxu0 0.0
    %950 = vmatprep.subr.mxu0 0.0
    %951 = vmatpush1.msra.mxu0 0.0
    %952 = vmatprep.subr.mxu0 0.0
    %953 = vmatpush1.msra.mxu0 0.0
    %954 = vmatprep.subr.mxu0 0.0
    %955 = vmatpush1.msra.mxu0 0.0
    %956 = vmatprep.subr.mxu0 0.0
    %957 = vmatpush1.msra.mxu0 0.0
    %958 = vmatprep.subr.mxu0 0.0
    %959 = vmatpush1.msra.mxu0 0.0
    %960 = vmatprep.mubr.f32.mxu0 0.0
    %961 = vmatmul.mubr.f32.gmra.mrb[0].mxu0 %v894
    %v962 = vpop.f32.mrb[0].mxu0
    %v963 = vadd.f32 0.0, %v962
    %v964 = vpop.f32.mrb[0].mxu0
    %v965 = vadd.f32 0.0, %v964
    %966 = vdwg.mxu0
    %v967 = vadd.f32 %v889, %v963
    %v968 = vadd.f32 %v890, %v965
    %v969 = vmul.f32 %v967, 0.5
    %v970 = vtanh.pop %v969
    %v971 = vmul.f32 %v970, 0.5
    %v972 = vadd.f32 %v971, 0.5
    %v973 = vtanh.pop %v968
    %v974 = vmul.f32 %v972, %v879
    %v975 = vmul.f32 %v972, %v973
    %977 = vrot.lane.b32.xlu0 %v975, 64
    %v978 = vpop.permute.xlu0 %977
    %v980 = vadd.f32 %v974, %v978
    %v981 = vmul.f32 %v968, 0.5
    %v982 = vtanh.pop %v981
    %v983 = vmul.f32 %v982, 0.5
    %v984 = vadd.f32 %v983, 0.5
    %v985 = vtanh.pop %v980
    %v986 = vmul.f32 %v984, %v985
    %s987 = smul.u32 5, 2
    %s988 = smul.addr %s987, 8
    %s989 = scalar_lea.vmem [#allocation2], %s988
    %v990 = vld [vmem:[%s989] sm:$0xff]
    %v991 = vld [vmem:[%s989 + $0x8] sm:$0xff]
    %993 = vrot.lane.b32.xlu0 %v986, 64
    %v994 = vpop.permute.xlu0 %993
    %v995 = vsel %vm488, %v994, 0
    %997 = vmatprep.subr.mxu0 %v468
    %998 = vmatpush1.msra.mxu0 %v467
    %999 = vmatprep.subr.mxu0 %v470
    %1000 = vmatpush1.msra.mxu0 %v469
    %1001 = vmatprep.subr.mxu0 %v472
    %1002 = vmatpush1.msra.mxu0 %v471
    %1003 = vmatprep.subr.mxu0 %v474
    %1004 = vmatpush1.msra.mxu0 %v473
    %1005 = vmatprep.subr.mxu0 %v476
    %1006 = vmatpush1.msra.mxu0 %v475
    %1007 = vmatprep.subr.mxu0 %v478
    %1008 = vmatpush1.msra.mxu0 %v477
    %1009 = vmatprep.subr.mxu0 %v480
    %1010 = vmatpush1.msra.mxu0 %v479
    %1011 = vmatprep.subr.mxu0 %v482
    %1012 = vmatpush1.msra.mxu0 %v481
    %1013 = vmatprep.subr.mxu0 0.0
    %1014 = vmatpush1.msra.mxu0 0.0
    %1015 = vmatprep.subr.mxu0 0.0
    %1016 = vmatpush1.msra.mxu0 0.0
    %1017 = vmatprep.subr.mxu0 0.0
    %1018 = vmatpush1.msra.mxu0 0.0
    %1019 = vmatprep.subr.mxu0 0.0
    %1020 = vmatpush1.msra.mxu0 0.0
    %1021 = vmatprep.subr.mxu0 0.0
    %1022 = vmatpush1.msra.mxu0 0.0
    %1023 = vmatprep.subr.mxu0 0.0
    %1024 = vmatpush1.msra.mxu0 0.0
    %1025 = vmatprep.subr.mxu0 0.0
    %1026 = vmatpush1.msra.mxu0 0.0
    %1027 = vmatprep.subr.mxu0 0.0
    %1028 = vmatpush1.msra.mxu0 0.0
    %1029 = vmatprep.subr.mxu0 0.0
    %1030 = vmatpush1.msra.mxu0 0.0
    %1031 = vmatprep.subr.mxu0 0.0
    %1032 = vmatpush1.msra.mxu0 0.0
    %1033 = vmatprep.subr.mxu0 0.0
    %1034 = vmatpush1.msra.mxu0 0.0
    %1035 = vmatprep.subr.mxu0 0.0
    %1036 = vmatpush1.msra.mxu0 0.0
    %1037 = vmatprep.subr.mxu0 0.0
    %1038 = vmatpush1.msra.mxu0 0.0
    %1039 = vmatprep.subr.mxu0 0.0
    %1040 = vmatpush1.msra.mxu0 0.0
    %1041 = vmatprep.subr.mxu0 0.0
    %1042 = vmatpush1.msra.mxu0 0.0
    %1043 = vmatprep.subr.mxu0 0.0
    %1044 = vmatpush1.msra.mxu0 0.0
    %1045 = vmatprep.subr.mxu0 0.0
    %1046 = vmatpush1.msra.mxu0 0.0
    %1047 = vmatprep.subr.mxu0 0.0
    %1048 = vmatpush1.msra.mxu0 0.0
    %1049 = vmatprep.subr.mxu0 0.0
    %1050 = vmatpush1.msra.mxu0 0.0
    %1051 = vmatprep.subr.mxu0 0.0
    %1052 = vmatpush1.msra.mxu0 0.0
    %1053 = vmatprep.subr.mxu0 0.0
    %1054 = vmatpush1.msra.mxu0 0.0
    %1055 = vmatprep.subr.mxu0 0.0
    %1056 = vmatpush1.msra.mxu0 0.0
    %1057 = vmatprep.subr.mxu0 0.0
    %1058 = vmatpush1.msra.mxu0 0.0
    %1059 = vmatprep.subr.mxu0 0.0
    %1060 = vmatpush1.msra.mxu0 0.0
    %1061 = vmatprep.mubr.f32.mxu0 0.0
    %1062 = vmatmul.mubr.f32.gmra.mrb[0].mxu0 %v995
    %v1063 = vpop.f32.mrb[0].mxu0
    %v1064 = vadd.f32 0.0, %v1063
    %v1065 = vpop.f32.mrb[0].mxu0
    %v1066 = vadd.f32 0.0, %v1065
    %1067 = vdwg.mxu0
    %v1068 = vadd.f32 %v990, %v1064
    %v1069 = vadd.f32 %v991, %v1066
    %v1070 = vmul.f32 %v1068, 0.5
    %v1071 = vtanh.pop %v1070
    %v1072 = vmul.f32 %v1071, 0.5
    %v1073 = vadd.f32 %v1072, 0.5
    %v1074 = vtanh.pop %v1069
    %v1075 = vmul.f32 %v1073, %v980
    %v1076 = vmul.f32 %v1073, %v1074
    %1078 = vrot.lane.b32.xlu0 %v1076, 64
    %v1079 = vpop.permute.xlu0 %1078
    %v1081 = vadd.f32 %v1075, %v1079
    %v1082 = vmul.f32 %v1069, 0.5
    %v1083 = vtanh.pop %v1082
    %v1084 = vmul.f32 %v1083, 0.5
    %v1085 = vadd.f32 %v1084, 0.5
    %v1086 = vtanh.pop %v1081
    %v1087 = vmul.f32 %v1085, %v1086
    %s1088 = smul.u32 6, 2
    %s1089 = smul.addr %s1088, 8
    %s1090 = scalar_lea.vmem [#allocation2], %s1089
    %v1091 = vld [vmem:[%s1090] sm:$0xff]
    %v1092 = vld [vmem:[%s1090 + $0x8] sm:$0xff]
    %1094 = vrot.lane.b32.xlu0 %v1087, 64
    %v1095 = vpop.permute.xlu0 %1094
    %v1096 = vsel %vm488, %v1095, 0
    %1098 = vmatprep.subr.mxu0 %v468
    %1099 = vmatpush1.msra.mxu0 %v467
    %1100 = vmatprep.subr.mxu0 %v470
    %1101 = vmatpush1.msra.mxu0 %v469
    %1102 = vmatprep.subr.mxu0 %v472
    %1103 = vmatpush1.msra.mxu0 %v471
    %1104 = vmatprep.subr.mxu0 %v474
    %1105 = vmatpush1.msra.mxu0 %v473
    %1106 = vmatprep.subr.mxu0 %v476
    %1107 = vmatpush1.msra.mxu0 %v475
    %1108 = vmatprep.subr.mxu0 %v478
    %1109 = vmatpush1.msra.mxu0 %v477
    %1110 = vmatprep.subr.mxu0 %v480
    %1111 = vmatpush1.msra.mxu0 %v479
    %1112 = vmatprep.subr.mxu0 %v482
    %1113 = vmatpush1.msra.mxu0 %v481
    %1114 = vmatprep.subr.mxu0 0.0
    %1115 = vmatpush1.msra.mxu0 0.0
    %1116 = vmatprep.subr.mxu0 0.0
    %1117 = vmatpush1.msra.mxu0 0.0
    %1118 = vmatprep.subr.mxu0 0.0
    %1119 = vmatpush1.msra.mxu0 0.0
    %1120 = vmatprep.subr.mxu0 0.0
    %1121 = vmatpush1.msra.mxu0 0.0
    %1122 = vmatprep.subr.mxu0 0.0
    %1123 = vmatpush1.msra.mxu0 0.0
    %1124 = vmatprep.subr.mxu0 0.0
    %1125 = vmatpush1.msra.mxu0 0.0
    %1126 = vmatprep.subr.mxu0 0.0
    %1127 = vmatpush1.msra.mxu0 0.0
    %1128 = vmatprep.subr.mxu0 0.0
    %1129 = vmatpush1.msra.mxu0 0.0
    %1130 = vmatprep.subr.mxu0 0.0
    %1131 = vmatpush1.msra.mxu0 0.0
    %1132 = vmatprep.subr.mxu0 0.0
    %1133 = vmatpush1.msra.mxu0 0.0
    %1134 = vmatprep.subr.mxu0 0.0
    %1135 = vmatpush1.msra.mxu0 0.0
    %1136 = vmatprep.subr.mxu0 0.0
    %1137 = vmatpush1.msra.mxu0 0.0
    %1138 = vmatprep.subr.mxu0 0.0
    %1139 = vmatpush1.msra.mxu0 0.0
    %1140 = vmatprep.subr.mxu0 0.0
    %1141 = vmatpush1.msra.mxu0 0.0
    %1142 = vmatprep.subr.mxu0 0.0
    %1143 = vmatpush1.msra.mxu0 0.0
    %1144 = vmatprep.subr.mxu0 0.0
    %1145 = vmatpush1.msra.mxu0 0.0
    %1146 = vmatprep.subr.mxu0 0.0
    %1147 = vmatpush1.msra.mxu0 0.0
    %1148 = vmatprep.subr.mxu0 0.0
    %1149 = vmatpush1.msra.mxu0 0.0
    %1150 = vmatprep.subr.mxu0 0.0
    %1151 = vmatpush1.msra.mxu0 0.0
    %1152 = vmatprep.subr.mxu0 0.0
    %1153 = vmatpush1.msra.mxu0 0.0
    %1154 = vmatprep.subr.mxu0 0.0
    %1155 = vmatpush1.msra.mxu0 0.0
    %1156 = vmatprep.subr.mxu0 0.0
    %1157 = vmatpush1.msra.mxu0 0.0
    %1158 = vmatprep.subr.mxu0 0.0
    %1159 = vmatpush1.msra.mxu0 0.0
    %1160 = vmatprep.subr.mxu0 0.0
    %1161 = vmatpush1.msra.mxu0 0.0
    %1162 = vmatprep.mubr.f32.mxu0 0.0
    %1163 = vmatmul.mubr.f32.gmra.mrb[0].mxu0 %v1096
    %v1164 = vpop.f32.mrb[0].mxu0
    %v1165 = vadd.f32 0.0, %v1164
    %v1166 = vpop.f32.mrb[0].mxu0
    %v1167 = vadd.f32 0.0, %v1166
    %1168 = vdwg.mxu0
    %v1169 = vadd.f32 %v1091, %v1165
    %v1170 = vadd.f32 %v1092, %v1167
    %v1171 = vmul.f32 %v1169, 0.5
    %v1172 = vtanh.pop %v1171
    %v1173 = vmul.f32 %v1172, 0.5
    %v1174 = vadd.f32 %v1173, 0.5
    %v1175 = vtanh.pop %v1170
    %v1176 = vmul.f32 %v1174, %v1081
    %v1177 = vmul.f32 %v1174, %v1175
    %1179 = vrot.lane.b32.xlu0 %v1177, 64
    %v1180 = vpop.permute.xlu0 %1179
    %v1182 = vadd.f32 %v1176, %v1180
    %v1183 = vmul.f32 %v1170, 0.5
    %v1184 = vtanh.pop %v1183
    %v1185 = vmul.f32 %v1184, 0.5
    %v1186 = vadd.f32 %v1185, 0.5
    %v1187 = vtanh.pop %v1182
    %v1188 = vmul.f32 %v1186, %v1187
    %s1189 = smul.u32 7, 2
    %s1190 = smul.addr %s1189, 8
    %s1191 = scalar_lea.vmem [#allocation2], %s1190
    %v1192 = vld [vmem:[%s1191] sm:$0xff]
    %v1193 = vld [vmem:[%s1191 + $0x8] sm:$0xff]
    %1195 = vrot.lane.b32.xlu0 %v1188, 64
    %v1196 = vpop.permute.xlu0 %1195
    %v1197 = vsel %vm488, %v1196, 0
    %1199 = vmatprep.subr.mxu0 %v468
    %1200 = vmatpush1.msra.mxu0 %v467
    %1201 = vmatprep.subr.mxu0 %v470
    %1202 = vmatpush1.msra.mxu0 %v469
    %1203 = vmatprep.subr.mxu0 %v472
    %1204 = vmatpush1.msra.mxu0 %v471
    %1205 = vmatprep.subr.mxu0 %v474
    %1206 = vmatpush1.msra.mxu0 %v473
    %1207 = vmatprep.subr.mxu0 %v476
    %1208 = vmatpush1.msra.mxu0 %v475
    %1209 = vmatprep.subr.mxu0 %v478
    %1210 = vmatpush1.msra.mxu0 %v477
    %1211 = vmatprep.subr.mxu0 %v480
    %1212 = vmatpush1.msra.mxu0 %v479
    %1213 = vmatprep.subr.mxu0 %v482
    %1214 = vmatpush1.msra.mxu0 %v481
    %1215 = vmatprep.subr.mxu0 0.0
    %1216 = vmatpush1.msra.mxu0 0.0
    %1217 = vmatprep.subr.mxu0 0.0
    %1218 = vmatpush1.msra.mxu0 0.0
    %1219 = vmatprep.subr.mxu0 0.0
    %1220 = vmatpush1.msra.mxu0 0.0
    %1221 = vmatprep.subr.mxu0 0.0
    %1222 = vmatpush1.msra.mxu0 0.0
    %1223 = vmatprep.subr.mxu0 0.0
    %1224 = vmatpush1.msra.mxu0 0.0
    %1225 = vmatprep.subr.mxu0 0.0
    %1226 = vmatpush1.msra.mxu0 0.0
    %1227 = vmatprep.subr.mxu0 0.0
    %1228 = vmatpush1.msra.mxu0 0.0
    %1229 = vmatprep.subr.mxu0 0.0
    %1230 = vmatpush1.msra.mxu0 0.0
    %1231 = vmatprep.subr.mxu0 0.0
    %1232 = vmatpush1.msra.mxu0 0.0
    %1233 = vmatprep.subr.mxu0 0.0
    %1234 = vmatpush1.msra.mxu0 0.0
    %1235 = vmatprep.subr.mxu0 0.0
    %1236 = vmatpush1.msra.mxu0 0.0
    %1237 = vmatprep.subr.mxu0 0.0
    %1238 = vmatpush1.msra.mxu0 0.0
    %1239 = vmatprep.subr.mxu0 0.0
    %1240 = vmatpush1.msra.mxu0 0.0
    %1241 = vmatprep.subr.mxu0 0.0
    %1242 = vmatpush1.msra.mxu0 0.0
    %1243 = vmatprep.subr.mxu0 0.0
    %1244 = vmatpush1.msra.mxu0 0.0
    %1245 = vmatprep.subr.mxu0 0.0
    %1246 = vmatpush1.msra.mxu0 0.0
    %1247 = vmatprep.subr.mxu0 0.0
    %1248 = vmatpush1.msra.mxu0 0.0
    %1249 = vmatprep.subr.mxu0 0.0
    %1250 = vmatpush1.msra.mxu0 0.0
    %1251 = vmatprep.subr.mxu0 0.0
    %1252 = vmatpush1.msra.mxu0 0.0
    %1253 = vmatprep.subr.mxu0 0.0
    %1254 = vmatpush1.msra.mxu0 0.0
    %1255 = vmatprep.subr.mxu0 0.0
    %1256 = vmatpush1.msra.mxu0 0.0
    %1257 = vmatprep.subr.mxu0 0.0
    %1258 = vmatpush1.msra.mxu0 0.0
    %1259 = vmatprep.subr.mxu0 0.0
    %1260 = vmatpush1.msra.mxu0 0.0
    %1261 = vmatprep.subr.mxu0 0.0
    %1262 = vmatpush1.msra.mxu0 0.0
    %1263 = vmatprep.mubr.f32.mxu0 0.0
    %1264 = vmatmul.mubr.f32.gmra.mrb[0].mxu0 %v1197
    %v1265 = vpop.f32.mrb[0].mxu0
    %v1266 = vadd.f32 0.0, %v1265
    %v1267 = vpop.f32.mrb[0].mxu0
    %v1268 = vadd.f32 0.0, %v1267
    %1269 = vdwg.mxu0
    %v1270 = vadd.f32 %v1192, %v1266
    %v1271 = vadd.f32 %v1193, %v1268
    %v1272 = vmul.f32 %v1270, 0.5
    %v1273 = vtanh.pop %v1272
    %v1274 = vmul.f32 %v1273, 0.5
    %v1275 = vadd.f32 %v1274, 0.5
    %v1276 = vtanh.pop %v1271
    %v1277 = vmul.f32 %v1275, %v1182
    %v1278 = vmul.f32 %v1275, %v1276
    %1280 = vrot.lane.b32.xlu0 %v1278, 64
    %v1281 = vpop.permute.xlu0 %1280
    %v1283 = vadd.f32 %v1277, %v1281
    %v1284 = vmul.f32 %v1271, 0.5
    %v1285 = vtanh.pop %v1284
    %v1286 = vmul.f32 %v1285, 0.5
    %v1287 = vadd.f32 %v1286, 0.5
    %v1288 = vtanh.pop %v1283
    %v1289 = vmul.f32 %v1287, %v1288
    %s1290 = smul.u32 8, 2
    %s1291 = smul.addr %s1290, 8
    %s1292 = scalar_lea.vmem [#allocation2], %s1291
    %v1293 = vld [vmem:[%s1292] sm:$0xff]
    %v1294 = vld [vmem:[%s1292 + $0x8] sm:$0xff]
    %1296 = vrot.lane.b32.xlu0 %v1289, 64
    %v1297 = vpop.permute.xlu0 %1296
    %v1298 = vsel %vm488, %v1297, 0
    %1300 = vmatprep.subr.mxu0 %v468
    %1301 = vmatpush1.msra.mxu0 %v467
    %1302 = vmatprep.subr.mxu0 %v470
    %1303 = vmatpush1.msra.mxu0 %v469
    %1304 = vmatprep.subr.mxu0 %v472
    %1305 = vmatpush1.msra.mxu0 %v471
    %1306 = vmatprep.subr.mxu0 %v474
    %1307 = vmatpush1.msra.mxu0 %v473
    %1308 = vmatprep.subr.mxu0 %v476
    %1309 = vmatpush1.msra.mxu0 %v475
    %1310 = vmatprep.subr.mxu0 %v478
    %1311 = vmatpush1.msra.mxu0 %v477
    %1312 = vmatprep.subr.mxu0 %v480
    %1313 = vmatpush1.msra.mxu0 %v479
    %1314 = vmatprep.subr.mxu0 %v482
    %1315 = vmatpush1.msra.mxu0 %v481
    %1316 = vmatprep.subr.mxu0 0.0
    %1317 = vmatpush1.msra.mxu0 0.0
    %1318 = vmatprep.subr.mxu0 0.0
    %1319 = vmatpush1.msra.mxu0 0.0
    %1320 = vmatprep.subr.mxu0 0.0
    %1321 = vmatpush1.msra.mxu0 0.0
    %1322 = vmatprep.subr.mxu0 0.0
    %1323 = vmatpush1.msra.mxu0 0.0
    %1324 = vmatprep.subr.mxu0 0.0
    %1325 = vmatpush1.msra.mxu0 0.0
    %1326 = vmatprep.subr.mxu0 0.0
    %1327 = vmatpush1.msra.mxu0 0.0
    %1328 = vmatprep.subr.mxu0 0.0
    %1329 = vmatpush1.msra.mxu0 0.0
    %1330 = vmatprep.subr.mxu0 0.0
    %1331 = vmatpush1.msra.mxu0 0.0
    %1332 = vmatprep.subr.mxu0 0.0
    %1333 = vmatpush1.msra.mxu0 0.0
    %1334 = vmatprep.subr.mxu0 0.0
    %1335 = vmatpush1.msra.mxu0 0.0
    %1336 = vmatprep.subr.mxu0 0.0
    %1337 = vmatpush1.msra.mxu0 0.0
    %1338 = vmatprep.subr.mxu0 0.0
    %1339 = vmatpush1.msra.mxu0 0.0
    %1340 = vmatprep.subr.mxu0 0.0
    %1341 = vmatpush1.msra.mxu0 0.0
    %1342 = vmatprep.subr.mxu0 0.0
    %1343 = vmatpush1.msra.mxu0 0.0
    %1344 = vmatprep.subr.mxu0 0.0
    %1345 = vmatpush1.msra.mxu0 0.0
    %1346 = vmatprep.subr.mxu0 0.0
    %1347 = vmatpush1.msra.mxu0 0.0
    %1348 = vmatprep.subr.mxu0 0.0
    %1349 = vmatpush1.msra.mxu0 0.0
    %1350 = vmatprep.subr.mxu0 0.0
    %1351 = vmatpush1.msra.mxu0 0.0
    %1352 = vmatprep.subr.mxu0 0.0
    %1353 = vmatpush1.msra.mxu0 0.0
    %1354 = vmatprep.subr.mxu0 0.0
    %1355 = vmatpush1.msra.mxu0 0.0
    %1356 = vmatprep.subr.mxu0 0.0
    %1357 = vmatpush1.msra.mxu0 0.0
    %1358 = vmatprep.subr.mxu0 0.0
    %1359 = vmatpush1.msra.mxu0 0.0
    %1360 = vmatprep.subr.mxu0 0.0
    %1361 = vmatpush1.msra.mxu0 0.0
    %1362 = vmatprep.subr.mxu0 0.0
    %1363 = vmatpush1.msra.mxu0 0.0
    %1364 = vmatprep.mubr.f32.mxu0 0.0
    %1365 = vmatmul.mubr.f32.gmra.mrb[0].mxu0 %v1298
    %v1366 = vpop.f32.mrb[0].mxu0
    %v1367 = vadd.f32 0.0, %v1366
    %v1368 = vpop.f32.mrb[0].mxu0
    %v1369 = vadd.f32 0.0, %v1368
    %1370 = vdwg.mxu0
    %v1371 = vadd.f32 %v1293, %v1367
    %v1372 = vadd.f32 %v1294, %v1369
    %v1373 = vmul.f32 %v1371, 0.5
    %v1374 = vtanh.pop %v1373
    %v1375 = vmul.f32 %v1374, 0.5
    %v1376 = vadd.f32 %v1375, 0.5
    %v1377 = vtanh.pop %v1372
    %v1378 = vmul.f32 %v1376, %v1283
    %v1379 = vmul.f32 %v1376, %v1377
    %1381 = vrot.lane.b32.xlu0 %v1379, 64
    %v1382 = vpop.permute.xlu0 %1381
    %v1384 = vadd.f32 %v1378, %v1382
    %v1385 = vmul.f32 %v1372, 0.5
    %v1386 = vtanh.pop %v1385
    %v1387 = vmul.f32 %v1386, 0.5
    %v1388 = vadd.f32 %v1387, 0.5
    %v1389 = vtanh.pop %v1384
    %v1390 = vmul.f32 %v1388, %v1389
    %s1391 = smul.u32 9, 2
    %s1392 = smul.addr %s1391, 8
    %s1393 = scalar_lea.vmem [#allocation2], %s1392
    %v1394 = vld [vmem:[%s1393] sm:$0xff]
    %v1395 = vld [vmem:[%s1393 + $0x8] sm:$0xff]
    %1397 = vrot.lane.b32.xlu0 %v1390, 64
    %v1398 = vpop.permute.xlu0 %1397
    %v1399 = vsel %vm488, %v1398, 0
    %1401 = vmatprep.subr.mxu0 %v468
    %1402 = vmatpush1.msra.mxu0 %v467
    %1403 = vmatprep.subr.mxu0 %v470
    %1404 = vmatpush1.msra.mxu0 %v469
    %1405 = vmatprep.subr.mxu0 %v472
    %1406 = vmatpush1.msra.mxu0 %v471
    %1407 = vmatprep.subr.mxu0 %v474
    %1408 = vmatpush1.msra.mxu0 %v473
    %1409 = vmatprep.subr.mxu0 %v476
    %1410 = vmatpush1.msra.mxu0 %v475
    %1411 = vmatprep.subr.mxu0 %v478
    %1412 = vmatpush1.msra.mxu0 %v477
    %1413 = vmatprep.subr.mxu0 %v480
    %1414 = vmatpush1.msra.mxu0 %v479
    %1415 = vmatprep.subr.mxu0 %v482
    %1416 = vmatpush1.msra.mxu0 %v481
    %1417 = vmatprep.subr.mxu0 0.0
    %1418 = vmatpush1.msra.mxu0 0.0
    %1419 = vmatprep.subr.mxu0 0.0
    %1420 = vmatpush1.msra.mxu0 0.0
    %1421 = vmatprep.subr.mxu0 0.0
    %1422 = vmatpush1.msra.mxu0 0.0
    %1423 = vmatprep.subr.mxu0 0.0
    %1424 = vmatpush1.msra.mxu0 0.0
    %1425 = vmatprep.subr.mxu0 0.0
    %1426 = vmatpush1.msra.mxu0 0.0
    %1427 = vmatprep.subr.mxu0 0.0
    %1428 = vmatpush1.msra.mxu0 0.0
    %1429 = vmatprep.subr.mxu0 0.0
    %1430 = vmatpush1.msra.mxu0 0.0
    %1431 = vmatprep.subr.mxu0 0.0
    %1432 = vmatpush1.msra.mxu0 0.0
    %1433 = vmatprep.subr.mxu0 0.0
    %1434 = vmatpush1.msra.mxu0 0.0
    %1435 = vmatprep.subr.mxu0 0.0
    %1436 = vmatpush1.msra.mxu0 0.0
    %1437 = vmatprep.subr.mxu0 0.0
    %1438 = vmatpush1.msra.mxu0 0.0
    %1439 = vmatprep.subr.mxu0 0.0
    %1440 = vmatpush1.msra.mxu0 0.0
    %1441 = vmatprep.subr.mxu0 0.0
    %1442 = vmatpush1.msra.mxu0 0.0
    %1443 = vmatprep.subr.mxu0 0.0
    %1444 = vmatpush1.msra.mxu0 0.0
    %1445 = vmatprep.subr.mxu0 0.0
    %1446 = vmatpush1.msra.mxu0 0.0
    %1447 = vmatprep.subr.mxu0 0.0
    %1448 = vmatpush1.msra.mxu0 0.0
    %1449 = vmatprep.subr.mxu0 0.0
    %1450 = vmatpush1.msra.mxu0 0.0
    %1451 = vmatprep.subr.mxu0 0.0
    %1452 = vmatpush1.msra.mxu0 0.0
    %1453 = vmatprep.subr.mxu0 0.0
    %1454 = vmatpush1.msra.mxu0 0.0
    %1455 = vmatprep.subr.mxu0 0.0
    %1456 = vmatpush1.msra.mxu0 0.0
    %1457 = vmatprep.subr.mxu0 0.0
    %1458 = vmatpush1.msra.mxu0 0.0
    %1459 = vmatprep.subr.mxu0 0.0
    %1460 = vmatpush1.msra.mxu0 0.0
    %1461 = vmatprep.subr.mxu0 0.0
    %1462 = vmatpush1.msra.mxu0 0.0
    %1463 = vmatprep.subr.mxu0 0.0
    %1464 = vmatpush1.msra.mxu0 0.0
    %1465 = vmatprep.mubr.f32.mxu0 0.0
    %1466 = vmatmul.mubr.f32.gmra.mrb[0].mxu0 %v1399
    %v1467 = vpop.f32.mrb[0].mxu0
    %v1468 = vadd.f32 0.0, %v1467
    %v1469 = vpop.f32.mrb[0].mxu0
    %v1470 = vadd.f32 0.0, %v1469
    %1471 = vdwg.mxu0
    %v1472 = vadd.f32 %v1394, %v1468
    %v1473 = vadd.f32 %v1395, %v1470
    %v1474 = vmul.f32 %v1472, 0.5
    %v1475 = vtanh.pop %v1474
    %v1476 = vmul.f32 %v1475, 0.5
    %v1477 = vadd.f32 %v1476, 0.5
    %v1478 = vtanh.pop %v1473
    %v1479 = vmul.f32 %v1477, %v1384
    %v1480 = vmul.f32 %v1477, %v1478
    %1482 = vrot.lane.b32.xlu0 %v1480, 64
    %v1483 = vpop.permute.xlu0 %1482
    %v1485 = vadd.f32 %v1479, %v1483
    %v1486 = vmul.f32 %v1473, 0.5
    %v1487 = vtanh.pop %v1486
    %v1488 = vmul.f32 %v1487, 0.5
    %v1489 = vadd.f32 %v1488, 0.5
    %v1490 = vtanh.pop %v1485
    %v1491 = vmul.f32 %v1489, %v1490
    %s1492 = smul.u32 10, 2
    %s1493 = smul.addr %s1492, 8
    %s1494 = scalar_lea.vmem [#allocation2], %s1493
    %v1495 = vld [vmem:[%s1494] sm:$0xff]
    %v1496 = vld [vmem:[%s1494 + $0x8] sm:$0xff]
    %1498 = vrot.lane.b32.xlu0 %v1491, 64
    %v1499 = vpop.permute.xlu0 %1498
    %v1500 = vsel %vm488, %v1499, 0
    %1502 = vmatprep.subr.mxu0 %v468
    %1503 = vmatpush1.msra.mxu0 %v467
    %1504 = vmatprep.subr.mxu0 %v470
    %1505 = vmatpush1.msra.mxu0 %v469
    %1506 = vmatprep.subr.mxu0 %v472
    %1507 = vmatpush1.msra.mxu0 %v471
    %1508 = vmatprep.subr.mxu0 %v474
    %1509 = vmatpush1.msra.mxu0 %v473
    %1510 = vmatprep.subr.mxu0 %v476
    %1511 = vmatpush1.msra.mxu0 %v475
    %1512 = vmatprep.subr.mxu0 %v478
    %1513 = vmatpush1.msra.mxu0 %v477
    %1514 = vmatprep.subr.mxu0 %v480
    %1515 = vmatpush1.msra.mxu0 %v479
    %1516 = vmatprep.subr.mxu0 %v482
    %1517 = vmatpush1.msra.mxu0 %v481
    %1518 = vmatprep.subr.mxu0 0.0
    %1519 = vmatpush1.msra.mxu0 0.0
    %1520 = vmatprep.subr.mxu0 0.0
    %1521 = vmatpush1.msra.mxu0 0.0
    %1522 = vmatprep.subr.mxu0 0.0
    %1523 = vmatpush1.msra.mxu0 0.0
    %1524 = vmatprep.subr.mxu0 0.0
    %1525 = vmatpush1.msra.mxu0 0.0
    %1526 = vmatprep.subr.mxu0 0.0
    %1527 = vmatpush1.msra.mxu0 0.0
    %1528 = vmatprep.subr.mxu0 0.0
    %1529 = vmatpush1.msra.mxu0 0.0
    %1530 = vmatprep.subr.mxu0 0.0
    %1531 = vmatpush1.msra.mxu0 0.0
    %1532 = vmatprep.subr.mxu0 0.0
    %1533 = vmatpush1.msra.mxu0 0.0
    %1534 = vmatprep.subr.mxu0 0.0
    %1535 = vmatpush1.msra.mxu0 0.0
    %1536 = vmatprep.subr.mxu0 0.0
    %1537 = vmatpush1.msra.mxu0 0.0
    %1538 = vmatprep.subr.mxu0 0.0
    %1539 = vmatpush1.msra.mxu0 0.0
    %1540 = vmatprep.subr.mxu0 0.0
    %1541 = vmatpush1.msra.mxu0 0.0
    %1542 = vmatprep.subr.mxu0 0.0
    %1543 = vmatpush1.msra.mxu0 0.0
    %1544 = vmatprep.subr.mxu0 0.0
    %1545 = vmatpush1.msra.mxu0 0.0
    %1546 = vmatprep.subr.mxu0 0.0
    %1547 = vmatpush1.msra.mxu0 0.0
    %1548 = vmatprep.subr.mxu0 0.0
    %1549 = vmatpush1.msra.mxu0 0.0
    %1550 = vmatprep.subr.mxu0 0.0
    %1551 = vmatpush1.msra.mxu0 0.0
    %1552 = vmatprep.subr.mxu0 0.0
    %1553 = vmatpush1.msra.mxu0 0.0
    %1554 = vmatprep.subr.mxu0 0.0
    %1555 = vmatpush1.msra.mxu0 0.0
    %1556 = vmatprep.subr.mxu0 0.0
    %1557 = vmatpush1.msra.mxu0 0.0
    %1558 = vmatprep.subr.mxu0 0.0
    %1559 = vmatpush1.msra.mxu0 0.0
    %1560 = vmatprep.subr.mxu0 0.0
    %1561 = vmatpush1.msra.mxu0 0.0
    %1562 = vmatprep.subr.mxu0 0.0
    %1563 = vmatpush1.msra.mxu0 0.0
    %1564 = vmatprep.subr.mxu0 0.0
    %1565 = vmatpush1.msra.mxu0 0.0
    %1566 = vmatprep.mubr.f32.mxu0 0.0
    %1567 = vmatmul.mubr.f32.gmra.mrb[0].mxu0 %v1500
    %v1568 = vpop.f32.mrb[0].mxu0
    %v1569 = vadd.f32 0.0, %v1568
    %v1570 = vpop.f32.mrb[0].mxu0
    %v1571 = vadd.f32 0.0, %v1570
    %1572 = vdwg.mxu0
    %v1573 = vadd.f32 %v1495, %v1569
    %v1574 = vadd.f32 %v1496, %v1571
    %v1575 = vmul.f32 %v1573, 0.5
    %v1576 = vtanh.pop %v1575
    %v1577 = vmul.f32 %v1576, 0.5
    %v1578 = vadd.f32 %v1577, 0.5
    %v1579 = vtanh.pop %v1574
    %v1580 = vmul.f32 %v1578, %v1485
    %v1581 = vmul.f32 %v1578, %v1579
    %1583 = vrot.lane.b32.xlu0 %v1581, 64
    %v1584 = vpop.permute.xlu0 %1583
    %v1586 = vadd.f32 %v1580, %v1584
    %v1587 = vmul.f32 %v1574, 0.5
    %v1588 = vtanh.pop %v1587
    %v1589 = vmul.f32 %v1588, 0.5
    %v1590 = vadd.f32 %v1589, 0.5
    %v1591 = vtanh.pop %v1586
    %v1592 = vmul.f32 %v1590, %v1591
    %s1593 = smul.u32 11, 2
    %s1594 = smul.addr %s1593, 8
    %s1595 = scalar_lea.vmem [#allocation2], %s1594
    %v1596 = vld [vmem:[%s1595] sm:$0xff]
    %v1597 = vld [vmem:[%s1595 + $0x8] sm:$0xff]
    %1599 = vrot.lane.b32.xlu0 %v1592, 64
    %v1600 = vpop.permute.xlu0 %1599
    %v1601 = vsel %vm488, %v1600, 0
    %1603 = vmatprep.subr.mxu0 %v468
    %1604 = vmatpush1.msra.mxu0 %v467
    %1605 = vmatprep.subr.mxu0 %v470
    %1606 = vmatpush1.msra.mxu0 %v469
    %1607 = vmatprep.subr.mxu0 %v472
    %1608 = vmatpush1.msra.mxu0 %v471
    %1609 = vmatprep.subr.mxu0 %v474
    %1610 = vmatpush1.msra.mxu0 %v473
    %1611 = vmatprep.subr.mxu0 %v476
    %1612 = vmatpush1.msra.mxu0 %v475
    %1613 = vmatprep.subr.mxu0 %v478
    %1614 = vmatpush1.msra.mxu0 %v477
    %1615 = vmatprep.subr.mxu0 %v480
    %1616 = vmatpush1.msra.mxu0 %v479
    %1617 = vmatprep.subr.mxu0 %v482
    %1618 = vmatpush1.msra.mxu0 %v481
    %1619 = vmatprep.subr.mxu0 0.0
    %1620 = vmatpush1.msra.mxu0 0.0
    %1621 = vmatprep.subr.mxu0 0.0
    %1622 = vmatpush1.msra.mxu0 0.0
    %1623 = vmatprep.subr.mxu0 0.0
    %1624 = vmatpush1.msra.mxu0 0.0
    %1625 = vmatprep.subr.mxu0 0.0
    %1626 = vmatpush1.msra.mxu0 0.0
    %1627 = vmatprep.subr.mxu0 0.0
    %1628 = vmatpush1.msra.mxu0 0.0
    %1629 = vmatprep.subr.mxu0 0.0
    %1630 = vmatpush1.msra.mxu0 0.0
    %1631 = vmatprep.subr.mxu0 0.0
    %1632 = vmatpush1.msra.mxu0 0.0
    %1633 = vmatprep.subr.mxu0 0.0
    %1634 = vmatpush1.msra.mxu0 0.0
    %1635 = vmatprep.subr.mxu0 0.0
    %1636 = vmatpush1.msra.mxu0 0.0
    %1637 = vmatprep.subr.mxu0 0.0
    %1638 = vmatpush1.msra.mxu0 0.0
    %1639 = vmatprep.subr.mxu0 0.0
    %1640 = vmatpush1.msra.mxu0 0.0
    %1641 = vmatprep.subr.mxu0 0.0
    %1642 = vmatpush1.msra.mxu0 0.0
    %1643 = vmatprep.subr.mxu0 0.0
    %1644 = vmatpush1.msra.mxu0 0.0
    %1645 = vmatprep.subr.mxu0 0.0
    %1646 = vmatpush1.msra.mxu0 0.0
    %1647 = vmatprep.subr.mxu0 0.0
    %1648 = vmatpush1.msra.mxu0 0.0
    %1649 = vmatprep.subr.mxu0 0.0
    %1650 = vmatpush1.msra.mxu0 0.0
    %1651 = vmatprep.subr.mxu0 0.0
    %1652 = vmatpush1.msra.mxu0 0.0
    %1653 = vmatprep.subr.mxu0 0.0
    %1654 = vmatpush1.msra.mxu0 0.0
    %1655 = vmatprep.subr.mxu0 0.0
    %1656 = vmatpush1.msra.mxu0 0.0
    %1657 = vmatprep.subr.mxu0 0.0
    %1658 = vmatpush1.msra.mxu0 0.0
    %1659 = vmatprep.subr.mxu0 0.0
    %1660 = vmatpush1.msra.mxu0 0.0
    %1661 = vmatprep.subr.mxu0 0.0
    %1662 = vmatpush1.msra.mxu0 0.0
    %1663 = vmatprep.subr.mxu0 0.0
    %1664 = vmatpush1.msra.mxu0 0.0
    %1665 = vmatprep.subr.mxu0 0.0
    %1666 = vmatpush1.msra.mxu0 0.0
    %1667 = vmatprep.mubr.f32.mxu0 0.0
    %1668 = vmatmul.mubr.f32.gmra.mrb[0].mxu0 %v1601
    %v1669 = vpop.f32.mrb[0].mxu0
    %v1670 = vadd.f32 0.0, %v1669
    %v1671 = vpop.f32.mrb[0].mxu0
    %v1672 = vadd.f32 0.0, %v1671
    %1673 = vdwg.mxu0
    %v1674 = vadd.f32 %v1596, %v1670
    %v1675 = vadd.f32 %v1597, %v1672
    %v1676 = vmul.f32 %v1674, 0.5
    %v1677 = vtanh.pop %v1676
    %v1678 = vmul.f32 %v1677, 0.5
    %v1679 = vadd.f32 %v1678, 0.5
    %v1680 = vtanh.pop %v1675
    %v1681 = vmul.f32 %v1679, %v1586
    %v1682 = vmul.f32 %v1679, %v1680
    %1684 = vrot.lane.b32.xlu0 %v1682, 64
    %v1685 = vpop.permute.xlu0 %1684
    %v1687 = vadd.f32 %v1681, %v1685
    %v1688 = vmul.f32 %v1675, 0.5
    %v1689 = vtanh.pop %v1688
    %v1690 = vmul.f32 %v1689, 0.5
    %v1691 = vadd.f32 %v1690, 0.5
    %v1692 = vtanh.pop %v1687
    %v1693 = vmul.f32 %v1691, %v1692
    %s1694 = smul.u32 12, 2
    %s1695 = smul.addr %s1694, 8
    %s1696 = scalar_lea.vmem [#allocation2], %s1695
    %v1697 = vld [vmem:[%s1696] sm:$0xff]
    %v1698 = vld [vmem:[%s1696 + $0x8] sm:$0xff]
    %1700 = vrot.lane.b32.xlu0 %v1693, 64
    %v1701 = vpop.permute.xlu0 %1700
    %v1702 = vsel %vm488, %v1701, 0
    %1704 = vmatprep.subr.mxu0 %v468
    %1705 = vmatpush1.msra.mxu0 %v467
    %1706 = vmatprep.subr.mxu0 %v470
    %1707 = vmatpush1.msra.mxu0 %v469
    %1708 = vmatprep.subr.mxu0 %v472
    %1709 = vmatpush1.msra.mxu0 %v471
    %1710 = vmatprep.subr.mxu0 %v474
    %1711 = vmatpush1.msra.mxu0 %v473
    %1712 = vmatprep.subr.mxu0 %v476
    %1713 = vmatpush1.msra.mxu0 %v475
    %1714 = vmatprep.subr.mxu0 %v478
    %1715 = vmatpush1.msra.mxu0 %v477
    %1716 = vmatprep.subr.mxu0 %v480
    %1717 = vmatpush1.msra.mxu0 %v479
    %1718 = vmatprep.subr.mxu0 %v482
    %1719 = vmatpush1.msra.mxu0 %v481
    %1720 = vmatprep.subr.mxu0 0.0
    %1721 = vmatpush1.msra.mxu0 0.0
    %1722 = vmatprep.subr.mxu0 0.0
    %1723 = vmatpush1.msra.mxu0 0.0
    %1724 = vmatprep.subr.mxu0 0.0
    %1725 = vmatpush1.msra.mxu0 0.0
    %1726 = vmatprep.subr.mxu0 0.0
    %1727 = vmatpush1.msra.mxu0 0.0
    %1728 = vmatprep.subr.mxu0 0.0
    %1729 = vmatpush1.msra.mxu0 0.0
    %1730 = vmatprep.subr.mxu0 0.0
    %1731 = vmatpush1.msra.mxu0 0.0
    %1732 = vmatprep.subr.mxu0 0.0
    %1733 = vmatpush1.msra.mxu0 0.0
    %1734 = vmatprep.subr.mxu0 0.0
    %1735 = vmatpush1.msra.mxu0 0.0
    %1736 = vmatprep.subr.mxu0 0.0
    %1737 = vmatpush1.msra.mxu0 0.0
    %1738 = vmatprep.subr.mxu0 0.0
    %1739 = vmatpush1.msra.mxu0 0.0
    %1740 = vmatprep.subr.mxu0 0.0
    %1741 = vmatpush1.msra.mxu0 0.0
    %1742 = vmatprep.subr.mxu0 0.0
    %1743 = vmatpush1.msra.mxu0 0.0
    %1744 = vmatprep.subr.mxu0 0.0
    %1745 = vmatpush1.msra.mxu0 0.0
    %1746 = vmatprep.subr.mxu0 0.0
    %1747 = vmatpush1.msra.mxu0 0.0
    %1748 = vmatprep.subr.mxu0 0.0
    %1749 = vmatpush1.msra.mxu0 0.0
    %1750 = vmatprep.subr.mxu0 0.0
    %1751 = vmatpush1.msra.mxu0 0.0
    %1752 = vmatprep.subr.mxu0 0.0
    %1753 = vmatpush1.msra.mxu0 0.0
    %1754 = vmatprep.subr.mxu0 0.0
    %1755 = vmatpush1.msra.mxu0 0.0
    %1756 = vmatprep.subr.mxu0 0.0
    %1757 = vmatpush1.msra.mxu0 0.0
    %1758 = vmatprep.subr.mxu0 0.0
    %1759 = vmatpush1.msra.mxu0 0.0
    %1760 = vmatprep.subr.mxu0 0.0
    %1761 = vmatpush1.msra.mxu0 0.0
    %1762 = vmatprep.subr.mxu0 0.0
    %1763 = vmatpush1.msra.mxu0 0.0
    %1764 = vmatprep.subr.mxu0 0.0
    %1765 = vmatpush1.msra.mxu0 0.0
    %1766 = vmatprep.subr.mxu0 0.0
    %1767 = vmatpush1.msra.mxu0 0.0
    %1768 = vmatprep.mubr.f32.mxu0 0.0
    %1769 = vmatmul.mubr.f32.gmra.mrb[0].mxu0 %v1702
    %v1770 = vpop.f32.mrb[0].mxu0
    %v1771 = vadd.f32 0.0, %v1770
    %v1772 = vpop.f32.mrb[0].mxu0
    %v1773 = vadd.f32 0.0, %v1772
    %1774 = vdwg.mxu0
    %v1775 = vadd.f32 %v1697, %v1771
    %v1776 = vadd.f32 %v1698, %v1773
    %v1777 = vmul.f32 %v1775, 0.5
    %v1778 = vtanh.pop %v1777
    %v1779 = vmul.f32 %v1778, 0.5
    %v1780 = vadd.f32 %v1779, 0.5
    %v1781 = vtanh.pop %v1776
    %v1782 = vmul.f32 %v1780, %v1687
    %v1783 = vmul.f32 %v1780, %v1781
    %1785 = vrot.lane.b32.xlu0 %v1783, 64
    %v1786 = vpop.permute.xlu0 %1785
    %v1788 = vadd.f32 %v1782, %v1786
    %v1789 = vmul.f32 %v1776, 0.5
    %v1790 = vtanh.pop %v1789
    %v1791 = vmul.f32 %v1790, 0.5
    %v1792 = vadd.f32 %v1791, 0.5
    %v1793 = vtanh.pop %v1788
    %v1794 = vmul.f32 %v1792, %v1793
    %s1795 = smul.u32 13, 2
    %s1796 = smul.addr %s1795, 8
    %s1797 = scalar_lea.vmem [#allocation2], %s1796
    %v1798 = vld [vmem:[%s1797] sm:$0xff]
    %v1799 = vld [vmem:[%s1797 + $0x8] sm:$0xff]
    %1801 = vrot.lane.b32.xlu0 %v1794, 64
    %v1802 = vpop.permute.xlu0 %1801
    %v1803 = vsel %vm488, %v1802, 0
    %1805 = vmatprep.subr.mxu0 %v468
    %1806 = vmatpush1.msra.mxu0 %v467
    %1807 = vmatprep.subr.mxu0 %v470
    %1808 = vmatpush1.msra.mxu0 %v469
    %1809 = vmatprep.subr.mxu0 %v472
    %1810 = vmatpush1.msra.mxu0 %v471
    %1811 = vmatprep.subr.mxu0 %v474
    %1812 = vmatpush1.msra.mxu0 %v473
    %1813 = vmatprep.subr.mxu0 %v476
    %1814 = vmatpush1.msra.mxu0 %v475
    %1815 = vmatprep.subr.mxu0 %v478
    %1816 = vmatpush1.msra.mxu0 %v477
    %1817 = vmatprep.subr.mxu0 %v480
    %1818 = vmatpush1.msra.mxu0 %v479
    %1819 = vmatprep.subr.mxu0 %v482
    %1820 = vmatpush1.msra.mxu0 %v481
    %1821 = vmatprep.subr.mxu0 0.0
    %1822 = vmatpush1.msra.mxu0 0.0
    %1823 = vmatprep.subr.mxu0 0.0
    %1824 = vmatpush1.msra.mxu0 0.0
    %1825 = vmatprep.subr.mxu0 0.0
    %1826 = vmatpush1.msra.mxu0 0.0
    %1827 = vmatprep.subr.mxu0 0.0
    %1828 = vmatpush1.msra.mxu0 0.0
    %1829 = vmatprep.subr.mxu0 0.0
    %1830 = vmatpush1.msra.mxu0 0.0
    %1831 = vmatprep.subr.mxu0 0.0
    %1832 = vmatpush1.msra.mxu0 0.0
    %1833 = vmatprep.subr.mxu0 0.0
    %1834 = vmatpush1.msra.mxu0 0.0
    %1835 = vmatprep.subr.mxu0 0.0
    %1836 = vmatpush1.msra.mxu0 0.0
    %1837 = vmatprep.subr.mxu0 0.0
    %1838 = vmatpush1.msra.mxu0 0.0
    %1839 = vmatprep.subr.mxu0 0.0
    %1840 = vmatpush1.msra.mxu0 0.0
    %1841 = vmatprep.subr.mxu0 0.0
    %1842 = vmatpush1.msra.mxu0 0.0
    %1843 = vmatprep.subr.mxu0 0.0
    %1844 = vmatpush1.msra.mxu0 0.0
    %1845 = vmatprep.subr.mxu0 0.0
    %1846 = vmatpush1.msra.mxu0 0.0
    %1847 = vmatprep.subr.mxu0 0.0
    %1848 = vmatpush1.msra.mxu0 0.0
    %1849 = vmatprep.subr.mxu0 0.0
    %1850 = vmatpush1.msra.mxu0 0.0
    %1851 = vmatprep.subr.mxu0 0.0
    %1852 = vmatpush1.msra.mxu0 0.0
    %1853 = vmatprep.subr.mxu0 0.0
    %1854 = vmatpush1.msra.mxu0 0.0
    %1855 = vmatprep.subr.mxu0 0.0
    %1856 = vmatpush1.msra.mxu0 0.0
    %1857 = vmatprep.subr.mxu0 0.0
    %1858 = vmatpush1.msra.mxu0 0.0
    %1859 = vmatprep.subr.mxu0 0.0
    %1860 = vmatpush1.msra.mxu0 0.0
    %1861 = vmatprep.subr.mxu0 0.0
    %1862 = vmatpush1.msra.mxu0 0.0
    %1863 = vmatprep.subr.mxu0 0.0
    %1864 = vmatpush1.msra.mxu0 0.0
    %1865 = vmatprep.subr.mxu0 0.0
    %1866 = vmatpush1.msra.mxu0 0.0
    %1867 = vmatprep.subr.mxu0 0.0
    %1868 = vmatpush1.msra.mxu0 0.0
    %1869 = vmatprep.mubr.f32.mxu0 0.0
    %1870 = vmatmul.mubr.f32.gmra.mrb[0].mxu0 %v1803
    %v1871 = vpop.f32.mrb[0].mxu0
    %v1872 = vadd.f32 0.0, %v1871
    %v1873 = vpop.f32.mrb[0].mxu0
    %v1874 = vadd.f32 0.0, %v1873
    %1875 = vdwg.mxu0
    %v1876 = vadd.f32 %v1798, %v1872
    %v1877 = vadd.f32 %v1799, %v1874
    %v1878 = vmul.f32 %v1876, 0.5
    %v1879 = vtanh.pop %v1878
    %v1880 = vmul.f32 %v1879, 0.5
    %v1881 = vadd.f32 %v1880, 0.5
    %v1882 = vtanh.pop %v1877
    %v1883 = vmul.f32 %v1881, %v1788
    %v1884 = vmul.f32 %v1881, %v1882
    %1886 = vrot.lane.b32.xlu0 %v1884, 64
    %v1887 = vpop.permute.xlu0 %1886
    %v1889 = vadd.f32 %v1883, %v1887
    %v1890 = vmul.f32 %v1877, 0.5
    %v1891 = vtanh.pop %v1890
    %v1892 = vmul.f32 %v1891, 0.5
    %v1893 = vadd.f32 %v1892, 0.5
    %v1894 = vtanh.pop %v1889
    %v1895 = vmul.f32 %v1893, %v1894
    %s1896 = smul.u32 14, 2
    %s1897 = smul.addr %s1896, 8
    %s1898 = scalar_lea.vmem [#allocation2], %s1897
    %v1899 = vld [vmem:[%s1898] sm:$0xff]
    %v1900 = vld [vmem:[%s1898 + $0x8] sm:$0xff]
    %1902 = vrot.lane.b32.xlu0 %v1895, 64
    %v1903 = vpop.permute.xlu0 %1902
    %v1904 = vsel %vm488, %v1903, 0
    %1906 = vmatprep.subr.mxu0 %v468
    %1907 = vmatpush1.msra.mxu0 %v467
    %1908 = vmatprep.subr.mxu0 %v470
    %1909 = vmatpush1.msra.mxu0 %v469
    %1910 = vmatprep.subr.mxu0 %v472
    %1911 = vmatpush1.msra.mxu0 %v471
    %1912 = vmatprep.subr.mxu0 %v474
    %1913 = vmatpush1.msra.mxu0 %v473
    %1914 = vmatprep.subr.mxu0 %v476
    %1915 = vmatpush1.msra.mxu0 %v475
    %1916 = vmatprep.subr.mxu0 %v478
    %1917 = vmatpush1.msra.mxu0 %v477
    %1918 = vmatprep.subr.mxu0 %v480
    %1919 = vmatpush1.msra.mxu0 %v479
    %1920 = vmatprep.subr.mxu0 %v482
    %1921 = vmatpush1.msra.mxu0 %v481
    %1922 = vmatprep.subr.mxu0 0.0
    %1923 = vmatpush1.msra.mxu0 0.0
    %1924 = vmatprep.subr.mxu0 0.0
    %1925 = vmatpush1.msra.mxu0 0.0
    %1926 = vmatprep.subr.mxu0 0.0
    %1927 = vmatpush1.msra.mxu0 0.0
    %1928 = vmatprep.subr.mxu0 0.0
    %1929 = vmatpush1.msra.mxu0 0.0
    %1930 = vmatprep.subr.mxu0 0.0
    %1931 = vmatpush1.msra.mxu0 0.0
    %1932 = vmatprep.subr.mxu0 0.0
    %1933 = vmatpush1.msra.mxu0 0.0
    %1934 = vmatprep.subr.mxu0 0.0
    %1935 = vmatpush1.msra.mxu0 0.0
    %1936 = vmatprep.subr.mxu0 0.0
    %1937 = vmatpush1.msra.mxu0 0.0
    %1938 = vmatprep.subr.mxu0 0.0
    %1939 = vmatpush1.msra.mxu0 0.0
    %1940 = vmatprep.subr.mxu0 0.0
    %1941 = vmatpush1.msra.mxu0 0.0
    %1942 = vmatprep.subr.mxu0 0.0
    %1943 = vmatpush1.msra.mxu0 0.0
    %1944 = vmatprep.subr.mxu0 0.0
    %1945 = vmatpush1.msra.mxu0 0.0
    %1946 = vmatprep.subr.mxu0 0.0
    %1947 = vmatpush1.msra.mxu0 0.0
    %1948 = vmatprep.subr.mxu0 0.0
    %1949 = vmatpush1.msra.mxu0 0.0
    %1950 = vmatprep.subr.mxu0 0.0
    %1951 = vmatpush1.msra.mxu0 0.0
    %1952 = vmatprep.subr.mxu0 0.0
    %1953 = vmatpush1.msra.mxu0 0.0
    %1954 = vmatprep.subr.mxu0 0.0
    %1955 = vmatpush1.msra.mxu0 0.0
    %1956 = vmatprep.subr.mxu0 0.0
    %1957 = vmatpush1.msra.mxu0 0.0
    %1958 = vmatprep.subr.mxu0 0.0
    %1959 = vmatpush1.msra.mxu0 0.0
    %1960 = vmatprep.subr.mxu0 0.0
    %1961 = vmatpush1.msra.mxu0 0.0
    %1962 = vmatprep.subr.mxu0 0.0
    %1963 = vmatpush1.msra.mxu0 0.0
    %1964 = vmatprep.subr.mxu0 0.0
    %1965 = vmatpush1.msra.mxu0 0.0
    %1966 = vmatprep.subr.mxu0 0.0
    %1967 = vmatpush1.msra.mxu0 0.0
    %1968 = vmatprep.subr.mxu0 0.0
    %1969 = vmatpush1.msra.mxu0 0.0
    %1970 = vmatprep.mubr.f32.mxu0 0.0
    %1971 = vmatmul.mubr.f32.gmra.mrb[0].mxu0 %v1904
    %v1972 = vpop.f32.mrb[0].mxu0
    %v1973 = vadd.f32 0.0, %v1972
    %v1974 = vpop.f32.mrb[0].mxu0
    %v1975 = vadd.f32 0.0, %v1974
    %1976 = vdwg.mxu0
    %v1977 = vadd.f32 %v1899, %v1973
    %v1978 = vadd.f32 %v1900, %v1975
    %v1979 = vmul.f32 %v1977, 0.5
    %v1980 = vtanh.pop %v1979
    %v1981 = vmul.f32 %v1980, 0.5
    %v1982 = vadd.f32 %v1981, 0.5
    %v1983 = vtanh.pop %v1978
    %v1984 = vmul.f32 %v1982, %v1889
    %v1985 = vmul.f32 %v1982, %v1983
    %1987 = vrot.lane.b32.xlu0 %v1985, 64
    %v1988 = vpop.permute.xlu0 %1987
    %v1990 = vadd.f32 %v1984, %v1988
    %v1991 = vmul.f32 %v1978, 0.5
    %v1992 = vtanh.pop %v1991
    %v1993 = vmul.f32 %v1992, 0.5
    %v1994 = vadd.f32 %v1993, 0.5
    %v1995 = vtanh.pop %v1990
    %v1996 = vmul.f32 %v1994, %v1995
    %s1997 = smul.u32 15, 2
    %s1998 = smul.addr %s1997, 8
    %s1999 = scalar_lea.vmem [#allocation2], %s1998
    %v2000 = vld [vmem:[%s1999] sm:$0xff]
    %v2001 = vld [vmem:[%s1999 + $0x8] sm:$0xff]
    %2003 = vrot.lane.b32.xlu0 %v1996, 64
    %v2004 = vpop.permute.xlu0 %2003
    %v2005 = vsel %vm488, %v2004, 0
    %2007 = vmatprep.subr.mxu0 %v468
    %2008 = vmatpush1.msra.mxu0 %v467
    %2009 = vmatprep.subr.mxu0 %v470
    %2010 = vmatpush1.msra.mxu0 %v469
    %2011 = vmatprep.subr.mxu0 %v472
    %2012 = vmatpush1.msra.mxu0 %v471
    %2013 = vmatprep.subr.mxu0 %v474
    %2014 = vmatpush1.msra.mxu0 %v473
    %2015 = vmatprep.subr.mxu0 %v476
    %2016 = vmatpush1.msra.mxu0 %v475
    %2017 = vmatprep.subr.mxu0 %v478
    %2018 = vmatpush1.msra.mxu0 %v477
    %2019 = vmatprep.subr.mxu0 %v480
    %2020 = vmatpush1.msra.mxu0 %v479
    %2021 = vmatprep.subr.mxu0 %v482
    %2022 = vmatpush1.msra.mxu0 %v481
    %2023 = vmatprep.subr.mxu0 0.0
    %2024 = vmatpush1.msra.mxu0 0.0
    %2025 = vmatprep.subr.mxu0 0.0
    %2026 = vmatpush1.msra.mxu0 0.0
    %2027 = vmatprep.subr.mxu0 0.0
    %2028 = vmatpush1.msra.mxu0 0.0
    %2029 = vmatprep.subr.mxu0 0.0
    %2030 = vmatpush1.msra.mxu0 0.0
    %2031 = vmatprep.subr.mxu0 0.0
    %2032 = vmatpush1.msra.mxu0 0.0
    %2033 = vmatprep.subr.mxu0 0.0
    %2034 = vmatpush1.msra.mxu0 0.0
    %2035 = vmatprep.subr.mxu0 0.0
    %2036 = vmatpush1.msra.mxu0 0.0
    %2037 = vmatprep.subr.mxu0 0.0
    %2038 = vmatpush1.msra.mxu0 0.0
    %2039 = vmatprep.subr.mxu0 0.0
    %2040 = vmatpush1.msra.mxu0 0.0
    %2041 = vmatprep.subr.mxu0 0.0
    %2042 = vmatpush1.msra.mxu0 0.0
    %2043 = vmatprep.subr.mxu0 0.0
    %2044 = vmatpush1.msra.mxu0 0.0
    %2045 = vmatprep.subr.mxu0 0.0
    %2046 = vmatpush1.msra.mxu0 0.0
    %2047 = vmatprep.subr.mxu0 0.0
    %2048 = vmatpush1.msra.mxu0 0.0
    %2049 = vmatprep.subr.mxu0 0.0
    %2050 = vmatpush1.msra.mxu0 0.0
    %2051 = vmatprep.subr.mxu0 0.0
    %2052 = vmatpush1.msra.mxu0 0.0
    %2053 = vmatprep.subr.mxu0 0.0
    %2054 = vmatpush1.msra.mxu0 0.0
    %2055 = vmatprep.subr.mxu0 0.0
    %2056 = vmatpush1.msra.mxu0 0.0
    %2057 = vmatprep.subr.mxu0 0.0
    %2058 = vmatpush1.msra.mxu0 0.0
    %2059 = vmatprep.subr.mxu0 0.0
    %2060 = vmatpush1.msra.mxu0 0.0
    %2061 = vmatprep.subr.mxu0 0.0
    %2062 = vmatpush1.msra.mxu0 0.0
    %2063 = vmatprep.subr.mxu0 0.0
    %2064 = vmatpush1.msra.mxu0 0.0
    %2065 = vmatprep.subr.mxu0 0.0
    %2066 = vmatpush1.msra.mxu0 0.0
    %2067 = vmatprep.subr.mxu0 0.0
    %2068 = vmatpush1.msra.mxu0 0.0
    %2069 = vmatprep.subr.mxu0 0.0
    %2070 = vmatpush1.msra.mxu0 0.0
    %2071 = vmatprep.mubr.f32.mxu0 0.0
    %2072 = vmatmul.mubr.f32.gmra.mrb[0].mxu0 %v2005
    %v2073 = vpop.f32.mrb[0].mxu0
    %v2074 = vadd.f32 0.0, %v2073
    %v2075 = vpop.f32.mrb[0].mxu0
    %v2076 = vadd.f32 0.0, %v2075
    %2077 = vdwg.mxu0
    %v2078 = vadd.f32 %v2000, %v2074
    %v2079 = vadd.f32 %v2001, %v2076
    %v2080 = vmul.f32 %v2078, 0.5
    %v2081 = vtanh.pop %v2080
    %v2082 = vmul.f32 %v2081, 0.5
    %v2083 = vadd.f32 %v2082, 0.5
    %v2084 = vtanh.pop %v2079
    %v2085 = vmul.f32 %v2083, %v1990
    %v2086 = vmul.f32 %v2083, %v2084
    %2088 = vrot.lane.b32.xlu0 %v2086, 64
    %v2089 = vpop.permute.xlu0 %2088
    %v2091 = vadd.f32 %v2085, %v2089
    %v2092 = vmul.f32 %v2079, 0.5
    %v2093 = vtanh.pop %v2092
    %v2094 = vmul.f32 %v2093, 0.5
    %v2095 = vadd.f32 %v2094, 0.5
    %v2096 = vtanh.pop %v2091
    %v2097 = vmul.f32 %v2095, %v2096
    %s2098 = smul.u32 16, 2
    %s2099 = smul.addr %s2098, 8
    %s2100 = scalar_lea.vmem [#allocation2], %s2099
    %v2101 = vld [vmem:[%s2100] sm:$0xff]
    %v2102 = vld [vmem:[%s2100 + $0x8] sm:$0xff]
    %2104 = vrot.lane.b32.xlu0 %v2097, 64
    %v2105 = vpop.permute.xlu0 %2104
    %v2106 = vsel %vm488, %v2105, 0
    %2108 = vmatprep.subr.mxu0 %v468
    %2109 = vmatpush1.msra.mxu0 %v467
    %2110 = vmatprep.subr.mxu0 %v470
    %2111 = vmatpush1.msra.mxu0 %v469
    %2112 = vmatprep.subr.mxu0 %v472
    %2113 = vmatpush1.msra.mxu0 %v471
    %2114 = vmatprep.subr.mxu0 %v474
    %2115 = vmatpush1.msra.mxu0 %v473
    %2116 = vmatprep.subr.mxu0 %v476
    %2117 = vmatpush1.msra.mxu0 %v475
    %2118 = vmatprep.subr.mxu0 %v478
    %2119 = vmatpush1.msra.mxu0 %v477
    %2120 = vmatprep.subr.mxu0 %v480
    %2121 = vmatpush1.msra.mxu0 %v479
    %2122 = vmatprep.subr.mxu0 %v482
    %2123 = vmatpush1.msra.mxu0 %v481
    %2124 = vmatprep.subr.mxu0 0.0
    %2125 = vmatpush1.msra.mxu0 0.0
    %2126 = vmatprep.subr.mxu0 0.0
    %2127 = vmatpush1.msra.mxu0 0.0
    %2128 = vmatprep.subr.mxu0 0.0
    %2129 = vmatpush1.msra.mxu0 0.0
    %2130 = vmatprep.subr.mxu0 0.0
    %2131 = vmatpush1.msra.mxu0 0.0
    %2132 = vmatprep.subr.mxu0 0.0
    %2133 = vmatpush1.msra.mxu0 0.0
    %2134 = vmatprep.subr.mxu0 0.0
    %2135 = vmatpush1.msra.mxu0 0.0
    %2136 = vmatprep.subr.mxu0 0.0
    %2137 = vmatpush1.msra.mxu0 0.0
    %2138 = vmatprep.subr.mxu0 0.0
    %2139 = vmatpush1.msra.mxu0 0.0
    %2140 = vmatprep.subr.mxu0 0.0
    %2141 = vmatpush1.msra.mxu0 0.0
    %2142 = vmatprep.subr.mxu0 0.0
    %2143 = vmatpush1.msra.mxu0 0.0
    %2144 = vmatprep.subr.mxu0 0.0
    %2145 = vmatpush1.msra.mxu0 0.0
    %2146 = vmatprep.subr.mxu0 0.0
    %2147 = vmatpush1.msra.mxu0 0.0
    %2148 = vmatprep.subr.mxu0 0.0
    %2149 = vmatpush1.msra.mxu0 0.0
    %2150 = vmatprep.subr.mxu0 0.0
    %2151 = vmatpush1.msra.mxu0 0.0
    %2152 = vmatprep.subr.mxu0 0.0
    %2153 = vmatpush1.msra.mxu0 0.0
    %2154 = vmatprep.subr.mxu0 0.0
    %2155 = vmatpush1.msra.mxu0 0.0
    %2156 = vmatprep.subr.mxu0 0.0
    %2157 = vmatpush1.msra.mxu0 0.0
    %2158 = vmatprep.subr.mxu0 0.0
    %2159 = vmatpush1.msra.mxu0 0.0
    %2160 = vmatprep.subr.mxu0 0.0
    %2161 = vmatpush1.msra.mxu0 0.0
    %2162 = vmatprep.subr.mxu0 0.0
    %2163 = vmatpush1.msra.mxu0 0.0
    %2164 = vmatprep.subr.mxu0 0.0
    %2165 = vmatpush1.msra.mxu0 0.0
    %2166 = vmatprep.subr.mxu0 0.0
    %2167 = vmatpush1.msra.mxu0 0.0
    %2168 = vmatprep.subr.mxu0 0.0
    %2169 = vmatpush1.msra.mxu0 0.0
    %2170 = vmatprep.subr.mxu0 0.0
    %2171 = vmatpush1.msra.mxu0 0.0
    %2172 = vmatprep.mubr.f32.mxu0 0.0
    %2173 = vmatmul.mubr.f32.gmra.mrb[0].mxu0 %v2106
    %v2174 = vpop.f32.mrb[0].mxu0
    %v2175 = vadd.f32 0.0, %v2174
    %v2176 = vpop.f32.mrb[0].mxu0
    %v2177 = vadd.f32 0.0, %v2176
    %2178 = vdwg.mxu0
    %v2179 = vadd.f32 %v2101, %v2175
    %v2180 = vadd.f32 %v2102, %v2177
    %v2181 = vmul.f32 %v2179, 0.5
    %v2182 = vtanh.pop %v2181
    %v2183 = vmul.f32 %v2182, 0.5
    %v2184 = vadd.f32 %v2183, 0.5
    %v2185 = vtanh.pop %v2180
    %v2186 = vmul.f32 %v2184, %v2091
    %v2187 = vmul.f32 %v2184, %v2185
    %2189 = vrot.lane.b32.xlu0 %v2187, 64
    %v2190 = vpop.permute.xlu0 %2189
    %v2192 = vadd.f32 %v2186, %v2190
    %v2193 = vmul.f32 %v2180, 0.5
    %v2194 = vtanh.pop %v2193
    %v2195 = vmul.f32 %v2194, 0.5
    %v2196 = vadd.f32 %v2195, 0.5
    %v2197 = vtanh.pop %v2192
    %v2198 = vmul.f32 %v2196, %v2197
    %s2199 = smul.u32 17, 2
    %s2200 = smul.addr %s2199, 8
    %s2201 = scalar_lea.vmem [#allocation2], %s2200
    %v2202 = vld [vmem:[%s2201] sm:$0xff]
    %v2203 = vld [vmem:[%s2201 + $0x8] sm:$0xff]
    %2205 = vrot.lane.b32.xlu0 %v2198, 64
    %v2206 = vpop.permute.xlu0 %2205
    %v2207 = vsel %vm488, %v2206, 0
    %2209 = vmatprep.subr.mxu0 %v468
    %2210 = vmatpush1.msra.mxu0 %v467
    %2211 = vmatprep.subr.mxu0 %v470
    %2212 = vmatpush1.msra.mxu0 %v469
    %2213 = vmatprep.subr.mxu0 %v472
    %2214 = vmatpush1.msra.mxu0 %v471
    %2215 = vmatprep.subr.mxu0 %v474
    %2216 = vmatpush1.msra.mxu0 %v473
    %2217 = vmatprep.subr.mxu0 %v476
    %2218 = vmatpush1.msra.mxu0 %v475
    %2219 = vmatprep.subr.mxu0 %v478
    %2220 = vmatpush1.msra.mxu0 %v477
    %2221 = vmatprep.subr.mxu0 %v480
    %2222 = vmatpush1.msra.mxu0 %v479
    %2223 = vmatprep.subr.mxu0 %v482
    %2224 = vmatpush1.msra.mxu0 %v481
    %2225 = vmatprep.subr.mxu0 0.0
    %2226 = vmatpush1.msra.mxu0 0.0
    %2227 = vmatprep.subr.mxu0 0.0
    %2228 = vmatpush1.msra.mxu0 0.0
    %2229 = vmatprep.subr.mxu0 0.0
    %2230 = vmatpush1.msra.mxu0 0.0
    %2231 = vmatprep.subr.mxu0 0.0
    %2232 = vmatpush1.msra.mxu0 0.0
    %2233 = vmatprep.subr.mxu0 0.0
    %2234 = vmatpush1.msra.mxu0 0.0
    %2235 = vmatprep.subr.mxu0 0.0
    %2236 = vmatpush1.msra.mxu0 0.0
    %2237 = vmatprep.subr.mxu0 0.0
    %2238 = vmatpush1.msra.mxu0 0.0
    %2239 = vmatprep.subr.mxu0 0.0
    %2240 = vmatpush1.msra.mxu0 0.0
    %2241 = vmatprep.subr.mxu0 0.0
    %2242 = vmatpush1.msra.mxu0 0.0
    %2243 = vmatprep.subr.mxu0 0.0
    %2244 = vmatpush1.msra.mxu0 0.0
    %2245 = vmatprep.subr.mxu0 0.0
    %2246 = vmatpush1.msra.mxu0 0.0
    %2247 = vmatprep.subr.mxu0 0.0
    %2248 = vmatpush1.msra.mxu0 0.0
    %2249 = vmatprep.subr.mxu0 0.0
    %2250 = vmatpush1.msra.mxu0 0.0
    %2251 = vmatprep.subr.mxu0 0.0
    %2252 = vmatpush1.msra.mxu0 0.0
    %2253 = vmatprep.subr.mxu0 0.0
    %2254 = vmatpush1.msra.mxu0 0.0
    %2255 = vmatprep.subr.mxu0 0.0
    %2256 = vmatpush1.msra.mxu0 0.0
    %2257 = vmatprep.subr.mxu0 0.0
    %2258 = vmatpush1.msra.mxu0 0.0
    %2259 = vmatprep.subr.mxu0 0.0
    %2260 = vmatpush1.msra.mxu0 0.0
    %2261 = vmatprep.subr.mxu0 0.0
    %2262 = vmatpush1.msra.mxu0 0.0
    %2263 = vmatprep.subr.mxu0 0.0
    %2264 = vmatpush1.msra.mxu0 0.0
    %2265 = vmatprep.subr.mxu0 0.0
    %2266 = vmatpush1.msra.mxu0 0.0
    %2267 = vmatprep.subr.mxu0 0.0
    %2268 = vmatpush1.msra.mxu0 0.0
    %2269 = vmatprep.subr.mxu0 0.0
    %2270 = vmatpush1.msra.mxu0 0.0
    %2271 = vmatprep.subr.mxu0 0.0
    %2272 = vmatpush1.msra.mxu0 0.0
    %2273 = vmatprep.mubr.f32.mxu0 0.0
    %2274 = vmatmul.mubr.f32.gmra.mrb[0].mxu0 %v2207
    %v2275 = vpop.f32.mrb[0].mxu0
    %v2276 = vadd.f32 0.0, %v2275
    %v2277 = vpop.f32.mrb[0].mxu0
    %v2278 = vadd.f32 0.0, %v2277
    %2279 = vdwg.mxu0
    %v2280 = vadd.f32 %v2202, %v2276
    %v2281 = vadd.f32 %v2203, %v2278
    %v2282 = vmul.f32 %v2280, 0.5
    %v2283 = vtanh.pop %v2282
    %v2284 = vmul.f32 %v2283, 0.5
    %v2285 = vadd.f32 %v2284, 0.5
    %v2286 = vtanh.pop %v2281
    %v2287 = vmul.f32 %v2285, %v2192
    %v2288 = vmul.f32 %v2285, %v2286
    %2290 = vrot.lane.b32.xlu0 %v2288, 64
    %v2291 = vpop.permute.xlu0 %2290
    %v2293 = vadd.f32 %v2287, %v2291
    %v2294 = vmul.f32 %v2281, 0.5
    %v2295 = vtanh.pop %v2294
    %v2296 = vmul.f32 %v2295, 0.5
    %v2297 = vadd.f32 %v2296, 0.5
    %v2298 = vtanh.pop %v2293
    %v2299 = vmul.f32 %v2297, %v2298
    %s2300 = smul.u32 18, 2
    %s2301 = smul.addr %s2300, 8
    %s2302 = scalar_lea.vmem [#allocation2], %s2301
    %v2303 = vld [vmem:[%s2302] sm:$0xff]
    %v2304 = vld [vmem:[%s2302 + $0x8] sm:$0xff]
    %2306 = vrot.lane.b32.xlu0 %v2299, 64
    %v2307 = vpop.permute.xlu0 %2306
    %v2308 = vsel %vm488, %v2307, 0
    %2310 = vmatprep.subr.mxu0 %v468
    %2311 = vmatpush1.msra.mxu0 %v467
    %2312 = vmatprep.subr.mxu0 %v470
    %2313 = vmatpush1.msra.mxu0 %v469
    %2314 = vmatprep.subr.mxu0 %v472
    %2315 = vmatpush1.msra.mxu0 %v471
    %2316 = vmatprep.subr.mxu0 %v474
    %2317 = vmatpush1.msra.mxu0 %v473
    %2318 = vmatprep.subr.mxu0 %v476
    %2319 = vmatpush1.msra.mxu0 %v475
    %2320 = vmatprep.subr.mxu0 %v478
    %2321 = vmatpush1.msra.mxu0 %v477
    %2322 = vmatprep.subr.mxu0 %v480
    %2323 = vmatpush1.msra.mxu0 %v479
    %2324 = vmatprep.subr.mxu0 %v482
    %2325 = vmatpush1.msra.mxu0 %v481
    %2326 = vmatprep.subr.mxu0 0.0
    %2327 = vmatpush1.msra.mxu0 0.0
    %2328 = vmatprep.subr.mxu0 0.0
    %2329 = vmatpush1.msra.mxu0 0.0
    %2330 = vmatprep.subr.mxu0 0.0
    %2331 = vmatpush1.msra.mxu0 0.0
    %2332 = vmatprep.subr.mxu0 0.0
    %2333 = vmatpush1.msra.mxu0 0.0
    %2334 = vmatprep.subr.mxu0 0.0
    %2335 = vmatpush1.msra.mxu0 0.0
    %2336 = vmatprep.subr.mxu0 0.0
    %2337 = vmatpush1.msra.mxu0 0.0
    %2338 = vmatprep.subr.mxu0 0.0
    %2339 = vmatpush1.msra.mxu0 0.0
    %2340 = vmatprep.subr.mxu0 0.0
    %2341 = vmatpush1.msra.mxu0 0.0
    %2342 = vmatprep.subr.mxu0 0.0
    %2343 = vmatpush1.msra.mxu0 0.0
    %2344 = vmatprep.subr.mxu0 0.0
    %2345 = vmatpush1.msra.mxu0 0.0
    %2346 = vmatprep.subr.mxu0 0.0
    %2347 = vmatpush1.msra.mxu0 0.0
    %2348 = vmatprep.subr.mxu0 0.0
    %2349 = vmatpush1.msra.mxu0 0.0
    %2350 = vmatprep.subr.mxu0 0.0
    %2351 = vmatpush1.msra.mxu0 0.0
    %2352 = vmatprep.subr.mxu0 0.0
    %2353 = vmatpush1.msra.mxu0 0.0
    %2354 = vmatprep.subr.mxu0 0.0
    %2355 = vmatpush1.msra.mxu0 0.0
    %2356 = vmatprep.subr.mxu0 0.0
    %2357 = vmatpush1.msra.mxu0 0.0
    %2358 = vmatprep.subr.mxu0 0.0
    %2359 = vmatpush1.msra.mxu0 0.0
    %2360 = vmatprep.subr.mxu0 0.0
    %2361 = vmatpush1.msra.mxu0 0.0
    %2362 = vmatprep.subr.mxu0 0.0
    %2363 = vmatpush1.msra.mxu0 0.0
    %2364 = vmatprep.subr.mxu0 0.0
    %2365 = vmatpush1.msra.mxu0 0.0
    %2366 = vmatprep.subr.mxu0 0.0
    %2367 = vmatpush1.msra.mxu0 0.0
    %2368 = vmatprep.subr.mxu0 0.0
    %2369 = vmatpush1.msra.mxu0 0.0
    %2370 = vmatprep.subr.mxu0 0.0
    %2371 = vmatpush1.msra.mxu0 0.0
    %2372 = vmatprep.subr.mxu0 0.0
    %2373 = vmatpush1.msra.mxu0 0.0
    %2374 = vmatprep.mubr.f32.mxu0 0.0
    %2375 = vmatmul.mubr.f32.gmra.mrb[0].mxu0 %v2308
    %v2376 = vpop.f32.mrb[0].mxu0
    %v2377 = vadd.f32 0.0, %v2376
    %v2378 = vpop.f32.mrb[0].mxu0
    %v2379 = vadd.f32 0.0, %v2378
    %2380 = vdwg.mxu0
    %v2381 = vadd.f32 %v2303, %v2377
    %v2382 = vadd.f32 %v2304, %v2379
    %v2383 = vmul.f32 %v2381, 0.5
    %v2384 = vtanh.pop %v2383
    %v2385 = vmul.f32 %v2384, 0.5
    %v2386 = vadd.f32 %v2385, 0.5
    %v2387 = vtanh.pop %v2382
    %v2388 = vmul.f32 %v2386, %v2293
    %v2389 = vmul.f32 %v2386, %v2387
    %2391 = vrot.lane.b32.xlu0 %v2389, 64
    %v2392 = vpop.permute.xlu0 %2391
    %v2394 = vadd.f32 %v2388, %v2392
    %v2395 = vmul.f32 %v2382, 0.5
    %v2396 = vtanh.pop %v2395
    %v2397 = vmul.f32 %v2396, 0.5
    %v2398 = vadd.f32 %v2397, 0.5
    %v2399 = vtanh.pop %v2394
    %v2400 = vmul.f32 %v2398, %v2399
    %s2401 = smul.u32 19, 2
    %s2402 = smul.addr %s2401, 8
    %s2403 = scalar_lea.vmem [#allocation2], %s2402
    %v2404 = vld [vmem:[%s2403] sm:$0xff]
    %v2405 = vld [vmem:[%s2403 + $0x8] sm:$0xff]
    %2407 = vrot.lane.b32.xlu0 %v2400, 64
    %v2408 = vpop.permute.xlu0 %2407
    %v2409 = vsel %vm488, %v2408, 0
    %2411 = vmatprep.subr.mxu0 %v468
    %2412 = vmatpush1.msra.mxu0 %v467
    %2413 = vmatprep.subr.mxu0 %v470
    %2414 = vmatpush1.msra.mxu0 %v469
    %2415 = vmatprep.subr.mxu0 %v472
    %2416 = vmatpush1.msra.mxu0 %v471
    %2417 = vmatprep.subr.mxu0 %v474
    %2418 = vmatpush1.msra.mxu0 %v473
    %2419 = vmatprep.subr.mxu0 %v476
    %2420 = vmatpush1.msra.mxu0 %v475
    %2421 = vmatprep.subr.mxu0 %v478
    %2422 = vmatpush1.msra.mxu0 %v477
    %2423 = vmatprep.subr.mxu0 %v480
    %2424 = vmatpush1.msra.mxu0 %v479
    %2425 = vmatprep.subr.mxu0 %v482
    %2426 = vmatpush1.msra.mxu0 %v481
    %2427 = vmatprep.subr.mxu0 0.0
    %2428 = vmatpush1.msra.mxu0 0.0
    %2429 = vmatprep.subr.mxu0 0.0
    %2430 = vmatpush1.msra.mxu0 0.0
    %2431 = vmatprep.subr.mxu0 0.0
    %2432 = vmatpush1.msra.mxu0 0.0
    %2433 = vmatprep.subr.mxu0 0.0
    %2434 = vmatpush1.msra.mxu0 0.0
    %2435 = vmatprep.subr.mxu0 0.0
    %2436 = vmatpush1.msra.mxu0 0.0
    %2437 = vmatprep.subr.mxu0 0.0
    %2438 = vmatpush1.msra.mxu0 0.0
    %2439 = vmatprep.subr.mxu0 0.0
    %2440 = vmatpush1.msra.mxu0 0.0
    %2441 = vmatprep.subr.mxu0 0.0
    %2442 = vmatpush1.msra.mxu0 0.0
    %2443 = vmatprep.subr.mxu0 0.0
    %2444 = vmatpush1.msra.mxu0 0.0
    %2445 = vmatprep.subr.mxu0 0.0
    %2446 = vmatpush1.msra.mxu0 0.0
    %2447 = vmatprep.subr.mxu0 0.0
    %2448 = vmatpush1.msra.mxu0 0.0
    %2449 = vmatprep.subr.mxu0 0.0
    %2450 = vmatpush1.msra.mxu0 0.0
    %2451 = vmatprep.subr.mxu0 0.0
    %2452 = vmatpush1.msra.mxu0 0.0
    %2453 = vmatprep.subr.mxu0 0.0
    %2454 = vmatpush1.msra.mxu0 0.0
    %2455 = vmatprep.subr.mxu0 0.0
    %2456 = vmatpush1.msra.mxu0 0.0
    %2457 = vmatprep.subr.mxu0 0.0
    %2458 = vmatpush1.msra.mxu0 0.0
    %2459 = vmatprep.subr.mxu0 0.0
    %2460 = vmatpush1.msra.mxu0 0.0
    %2461 = vmatprep.subr.mxu0 0.0
    %2462 = vmatpush1.msra.mxu0 0.0
    %2463 = vmatprep.subr.mxu0 0.0
    %2464 = vmatpush1.msra.mxu0 0.0
    %2465 = vmatprep.subr.mxu0 0.0
    %2466 = vmatpush1.msra.mxu0 0.0
    %2467 = vmatprep.subr.mxu0 0.0
    %2468 = vmatpush1.msra.mxu0 0.0
    %2469 = vmatprep.subr.mxu0 0.0
    %2470 = vmatpush1.msra.mxu0 0.0
    %2471 = vmatprep.subr.mxu0 0.0
    %2472 = vmatpush1.msra.mxu0 0.0
    %2473 = vmatprep.subr.mxu0 0.0
    %2474 = vmatpush1.msra.mxu0 0.0
    %2475 = vmatprep.mubr.f32.mxu0 0.0
    %2476 = vmatmul.mubr.f32.gmra.mrb[0].mxu0 %v2409
    %v2477 = vpop.f32.mrb[0].mxu0
    %v2478 = vadd.f32 0.0, %v2477
    %v2479 = vpop.f32.mrb[0].mxu0
    %v2480 = vadd.f32 0.0, %v2479
    %2481 = vdwg.mxu0
    %v2482 = vadd.f32 %v2404, %v2478
    %v2483 = vadd.f32 %v2405, %v2480
    %v2484 = vmul.f32 %v2482, 0.5
    %v2485 = vtanh.pop %v2484
    %v2486 = vmul.f32 %v2485, 0.5
    %v2487 = vadd.f32 %v2486, 0.5
    %v2488 = vtanh.pop %v2483
    %v2489 = vmul.f32 %v2487, %v2394
    %v2490 = vmul.f32 %v2487, %v2488
    %2492 = vrot.lane.b32.xlu0 %v2490, 64
    %v2493 = vpop.permute.xlu0 %2492
    %v2495 = vadd.f32 %v2489, %v2493
    %v2496 = vmul.f32 %v2483, 0.5
    %v2497 = vtanh.pop %v2496
    %v2498 = vmul.f32 %v2497, 0.5
    %v2499 = vadd.f32 %v2498, 0.5
    %v2500 = vtanh.pop %v2495
    %v2501 = vmul.f32 %v2499, %v2500
    %s2502 = smul.u32 20, 2
    %s2503 = smul.addr %s2502, 8
    %s2504 = scalar_lea.vmem [#allocation2], %s2503
    %v2505 = vld [vmem:[%s2504] sm:$0xff]
    %v2506 = vld [vmem:[%s2504 + $0x8] sm:$0xff]
    %2508 = vrot.lane.b32.xlu0 %v2501, 64
    %v2509 = vpop.permute.xlu0 %2508
    %v2510 = vsel %vm488, %v2509, 0
    %2512 = vmatprep.subr.mxu0 %v468
    %2513 = vmatpush1.msra.mxu0 %v467
    %2514 = vmatprep.subr.mxu0 %v470
    %2515 = vmatpush1.msra.mxu0 %v469
    %2516 = vmatprep.subr.mxu0 %v472
    %2517 = vmatpush1.msra.mxu0 %v471
    %2518 = vmatprep.subr.mxu0 %v474
    %2519 = vmatpush1.msra.mxu0 %v473
    %2520 = vmatprep.subr.mxu0 %v476
    %2521 = vmatpush1.msra.mxu0 %v475
    %2522 = vmatprep.subr.mxu0 %v478
    %2523 = vmatpush1.msra.mxu0 %v477
    %2524 = vmatprep.subr.mxu0 %v480
    %2525 = vmatpush1.msra.mxu0 %v479
    %2526 = vmatprep.subr.mxu0 %v482
    %2527 = vmatpush1.msra.mxu0 %v481
    %2528 = vmatprep.subr.mxu0 0.0
    %2529 = vmatpush1.msra.mxu0 0.0
    %2530 = vmatprep.subr.mxu0 0.0
    %2531 = vmatpush1.msra.mxu0 0.0
    %2532 = vmatprep.subr.mxu0 0.0
    %2533 = vmatpush1.msra.mxu0 0.0
    %2534 = vmatprep.subr.mxu0 0.0
    %2535 = vmatpush1.msra.mxu0 0.0
    %2536 = vmatprep.subr.mxu0 0.0
    %2537 = vmatpush1.msra.mxu0 0.0
    %2538 = vmatprep.subr.mxu0 0.0
    %2539 = vmatpush1.msra.mxu0 0.0
    %2540 = vmatprep.subr.mxu0 0.0
    %2541 = vmatpush1.msra.mxu0 0.0
    %2542 = vmatprep.subr.mxu0 0.0
    %2543 = vmatpush1.msra.mxu0 0.0
    %2544 = vmatprep.subr.mxu0 0.0
    %2545 = vmatpush1.msra.mxu0 0.0
    %2546 = vmatprep.subr.mxu0 0.0
    %2547 = vmatpush1.msra.mxu0 0.0
    %2548 = vmatprep.subr.mxu0 0.0
    %2549 = vmatpush1.msra.mxu0 0.0
    %2550 = vmatprep.subr.mxu0 0.0
    %2551 = vmatpush1.msra.mxu0 0.0
    %2552 = vmatprep.subr.mxu0 0.0
    %2553 = vmatpush1.msra.mxu0 0.0
    %2554 = vmatprep.subr.mxu0 0.0
    %2555 = vmatpush1.msra.mxu0 0.0
    %2556 = vmatprep.subr.mxu0 0.0
    %2557 = vmatpush1.msra.mxu0 0.0
    %2558 = vmatprep.subr.mxu0 0.0
    %2559 = vmatpush1.msra.mxu0 0.0
    %2560 = vmatprep.subr.mxu0 0.0
    %2561 = vmatpush1.msra.mxu0 0.0
    %2562 = vmatprep.subr.mxu0 0.0
    %2563 = vmatpush1.msra.mxu0 0.0
    %2564 = vmatprep.subr.mxu0 0.0
    %2565 = vmatpush1.msra.mxu0 0.0
    %2566 = vmatprep.subr.mxu0 0.0
    %2567 = vmatpush1.msra.mxu0 0.0
    %2568 = vmatprep.subr.mxu0 0.0
    %2569 = vmatpush1.msra.mxu0 0.0
    %2570 = vmatprep.subr.mxu0 0.0
    %2571 = vmatpush1.msra.mxu0 0.0
    %2572 = vmatprep.subr.mxu0 0.0
    %2573 = vmatpush1.msra.mxu0 0.0
    %2574 = vmatprep.subr.mxu0 0.0
    %2575 = vmatpush1.msra.mxu0 0.0
    %2576 = vmatprep.mubr.f32.mxu0 0.0
    %2577 = vmatmul.mubr.f32.gmra.mrb[0].mxu0 %v2510
    %v2578 = vpop.f32.mrb[0].mxu0
    %v2579 = vadd.f32 0.0, %v2578
    %v2580 = vpop.f32.mrb[0].mxu0
    %v2581 = vadd.f32 0.0, %v2580
    %2582 = vdwg.mxu0
    %v2583 = vadd.f32 %v2505, %v2579
    %v2584 = vadd.f32 %v2506, %v2581
    %v2585 = vmul.f32 %v2583, 0.5
    %v2586 = vtanh.pop %v2585
    %v2587 = vmul.f32 %v2586, 0.5
    %v2588 = vadd.f32 %v2587, 0.5
    %v2589 = vtanh.pop %v2584
    %v2590 = vmul.f32 %v2588, %v2495
    %v2591 = vmul.f32 %v2588, %v2589
    %2593 = vrot.lane.b32.xlu0 %v2591, 64
    %v2594 = vpop.permute.xlu0 %2593
    %v2596 = vadd.f32 %v2590, %v2594
    %v2597 = vmul.f32 %v2584, 0.5
    %v2598 = vtanh.pop %v2597
    %v2599 = vmul.f32 %v2598, 0.5
    %v2600 = vadd.f32 %v2599, 0.5
    %v2601 = vtanh.pop %v2596
    %v2602 = vmul.f32 %v2600, %v2601
    %s2603 = smul.u32 21, 2
    %s2604 = smul.addr %s2603, 8
    %s2605 = scalar_lea.vmem [#allocation2], %s2604
    %v2606 = vld [vmem:[%s2605] sm:$0xff]
    %v2607 = vld [vmem:[%s2605 + $0x8] sm:$0xff]
    %2609 = vrot.lane.b32.xlu0 %v2602, 64
    %v2610 = vpop.permute.xlu0 %2609
    %v2611 = vsel %vm488, %v2610, 0
    %2613 = vmatprep.subr.mxu0 %v468
    %2614 = vmatpush1.msra.mxu0 %v467
    %2615 = vmatprep.subr.mxu0 %v470
    %2616 = vmatpush1.msra.mxu0 %v469
    %2617 = vmatprep.subr.mxu0 %v472
    %2618 = vmatpush1.msra.mxu0 %v471
    %2619 = vmatprep.subr.mxu0 %v474
    %2620 = vmatpush1.msra.mxu0 %v473
    %2621 = vmatprep.subr.mxu0 %v476
    %2622 = vmatpush1.msra.mxu0 %v475
    %2623 = vmatprep.subr.mxu0 %v478
    %2624 = vmatpush1.msra.mxu0 %v477
    %2625 = vmatprep.subr.mxu0 %v480
    %2626 = vmatpush1.msra.mxu0 %v479
    %2627 = vmatprep.subr.mxu0 %v482
    %2628 = vmatpush1.msra.mxu0 %v481
    %2629 = vmatprep.subr.mxu0 0.0
    %2630 = vmatpush1.msra.mxu0 0.0
    %2631 = vmatprep.subr.mxu0 0.0
    %2632 = vmatpush1.msra.mxu0 0.0
    %2633 = vmatprep.subr.mxu0 0.0
    %2634 = vmatpush1.msra.mxu0 0.0
    %2635 = vmatprep.subr.mxu0 0.0
    %2636 = vmatpush1.msra.mxu0 0.0
    %2637 = vmatprep.subr.mxu0 0.0
    %2638 = vmatpush1.msra.mxu0 0.0
    %2639 = vmatprep.subr.mxu0 0.0
    %2640 = vmatpush1.msra.mxu0 0.0
    %2641 = vmatprep.subr.mxu0 0.0
    %2642 = vmatpush1.msra.mxu0 0.0
    %2643 = vmatprep.subr.mxu0 0.0
    %2644 = vmatpush1.msra.mxu0 0.0
    %2645 = vmatprep.subr.mxu0 0.0
    %2646 = vmatpush1.msra.mxu0 0.0
    %2647 = vmatprep.subr.mxu0 0.0
    %2648 = vmatpush1.msra.mxu0 0.0
    %2649 = vmatprep.subr.mxu0 0.0
    %2650 = vmatpush1.msra.mxu0 0.0
    %2651 = vmatprep.subr.mxu0 0.0
    %2652 = vmatpush1.msra.mxu0 0.0
    %2653 = vmatprep.subr.mxu0 0.0
    %2654 = vmatpush1.msra.mxu0 0.0
    %2655 = vmatprep.subr.mxu0 0.0
    %2656 = vmatpush1.msra.mxu0 0.0
    %2657 = vmatprep.subr.mxu0 0.0
    %2658 = vmatpush1.msra.mxu0 0.0
    %2659 = vmatprep.subr.mxu0 0.0
    %2660 = vmatpush1.msra.mxu0 0.0
    %2661 = vmatprep.subr.mxu0 0.0
    %2662 = vmatpush1.msra.mxu0 0.0
    %2663 = vmatprep.subr.mxu0 0.0
    %2664 = vmatpush1.msra.mxu0 0.0
    %2665 = vmatprep.subr.mxu0 0.0
    %2666 = vmatpush1.msra.mxu0 0.0
    %2667 = vmatprep.subr.mxu0 0.0
    %2668 = vmatpush1.msra.mxu0 0.0
    %2669 = vmatprep.subr.mxu0 0.0
    %2670 = vmatpush1.msra.mxu0 0.0
    %2671 = vmatprep.subr.mxu0 0.0
    %2672 = vmatpush1.msra.mxu0 0.0
    %2673 = vmatprep.subr.mxu0 0.0
    %2674 = vmatpush1.msra.mxu0 0.0
    %2675 = vmatprep.subr.mxu0 0.0
    %2676 = vmatpush1.msra.mxu0 0.0
    %2677 = vmatprep.mubr.f32.mxu0 0.0
    %2678 = vmatmul.mubr.f32.gmra.mrb[0].mxu0 %v2611
    %v2679 = vpop.f32.mrb[0].mxu0
    %v2680 = vadd.f32 0.0, %v2679
    %v2681 = vpop.f32.mrb[0].mxu0
    %v2682 = vadd.f32 0.0, %v2681
    %2683 = vdwg.mxu0
    %v2684 = vadd.f32 %v2606, %v2680
    %v2685 = vadd.f32 %v2607, %v2682
    %v2686 = vmul.f32 %v2684, 0.5
    %v2687 = vtanh.pop %v2686
    %v2688 = vmul.f32 %v2687, 0.5
    %v2689 = vadd.f32 %v2688, 0.5
    %v2690 = vtanh.pop %v2685
    %v2691 = vmul.f32 %v2689, %v2596
    %v2692 = vmul.f32 %v2689, %v2690
    %2694 = vrot.lane.b32.xlu0 %v2692, 64
    %v2695 = vpop.permute.xlu0 %2694
    %v2697 = vadd.f32 %v2691, %v2695
    %v2698 = vmul.f32 %v2685, 0.5
    %v2699 = vtanh.pop %v2698
    %v2700 = vmul.f32 %v2699, 0.5
    %v2701 = vadd.f32 %v2700, 0.5
    %v2702 = vtanh.pop %v2697
    %v2703 = vmul.f32 %v2701, %v2702
    %s2704 = smul.u32 22, 2
    %s2705 = smul.addr %s2704, 8
    %s2706 = scalar_lea.vmem [#allocation2], %s2705
    %v2707 = vld [vmem:[%s2706] sm:$0xff]
    %v2708 = vld [vmem:[%s2706 + $0x8] sm:$0xff]
    %2710 = vrot.lane.b32.xlu0 %v2703, 64
    %v2711 = vpop.permute.xlu0 %2710
    %v2712 = vsel %vm488, %v2711, 0
    %2714 = vmatprep.subr.mxu0 %v468
    %2715 = vmatpush1.msra.mxu0 %v467
    %2716 = vmatprep.subr.mxu0 %v470
    %2717 = vmatpush1.msra.mxu0 %v469
    %2718 = vmatprep.subr.mxu0 %v472
    %2719 = vmatpush1.msra.mxu0 %v471
    %2720 = vmatprep.subr.mxu0 %v474
    %2721 = vmatpush1.msra.mxu0 %v473
    %2722 = vmatprep.subr.mxu0 %v476
    %2723 = vmatpush1.msra.mxu0 %v475
    %2724 = vmatprep.subr.mxu0 %v478
    %2725 = vmatpush1.msra.mxu0 %v477
    %2726 = vmatprep.subr.mxu0 %v480
    %2727 = vmatpush1.msra.mxu0 %v479
    %2728 = vmatprep.subr.mxu0 %v482
    %2729 = vmatpush1.msra.mxu0 %v481
    %2730 = vmatprep.subr.mxu0 0.0
    %2731 = vmatpush1.msra.mxu0 0.0
    %2732 = vmatprep.subr.mxu0 0.0
    %2733 = vmatpush1.msra.mxu0 0.0
    %2734 = vmatprep.subr.mxu0 0.0
    %2735 = vmatpush1.msra.mxu0 0.0
    %2736 = vmatprep.subr.mxu0 0.0
    %2737 = vmatpush1.msra.mxu0 0.0
    %2738 = vmatprep.subr.mxu0 0.0
    %2739 = vmatpush1.msra.mxu0 0.0
    %2740 = vmatprep.subr.mxu0 0.0
    %2741 = vmatpush1.msra.mxu0 0.0
    %2742 = vmatprep.subr.mxu0 0.0
    %2743 = vmatpush1.msra.mxu0 0.0
    %2744 = vmatprep.subr.mxu0 0.0
    %2745 = vmatpush1.msra.mxu0 0.0
    %2746 = vmatprep.subr.mxu0 0.0
    %2747 = vmatpush1.msra.mxu0 0.0
    %2748 = vmatprep.subr.mxu0 0.0
    %2749 = vmatpush1.msra.mxu0 0.0
    %2750 = vmatprep.subr.mxu0 0.0
    %2751 = vmatpush1.msra.mxu0 0.0
    %2752 = vmatprep.subr.mxu0 0.0
    %2753 = vmatpush1.msra.mxu0 0.0
    %2754 = vmatprep.subr.mxu0 0.0
    %2755 = vmatpush1.msra.mxu0 0.0
    %2756 = vmatprep.subr.mxu0 0.0
    %2757 = vmatpush1.msra.mxu0 0.0
    %2758 = vmatprep.subr.mxu0 0.0
    %2759 = vmatpush1.msra.mxu0 0.0
    %2760 = vmatprep.subr.mxu0 0.0
    %2761 = vmatpush1.msra.mxu0 0.0
    %2762 = vmatprep.subr.mxu0 0.0
    %2763 = vmatpush1.msra.mxu0 0.0
    %2764 = vmatprep.subr.mxu0 0.0
    %2765 = vmatpush1.msra.mxu0 0.0
    %2766 = vmatprep.subr.mxu0 0.0
    %2767 = vmatpush1.msra.mxu0 0.0
    %2768 = vmatprep.subr.mxu0 0.0
    %2769 = vmatpush1.msra.mxu0 0.0
    %2770 = vmatprep.subr.mxu0 0.0
    %2771 = vmatpush1.msra.mxu0 0.0
    %2772 = vmatprep.subr.mxu0 0.0
    %2773 = vmatpush1.msra.mxu0 0.0
    %2774 = vmatprep.subr.mxu0 0.0
    %2775 = vmatpush1.msra.mxu0 0.0
    %2776 = vmatprep.subr.mxu0 0.0
    %2777 = vmatpush1.msra.mxu0 0.0
    %2778 = vmatprep.mubr.f32.mxu0 0.0
    %2779 = vmatmul.mubr.f32.gmra.mrb[0].mxu0 %v2712
    %v2780 = vpop.f32.mrb[0].mxu0
    %v2781 = vadd.f32 0.0, %v2780
    %v2782 = vpop.f32.mrb[0].mxu0
    %v2783 = vadd.f32 0.0, %v2782
    %2784 = vdwg.mxu0
    %v2785 = vadd.f32 %v2707, %v2781
    %v2786 = vadd.f32 %v2708, %v2783
    %v2787 = vmul.f32 %v2785, 0.5
    %v2788 = vtanh.pop %v2787
    %v2789 = vmul.f32 %v2788, 0.5
    %v2790 = vadd.f32 %v2789, 0.5
    %v2791 = vtanh.pop %v2786
    %v2792 = vmul.f32 %v2790, %v2697
    %v2793 = vmul.f32 %v2790, %v2791
    %2795 = vrot.lane.b32.xlu0 %v2793, 64
    %v2796 = vpop.permute.xlu0 %2795
    %v2798 = vadd.f32 %v2792, %v2796
    %v2799 = vmul.f32 %v2786, 0.5
    %v2800 = vtanh.pop %v2799
    %v2801 = vmul.f32 %v2800, 0.5
    %v2802 = vadd.f32 %v2801, 0.5
    %v2803 = vtanh.pop %v2798
    %v2804 = vmul.f32 %v2802, %v2803
    %s2805 = smul.u32 23, 2
    %s2806 = smul.addr %s2805, 8
    %s2807 = scalar_lea.vmem [#allocation2], %s2806
    %v2808 = vld [vmem:[%s2807] sm:$0xff]
    %v2809 = vld [vmem:[%s2807 + $0x8] sm:$0xff]
    %2811 = vrot.lane.b32.xlu0 %v2804, 64
    %v2812 = vpop.permute.xlu0 %2811
    %v2813 = vsel %vm488, %v2812, 0
    %2815 = vmatprep.subr.mxu0 %v468
    %2816 = vmatpush1.msra.mxu0 %v467
    %2817 = vmatprep.subr.mxu0 %v470
    %2818 = vmatpush1.msra.mxu0 %v469
    %2819 = vmatprep.subr.mxu0 %v472
    %2820 = vmatpush1.msra.mxu0 %v471
    %2821 = vmatprep.subr.mxu0 %v474
    %2822 = vmatpush1.msra.mxu0 %v473
    %2823 = vmatprep.subr.mxu0 %v476
    %2824 = vmatpush1.msra.mxu0 %v475
    %2825 = vmatprep.subr.mxu0 %v478
    %2826 = vmatpush1.msra.mxu0 %v477
    %2827 = vmatprep.subr.mxu0 %v480
    %2828 = vmatpush1.msra.mxu0 %v479
    %2829 = vmatprep.subr.mxu0 %v482
    %2830 = vmatpush1.msra.mxu0 %v481
    %2831 = vmatprep.subr.mxu0 0.0
    %2832 = vmatpush1.msra.mxu0 0.0
    %2833 = vmatprep.subr.mxu0 0.0
    %2834 = vmatpush1.msra.mxu0 0.0
    %2835 = vmatprep.subr.mxu0 0.0
    %2836 = vmatpush1.msra.mxu0 0.0
    %2837 = vmatprep.subr.mxu0 0.0
    %2838 = vmatpush1.msra.mxu0 0.0
    %2839 = vmatprep.subr.mxu0 0.0
    %2840 = vmatpush1.msra.mxu0 0.0
    %2841 = vmatprep.subr.mxu0 0.0
    %2842 = vmatpush1.msra.mxu0 0.0
    %2843 = vmatprep.subr.mxu0 0.0
    %2844 = vmatpush1.msra.mxu0 0.0
    %2845 = vmatprep.subr.mxu0 0.0
    %2846 = vmatpush1.msra.mxu0 0.0
    %2847 = vmatprep.subr.mxu0 0.0
    %2848 = vmatpush1.msra.mxu0 0.0
    %2849 = vmatprep.subr.mxu0 0.0
    %2850 = vmatpush1.msra.mxu0 0.0
    %2851 = vmatprep.subr.mxu0 0.0
    %2852 = vmatpush1.msra.mxu0 0.0
    %2853 = vmatprep.subr.mxu0 0.0
    %2854 = vmatpush1.msra.mxu0 0.0
    %2855 = vmatprep.subr.mxu0 0.0
    %2856 = vmatpush1.msra.mxu0 0.0
    %2857 = vmatprep.subr.mxu0 0.0
    %2858 = vmatpush1.msra.mxu0 0.0
    %2859 = vmatprep.subr.mxu0 0.0
    %2860 = vmatpush1.msra.mxu0 0.0
    %2861 = vmatprep.subr.mxu0 0.0
    %2862 = vmatpush1.msra.mxu0 0.0
    %2863 = vmatprep.subr.mxu0 0.0
    %2864 = vmatpush1.msra.mxu0 0.0
    %2865 = vmatprep.subr.mxu0 0.0
    %2866 = vmatpush1.msra.mxu0 0.0
    %2867 = vmatprep.subr.mxu0 0.0
    %2868 = vmatpush1.msra.mxu0 0.0
    %2869 = vmatprep.subr.mxu0 0.0
    %2870 = vmatpush1.msra.mxu0 0.0
    %2871 = vmatprep.subr.mxu0 0.0
    %2872 = vmatpush1.msra.mxu0 0.0
    %2873 = vmatprep.subr.mxu0 0.0
    %2874 = vmatpush1.msra.mxu0 0.0
    %2875 = vmatprep.subr.mxu0 0.0
    %2876 = vmatpush1.msra.mxu0 0.0
    %2877 = vmatprep.subr.mxu0 0.0
    %2878 = vmatpush1.msra.mxu0 0.0
    %2879 = vmatprep.mubr.f32.mxu0 0.0
    %2880 = vmatmul.mubr.f32.gmra.mrb[0].mxu0 %v2813
    %v2881 = vpop.f32.mrb[0].mxu0
    %v2882 = vadd.f32 0.0, %v2881
    %v2883 = vpop.f32.mrb[0].mxu0
    %v2884 = vadd.f32 0.0, %v2883
    %2885 = vdwg.mxu0
    %v2886 = vadd.f32 %v2808, %v2882
    %v2887 = vadd.f32 %v2809, %v2884
    %v2888 = vmul.f32 %v2886, 0.5
    %v2889 = vtanh.pop %v2888
    %v2890 = vmul.f32 %v2889, 0.5
    %v2891 = vadd.f32 %v2890, 0.5
    %v2892 = vtanh.pop %v2887
    %v2893 = vmul.f32 %v2891, %v2798
    %v2894 = vmul.f32 %v2891, %v2892
    %2896 = vrot.lane.b32.xlu0 %v2894, 64
    %v2897 = vpop.permute.xlu0 %2896
    %v2899 = vadd.f32 %v2893, %v2897
    %v2900 = vmul.f32 %v2887, 0.5
    %v2901 = vtanh.pop %v2900
    %v2902 = vmul.f32 %v2901, 0.5
    %v2903 = vadd.f32 %v2902, 0.5
    %v2904 = vtanh.pop %v2899
    %v2905 = vmul.f32 %v2903, %v2904
    %s2906 = smul.u32 24, 2
    %s2907 = smul.addr %s2906, 8
    %s2908 = scalar_lea.vmem [#allocation2], %s2907
    %v2909 = vld [vmem:[%s2908] sm:$0xff]
    %v2910 = vld [vmem:[%s2908 + $0x8] sm:$0xff]
    %2912 = vrot.lane.b32.xlu0 %v2905, 64
    %v2913 = vpop.permute.xlu0 %2912
    %v2914 = vsel %vm488, %v2913, 0
    %2916 = vmatprep.subr.mxu0 %v468
    %2917 = vmatpush1.msra.mxu0 %v467
    %2918 = vmatprep.subr.mxu0 %v470
    %2919 = vmatpush1.msra.mxu0 %v469
    %2920 = vmatprep.subr.mxu0 %v472
    %2921 = vmatpush1.msra.mxu0 %v471
    %2922 = vmatprep.subr.mxu0 %v474
    %2923 = vmatpush1.msra.mxu0 %v473
    %2924 = vmatprep.subr.mxu0 %v476
    %2925 = vmatpush1.msra.mxu0 %v475
    %2926 = vmatprep.subr.mxu0 %v478
    %2927 = vmatpush1.msra.mxu0 %v477
    %2928 = vmatprep.subr.mxu0 %v480
    %2929 = vmatpush1.msra.mxu0 %v479
    %2930 = vmatprep.subr.mxu0 %v482
    %2931 = vmatpush1.msra.mxu0 %v481
    %2932 = vmatprep.subr.mxu0 0.0
    %2933 = vmatpush1.msra.mxu0 0.0
    %2934 = vmatprep.subr.mxu0 0.0
    %2935 = vmatpush1.msra.mxu0 0.0
    %2936 = vmatprep.subr.mxu0 0.0
    %2937 = vmatpush1.msra.mxu0 0.0
    %2938 = vmatprep.subr.mxu0 0.0
    %2939 = vmatpush1.msra.mxu0 0.0
    %2940 = vmatprep.subr.mxu0 0.0
    %2941 = vmatpush1.msra.mxu0 0.0
    %2942 = vmatprep.subr.mxu0 0.0
    %2943 = vmatpush1.msra.mxu0 0.0
    %2944 = vmatprep.subr.mxu0 0.0
    %2945 = vmatpush1.msra.mxu0 0.0
    %2946 = vmatprep.subr.mxu0 0.0
    %2947 = vmatpush1.msra.mxu0 0.0
    %2948 = vmatprep.subr.mxu0 0.0
    %2949 = vmatpush1.msra.mxu0 0.0
    %2950 = vmatprep.subr.mxu0 0.0
    %2951 = vmatpush1.msra.mxu0 0.0
    %2952 = vmatprep.subr.mxu0 0.0
    %2953 = vmatpush1.msra.mxu0 0.0
    %2954 = vmatprep.subr.mxu0 0.0
    %2955 = vmatpush1.msra.mxu0 0.0
    %2956 = vmatprep.subr.mxu0 0.0
    %2957 = vmatpush1.msra.mxu0 0.0
    %2958 = vmatprep.subr.mxu0 0.0
    %2959 = vmatpush1.msra.mxu0 0.0
    %2960 = vmatprep.subr.mxu0 0.0
    %2961 = vmatpush1.msra.mxu0 0.0
    %2962 = vmatprep.subr.mxu0 0.0
    %2963 = vmatpush1.msra.mxu0 0.0
    %2964 = vmatprep.subr.mxu0 0.0
    %2965 = vmatpush1.msra.mxu0 0.0
    %2966 = vmatprep.subr.mxu0 0.0
    %2967 = vmatpush1.msra.mxu0 0.0
    %2968 = vmatprep.subr.mxu0 0.0
    %2969 = vmatpush1.msra.mxu0 0.0
    %2970 = vmatprep.subr.mxu0 0.0
    %2971 = vmatpush1.msra.mxu0 0.0
    %2972 = vmatprep.subr.mxu0 0.0
    %2973 = vmatpush1.msra.mxu0 0.0
    %2974 = vmatprep.subr.mxu0 0.0
    %2975 = vmatpush1.msra.mxu0 0.0
    %2976 = vmatprep.subr.mxu0 0.0
    %2977 = vmatpush1.msra.mxu0 0.0
    %2978 = vmatprep.subr.mxu0 0.0
    %2979 = vmatpush1.msra.mxu0 0.0
    %2980 = vmatprep.mubr.f32.mxu0 0.0
    %2981 = vmatmul.mubr.f32.gmra.mrb[0].mxu0 %v2914
    %v2982 = vpop.f32.mrb[0].mxu0
    %v2983 = vadd.f32 0.0, %v2982
    %v2984 = vpop.f32.mrb[0].mxu0
    %v2985 = vadd.f32 0.0, %v2984
    %2986 = vdwg.mxu0
    %v2987 = vadd.f32 %v2909, %v2983
    %v2988 = vadd.f32 %v2910, %v2985
    %v2989 = vmul.f32 %v2987, 0.5
    %v2990 = vtanh.pop %v2989
    %v2991 = vmul.f32 %v2990, 0.5
    %v2992 = vadd.f32 %v2991, 0.5
    %v2993 = vtanh.pop %v2988
    %v2994 = vmul.f32 %v2992, %v2899
    %v2995 = vmul.f32 %v2992, %v2993
    %2997 = vrot.lane.b32.xlu0 %v2995, 64
    %v2998 = vpop.permute.xlu0 %2997
    %v3000 = vadd.f32 %v2994, %v2998
    %v3001 = vmul.f32 %v2988, 0.5
    %v3002 = vtanh.pop %v3001
    %v3003 = vmul.f32 %v3002, 0.5
    %v3004 = vadd.f32 %v3003, 0.5
    %v3005 = vtanh.pop %v3000
    %v3006 = vmul.f32 %v3004, %v3005
    %s3007 = smul.u32 25, 2
    %s3008 = smul.addr %s3007, 8
    %s3009 = scalar_lea.vmem [#allocation2], %s3008
    %v3010 = vld [vmem:[%s3009] sm:$0xff]
    %v3011 = vld [vmem:[%s3009 + $0x8] sm:$0xff]
    %3013 = vrot.lane.b32.xlu0 %v3006, 64
    %v3014 = vpop.permute.xlu0 %3013
    %v3015 = vsel %vm488, %v3014, 0
    %3017 = vmatprep.subr.mxu0 %v468
    %3018 = vmatpush1.msra.mxu0 %v467
    %3019 = vmatprep.subr.mxu0 %v470
    %3020 = vmatpush1.msra.mxu0 %v469
    %3021 = vmatprep.subr.mxu0 %v472
    %3022 = vmatpush1.msra.mxu0 %v471
    %3023 = vmatprep.subr.mxu0 %v474
    %3024 = vmatpush1.msra.mxu0 %v473
    %3025 = vmatprep.subr.mxu0 %v476
    %3026 = vmatpush1.msra.mxu0 %v475
    %3027 = vmatprep.subr.mxu0 %v478
    %3028 = vmatpush1.msra.mxu0 %v477
    %3029 = vmatprep.subr.mxu0 %v480
    %3030 = vmatpush1.msra.mxu0 %v479
    %3031 = vmatprep.subr.mxu0 %v482
    %3032 = vmatpush1.msra.mxu0 %v481
    %3033 = vmatprep.subr.mxu0 0.0
    %3034 = vmatpush1.msra.mxu0 0.0
    %3035 = vmatprep.subr.mxu0 0.0
    %3036 = vmatpush1.msra.mxu0 0.0
    %3037 = vmatprep.subr.mxu0 0.0
    %3038 = vmatpush1.msra.mxu0 0.0
    %3039 = vmatprep.subr.mxu0 0.0
    %3040 = vmatpush1.msra.mxu0 0.0
    %3041 = vmatprep.subr.mxu0 0.0
    %3042 = vmatpush1.msra.mxu0 0.0
    %3043 = vmatprep.subr.mxu0 0.0
    %3044 = vmatpush1.msra.mxu0 0.0
    %3045 = vmatprep.subr.mxu0 0.0
    %3046 = vmatpush1.msra.mxu0 0.0
    %3047 = vmatprep.subr.mxu0 0.0
    %3048 = vmatpush1.msra.mxu0 0.0
    %3049 = vmatprep.subr.mxu0 0.0
    %3050 = vmatpush1.msra.mxu0 0.0
    %3051 = vmatprep.subr.mxu0 0.0
    %3052 = vmatpush1.msra.mxu0 0.0
    %3053 = vmatprep.subr.mxu0 0.0
    %3054 = vmatpush1.msra.mxu0 0.0
    %3055 = vmatprep.subr.mxu0 0.0
    %3056 = vmatpush1.msra.mxu0 0.0
    %3057 = vmatprep.subr.mxu0 0.0
    %3058 = vmatpush1.msra.mxu0 0.0
    %3059 = vmatprep.subr.mxu0 0.0
    %3060 = vmatpush1.msra.mxu0 0.0
    %3061 = vmatprep.subr.mxu0 0.0
    %3062 = vmatpush1.msra.mxu0 0.0
    %3063 = vmatprep.subr.mxu0 0.0
    %3064 = vmatpush1.msra.mxu0 0.0
    %3065 = vmatprep.subr.mxu0 0.0
    %3066 = vmatpush1.msra.mxu0 0.0
    %3067 = vmatprep.subr.mxu0 0.0
    %3068 = vmatpush1.msra.mxu0 0.0
    %3069 = vmatprep.subr.mxu0 0.0
    %3070 = vmatpush1.msra.mxu0 0.0
    %3071 = vmatprep.subr.mxu0 0.0
    %3072 = vmatpush1.msra.mxu0 0.0
    %3073 = vmatprep.subr.mxu0 0.0
    %3074 = vmatpush1.msra.mxu0 0.0
    %3075 = vmatprep.subr.mxu0 0.0
    %3076 = vmatpush1.msra.mxu0 0.0
    %3077 = vmatprep.subr.mxu0 0.0
    %3078 = vmatpush1.msra.mxu0 0.0
    %3079 = vmatprep.subr.mxu0 0.0
    %3080 = vmatpush1.msra.mxu0 0.0
    %3081 = vmatprep.mubr.f32.mxu0 0.0
    %3082 = vmatmul.mubr.f32.gmra.mrb[0].mxu0 %v3015
    %v3083 = vpop.f32.mrb[0].mxu0
    %v3084 = vadd.f32 0.0, %v3083
    %v3085 = vpop.f32.mrb[0].mxu0
    %v3086 = vadd.f32 0.0, %v3085
    %3087 = vdwg.mxu0
    %v3088 = vadd.f32 %v3010, %v3084
    %v3089 = vadd.f32 %v3011, %v3086
    %v3090 = vmul.f32 %v3088, 0.5
    %v3091 = vtanh.pop %v3090
    %v3092 = vmul.f32 %v3091, 0.5
    %v3093 = vadd.f32 %v3092, 0.5
    %v3094 = vtanh.pop %v3089
    %v3095 = vmul.f32 %v3093, %v3000
    %v3096 = vmul.f32 %v3093, %v3094
    %3098 = vrot.lane.b32.xlu0 %v3096, 64
    %v3099 = vpop.permute.xlu0 %3098
    %v3101 = vadd.f32 %v3095, %v3099
    %v3102 = vmul.f32 %v3089, 0.5
    %v3103 = vtanh.pop %v3102
    %v3104 = vmul.f32 %v3103, 0.5
    %v3105 = vadd.f32 %v3104, 0.5
    %v3106 = vtanh.pop %v3101
    %v3107 = vmul.f32 %v3105, %v3106
    %s3108 = smul.u32 26, 2
    %s3109 = smul.addr %s3108, 8
    %s3110 = scalar_lea.vmem [#allocation2], %s3109
    %v3111 = vld [vmem:[%s3110] sm:$0xff]
    %v3112 = vld [vmem:[%s3110 + $0x8] sm:$0xff]
    %3114 = vrot.lane.b32.xlu0 %v3107, 64
    %v3115 = vpop.permute.xlu0 %3114
    %v3116 = vsel %vm488, %v3115, 0
    %3118 = vmatprep.subr.mxu0 %v468
    %3119 = vmatpush1.msra.mxu0 %v467
    %3120 = vmatprep.subr.mxu0 %v470
    %3121 = vmatpush1.msra.mxu0 %v469
    %3122 = vmatprep.subr.mxu0 %v472
    %3123 = vmatpush1.msra.mxu0 %v471
    %3124 = vmatprep.subr.mxu0 %v474
    %3125 = vmatpush1.msra.mxu0 %v473
    %3126 = vmatprep.subr.mxu0 %v476
    %3127 = vmatpush1.msra.mxu0 %v475
    %3128 = vmatprep.subr.mxu0 %v478
    %3129 = vmatpush1.msra.mxu0 %v477
    %3130 = vmatprep.subr.mxu0 %v480
    %3131 = vmatpush1.msra.mxu0 %v479
    %3132 = vmatprep.subr.mxu0 %v482
    %3133 = vmatpush1.msra.mxu0 %v481
    %3134 = vmatprep.subr.mxu0 0.0
    %3135 = vmatpush1.msra.mxu0 0.0
    %3136 = vmatprep.subr.mxu0 0.0
    %3137 = vmatpush1.msra.mxu0 0.0
    %3138 = vmatprep.subr.mxu0 0.0
    %3139 = vmatpush1.msra.mxu0 0.0
    %3140 = vmatprep.subr.mxu0 0.0
    %3141 = vmatpush1.msra.mxu0 0.0
    %3142 = vmatprep.subr.mxu0 0.0
    %3143 = vmatpush1.msra.mxu0 0.0
    %3144 = vmatprep.subr.mxu0 0.0
    %3145 = vmatpush1.msra.mxu0 0.0
    %3146 = vmatprep.subr.mxu0 0.0
    %3147 = vmatpush1.msra.mxu0 0.0
    %3148 = vmatprep.subr.mxu0 0.0
    %3149 = vmatpush1.msra.mxu0 0.0
    %3150 = vmatprep.subr.mxu0 0.0
    %3151 = vmatpush1.msra.mxu0 0.0
    %3152 = vmatprep.subr.mxu0 0.0
    %3153 = vmatpush1.msra.mxu0 0.0
    %3154 = vmatprep.subr.mxu0 0.0
    %3155 = vmatpush1.msra.mxu0 0.0
    %3156 = vmatprep.subr.mxu0 0.0
    %3157 = vmatpush1.msra.mxu0 0.0
    %3158 = vmatprep.subr.mxu0 0.0
    %3159 = vmatpush1.msra.mxu0 0.0
    %3160 = vmatprep.subr.mxu0 0.0
    %3161 = vmatpush1.msra.mxu0 0.0
    %3162 = vmatprep.subr.mxu0 0.0
    %3163 = vmatpush1.msra.mxu0 0.0
    %3164 = vmatprep.subr.mxu0 0.0
    %3165 = vmatpush1.msra.mxu0 0.0
    %3166 = vmatprep.subr.mxu0 0.0
    %3167 = vmatpush1.msra.mxu0 0.0
    %3168 = vmatprep.subr.mxu0 0.0
    %3169 = vmatpush1.msra.mxu0 0.0
    %3170 = vmatprep.subr.mxu0 0.0
    %3171 = vmatpush1.msra.mxu0 0.0
    %3172 = vmatprep.subr.mxu0 0.0
    %3173 = vmatpush1.msra.mxu0 0.0
    %3174 = vmatprep.subr.mxu0 0.0
    %3175 = vmatpush1.msra.mxu0 0.0
    %3176 = vmatprep.subr.mxu0 0.0
    %3177 = vmatpush1.msra.mxu0 0.0
    %3178 = vmatprep.subr.mxu0 0.0
    %3179 = vmatpush1.msra.mxu0 0.0
    %3180 = vmatprep.subr.mxu0 0.0
    %3181 = vmatpush1.msra.mxu0 0.0
    %3182 = vmatprep.mubr.f32.mxu0 0.0
    %3183 = vmatmul.mubr.f32.gmra.mrb[0].mxu0 %v3116
    %v3184 = vpop.f32.mrb[0].mxu0
    %v3185 = vadd.f32 0.0, %v3184
    %v3186 = vpop.f32.mrb[0].mxu0
    %v3187 = vadd.f32 0.0, %v3186
    %3188 = vdwg.mxu0
    %v3189 = vadd.f32 %v3111, %v3185
    %v3190 = vadd.f32 %v3112, %v3187
    %v3191 = vmul.f32 %v3189, 0.5
    %v3192 = vtanh.pop %v3191
    %v3193 = vmul.f32 %v3192, 0.5
    %v3194 = vadd.f32 %v3193, 0.5
    %v3195 = vtanh.pop %v3190
    %v3196 = vmul.f32 %v3194, %v3101
    %v3197 = vmul.f32 %v3194, %v3195
    %3199 = vrot.lane.b32.xlu0 %v3197, 64
    %v3200 = vpop.permute.xlu0 %3199
    %v3202 = vadd.f32 %v3196, %v3200
    %v3203 = vmul.f32 %v3190, 0.5
    %v3204 = vtanh.pop %v3203
    %v3205 = vmul.f32 %v3204, 0.5
    %v3206 = vadd.f32 %v3205, 0.5
    %v3207 = vtanh.pop %v3202
    %v3208 = vmul.f32 %v3206, %v3207
    %s3209 = smul.u32 27, 2
    %s3210 = smul.addr %s3209, 8
    %s3211 = scalar_lea.vmem [#allocation2], %s3210
    %v3212 = vld [vmem:[%s3211] sm:$0xff]
    %v3213 = vld [vmem:[%s3211 + $0x8] sm:$0xff]
    %3215 = vrot.lane.b32.xlu0 %v3208, 64
    %v3216 = vpop.permute.xlu0 %3215
    %v3217 = vsel %vm488, %v3216, 0
    %3219 = vmatprep.subr.mxu0 %v468
    %3220 = vmatpush1.msra.mxu0 %v467
    %3221 = vmatprep.subr.mxu0 %v470
    %3222 = vmatpush1.msra.mxu0 %v469
    %3223 = vmatprep.subr.mxu0 %v472
    %3224 = vmatpush1.msra.mxu0 %v471
    %3225 = vmatprep.subr.mxu0 %v474
    %3226 = vmatpush1.msra.mxu0 %v473
    %3227 = vmatprep.subr.mxu0 %v476
    %3228 = vmatpush1.msra.mxu0 %v475
    %3229 = vmatprep.subr.mxu0 %v478
    %3230 = vmatpush1.msra.mxu0 %v477
    %3231 = vmatprep.subr.mxu0 %v480
    %3232 = vmatpush1.msra.mxu0 %v479
    %3233 = vmatprep.subr.mxu0 %v482
    %3234 = vmatpush1.msra.mxu0 %v481
    %3235 = vmatprep.subr.mxu0 0.0
    %3236 = vmatpush1.msra.mxu0 0.0
    %3237 = vmatprep.subr.mxu0 0.0
    %3238 = vmatpush1.msra.mxu0 0.0
    %3239 = vmatprep.subr.mxu0 0.0
    %3240 = vmatpush1.msra.mxu0 0.0
    %3241 = vmatprep.subr.mxu0 0.0
    %3242 = vmatpush1.msra.mxu0 0.0
    %3243 = vmatprep.subr.mxu0 0.0
    %3244 = vmatpush1.msra.mxu0 0.0
    %3245 = vmatprep.subr.mxu0 0.0
    %3246 = vmatpush1.msra.mxu0 0.0
    %3247 = vmatprep.subr.mxu0 0.0
    %3248 = vmatpush1.msra.mxu0 0.0
    %3249 = vmatprep.subr.mxu0 0.0
    %3250 = vmatpush1.msra.mxu0 0.0
    %3251 = vmatprep.subr.mxu0 0.0
    %3252 = vmatpush1.msra.mxu0 0.0
    %3253 = vmatprep.subr.mxu0 0.0
    %3254 = vmatpush1.msra.mxu0 0.0
    %3255 = vmatprep.subr.mxu0 0.0
    %3256 = vmatpush1.msra.mxu0 0.0
    %3257 = vmatprep.subr.mxu0 0.0
    %3258 = vmatpush1.msra.mxu0 0.0
    %3259 = vmatprep.subr.mxu0 0.0
    %3260 = vmatpush1.msra.mxu0 0.0
    %3261 = vmatprep.subr.mxu0 0.0
    %3262 = vmatpush1.msra.mxu0 0.0
    %3263 = vmatprep.subr.mxu0 0.0
    %3264 = vmatpush1.msra.mxu0 0.0
    %3265 = vmatprep.subr.mxu0 0.0
    %3266 = vmatpush1.msra.mxu0 0.0
    %3267 = vmatprep.subr.mxu0 0.0
    %3268 = vmatpush1.msra.mxu0 0.0
    %3269 = vmatprep.subr.mxu0 0.0
    %3270 = vmatpush1.msra.mxu0 0.0
    %3271 = vmatprep.subr.mxu0 0.0
    %3272 = vmatpush1.msra.mxu0 0.0
    %3273 = vmatprep.subr.mxu0 0.0
    %3274 = vmatpush1.msra.mxu0 0.0
    %3275 = vmatprep.subr.mxu0 0.0
    %3276 = vmatpush1.msra.mxu0 0.0
    %3277 = vmatprep.subr.mxu0 0.0
    %3278 = vmatpush1.msra.mxu0 0.0
    %3279 = vmatprep.subr.mxu0 0.0
    %3280 = vmatpush1.msra.mxu0 0.0
    %3281 = vmatprep.subr.mxu0 0.0
    %3282 = vmatpush1.msra.mxu0 0.0
    %3283 = vmatprep.mubr.f32.mxu0 0.0
    %3284 = vmatmul.mubr.f32.gmra.mrb[0].mxu0 %v3217
    %v3285 = vpop.f32.mrb[0].mxu0
    %v3286 = vadd.f32 0.0, %v3285
    %v3287 = vpop.f32.mrb[0].mxu0
    %v3288 = vadd.f32 0.0, %v3287
    %3289 = vdwg.mxu0
    %v3290 = vadd.f32 %v3212, %v3286
    %v3291 = vadd.f32 %v3213, %v3288
    %v3292 = vmul.f32 %v3290, 0.5
    %v3293 = vtanh.pop %v3292
    %v3294 = vmul.f32 %v3293, 0.5
    %v3295 = vadd.f32 %v3294, 0.5
    %v3296 = vtanh.pop %v3291
    %v3297 = vmul.f32 %v3295, %v3202
    %v3298 = vmul.f32 %v3295, %v3296
    %3300 = vrot.lane.b32.xlu0 %v3298, 64
    %v3301 = vpop.permute.xlu0 %3300
    %v3303 = vadd.f32 %v3297, %v3301
    %v3304 = vmul.f32 %v3291, 0.5
    %v3305 = vtanh.pop %v3304
    %v3306 = vmul.f32 %v3305, 0.5
    %v3307 = vadd.f32 %v3306, 0.5
    %v3308 = vtanh.pop %v3303
    %v3309 = vmul.f32 %v3307, %v3308
    %v3310 = vld [vmem:[%s4] sm:$0xff]
    %v3311 = vld [vmem:[%s4 + $0x8] sm:$0xff]
    %v3312 = vld [vmem:[%s4 + $0x10] sm:$0xff]
    %v3313 = vld [vmem:[%s4 + $0x18] sm:$0xff]
    %v3314 = vld [vmem:[%s4 + $0x20] sm:$0xff]
    %v3315 = vld [vmem:[%s4 + $0x28] sm:$0xff]
    %v3316 = vld [vmem:[%s4 + $0x30] sm:$0xff]
    %v3317 = vld [vmem:[%s4 + $0x38] sm:$0xff]
    %v3318 = vld [vmem:[%s5] sm:$0x1]
    %v3320 = vlaneseq
    %v3321 = vshrl.u32 %v3320, 7
    %v3322 = vsub.s32 0, %v3321
    %v3323 = vrot.slane %v3318, %v3322
    %3326 = vrot.lane.b32.xlu0 %v3309, 64
    %v3327 = vpop.permute.xlu0 %3326
    %v3328 = vsel %vm488, %v3327, 0
    %3330 = vmatprep.subr.mxu0 0.0
    %3331 = vmatpush1.msra.mxu0 %v3310
    %3332 = vmatprep.subr.mxu0 0.0
    %3333 = vmatpush1.msra.mxu0 %v3311
    %3334 = vmatprep.subr.mxu0 0.0
    %3335 = vmatpush1.msra.mxu0 %v3312
    %3336 = vmatprep.subr.mxu0 0.0
    %3337 = vmatpush1.msra.mxu0 %v3313
    %3338 = vmatprep.subr.mxu0 0.0
    %3339 = vmatpush1.msra.mxu0 %v3314
    %3340 = vmatprep.subr.mxu0 0.0
    %3341 = vmatpush1.msra.mxu0 %v3315
    %3342 = vmatprep.subr.mxu0 0.0
    %3343 = vmatpush1.msra.mxu0 %v3316
    %3344 = vmatprep.subr.mxu0 0.0
    %3345 = vmatpush1.msra.mxu0 %v3317
    %3346 = vmatprep.subr.mxu0 0.0
    %3347 = vmatpush1.msra.mxu0 0.0
    %3348 = vmatprep.subr.mxu0 0.0
    %3349 = vmatpush1.msra.mxu0 0.0
    %3350 = vmatprep.subr.mxu0 0.0
    %3351 = vmatpush1.msra.mxu0 0.0
    %3352 = vmatprep.subr.mxu0 0.0
    %3353 = vmatpush1.msra.mxu0 0.0
    %3354 = vmatprep.subr.mxu0 0.0
    %3355 = vmatpush1.msra.mxu0 0.0
    %3356 = vmatprep.subr.mxu0 0.0
    %3357 = vmatpush1.msra.mxu0 0.0
    %3358 = vmatprep.subr.mxu0 0.0
    %3359 = vmatpush1.msra.mxu0 0.0
    %3360 = vmatprep.subr.mxu0 0.0
    %3361 = vmatpush1.msra.mxu0 0.0
    %3362 = vmatprep.subr.mxu0 0.0
    %3363 = vmatpush1.msra.mxu0 0.0
    %3364 = vmatprep.subr.mxu0 0.0
    %3365 = vmatpush1.msra.mxu0 0.0
    %3366 = vmatprep.subr.mxu0 0.0
    %3367 = vmatpush1.msra.mxu0 0.0
    %3368 = vmatprep.subr.mxu0 0.0
    %3369 = vmatpush1.msra.mxu0 0.0
    %3370 = vmatprep.subr.mxu0 0.0
    %3371 = vmatpush1.msra.mxu0 0.0
    %3372 = vmatprep.subr.mxu0 0.0
    %3373 = vmatpush1.msra.mxu0 0.0
    %3374 = vmatprep.subr.mxu0 0.0
    %3375 = vmatpush1.msra.mxu0 0.0
    %3376 = vmatprep.subr.mxu0 0.0
    %3377 = vmatpush1.msra.mxu0 0.0
    %3378 = vmatprep.subr.mxu0 0.0
    %3379 = vmatpush1.msra.mxu0 0.0
    %3380 = vmatprep.subr.mxu0 0.0
    %3381 = vmatpush1.msra.mxu0 0.0
    %3382 = vmatprep.subr.mxu0 0.0
    %3383 = vmatpush1.msra.mxu0 0.0
    %3384 = vmatprep.subr.mxu0 0.0
    %3385 = vmatpush1.msra.mxu0 0.0
    %3386 = vmatprep.subr.mxu0 0.0
    %3387 = vmatpush1.msra.mxu0 0.0
    %3388 = vmatprep.subr.mxu0 0.0
    %3389 = vmatpush1.msra.mxu0 0.0
    %3390 = vmatprep.subr.mxu0 0.0
    %3391 = vmatpush1.msra.mxu0 0.0
    %3392 = vmatprep.subr.mxu0 0.0
    %3393 = vmatpush1.msra.mxu0 0.0
    %3394 = vmatprep.mubr.f32.mxu0 0.0
    %3395 = vmatmul.mubr.f32.gmra.mrb[0].mxu0 %v3328
    %v3396 = vpop.f32.mrb[0].mxu0
    %v3397 = vadd.f32 %v3323, %v3396
    %v3398 = vpop.f32.mrb[0].mxu0
    %3399 = vdwg.mxu0
    %3400 = vst [vmem:[#allocation6] sm:$0xff] %v3397
    // Predicated region
    $region30: #{rnn_forward.1} parent=1 // pred_check
      _
    $region31: #{rnn_forward.1} parent=1 // pred_check_branch
      %3402 = sbr.rel (0) target = $region33
    $region32: #{rnn_forward.1} parent=1 // pred_region
      %s3404 = ssub.s32 128, 128
      %3405 = vsyncadd [#allocation5], %s3404
      %s3407 = sshll.u32 [#allocation6], 4
      %s3408 = int_to_ptr.vmem [resolvable:$true] %s3407
      %3410 = dma.vmem_to_hbm [thread:$0]  %s3408, 128, %s6, [#allocation5]
    $region33: #{rnn_forward.1} parent=1 // pred_fallthru
      _
    // Predicated region
    $region34: #{rnn_forward.1} parent=1 // pred_check
      _
    $region35: #{rnn_forward.1} parent=1 // pred_check_branch
      %3412 = sbr.rel (0) target = $region37
    $region36: #{rnn_forward.1} parent=1 // pred_region
      %3413 = dma.done [#allocation5], 128
    $region37: #{rnn_forward.1} parent=1 // pred_fallthru
      _
    %3414 = vsyncpa [#allocation4], 1
    %3415 = vsyncpa [#allocation5], 1

</llo_original>
